<compile_context>
chip_gen: v6e
topology: v6e:2x2x1
jax: 0.10.0
libtpu: 0.0.40
codegen_flags: <defaults>
</compile_context>

<pallas_src>
import functools

import jax
import jax.numpy as jnp
from jax.experimental import pallas as pl
from jax.experimental.pallas import tpu as pltpu

HIGHEST = jax.lax.Precision.HIGHEST


def _round_up(n, m):
    return ((n + m - 1) // m) * m


# ---------------------------------------------------------------------------
# Fused single-call path: whole problem resident in VMEM (small/medium graphs).
# ---------------------------------------------------------------------------
def _fused_kernel(a_ref, xw1_ref, b1_ref, wcat_ref, bcat_ref, out_ref):
    # Layer 1: h = A @ (X W1) + b1, rounded to bf16 (same rounding as the tiled path).
    h = (jnp.dot(a_ref[...], xw1_ref[...], preferred_element_type=jnp.float32)
         + b1_ref[...]).astype(jnp.bfloat16)
    # Layer 2: one adjacency pass shared by both heads, then one 256-wide projection.
    agg = jnp.dot(a_ref[...], h, preferred_element_type=jnp.float32)
    out_ref[...] = (jnp.dot(agg, wcat_ref[...], preferred_element_type=jnp.float32)
                    + bcat_ref[...]).astype(out_ref.dtype)


def _vgae_fused(a_bf, xw1_bf, b1, wcat, bcat):
    n_pad = a_bf.shape[0]
    dhid = xw1_bf.shape[1]
    dout = wcat.shape[1]

    flops = 2 * n_pad * n_pad * dhid * 2 + 2 * n_pad * dhid * dout
    bytes_accessed = (a_bf.size * 2 + xw1_bf.size * 2
                      + (b1.size + wcat.size + bcat.size) * 4 + n_pad * dout * 4)
    # Operands + output + h/agg temporaries, with 2x headroom, capped v7x-safe.
    need = (a_bf.size * 2 + xw1_bf.size * 2 * 2
            + n_pad * dhid * 4 + n_pad * dout * 4
            + (b1.size + wcat.size + bcat.size) * 4)
    vmem_limit = int(min(max(2 * need, 8 << 20), 32 << 20))

    return pl.pallas_call(
        _fused_kernel,
        out_shape=jax.ShapeDtypeStruct((n_pad, dout), jnp.float32),
        compiler_params=pltpu.CompilerParams(vmem_limit_bytes=vmem_limit),
        cost_estimate=pl.CostEstimate(flops=int(flops), transcendentals=0,
                                      bytes_accessed=int(bytes_accessed)),
    )(a_bf, xw1_bf, b1, wcat, bcat)


# ---------------------------------------------------------------------------
# Tiled path: A streamed in bf16 tiles, features VMEM-resident, f32 accumulator.
# ---------------------------------------------------------------------------
def _make_agg_project_kernel(has_w, feats_resident, tk):
    """acc += A[i,k] @ feats[k];  at the last k:  out = acc @ W + b  (or acc + b)."""

    def kernel(*refs):
        if has_w:
            a_ref, x_ref, w_ref, b_ref, out_ref, acc_ref = refs
        else:
            a_ref, x_ref, b_ref, out_ref, acc_ref = refs
            w_ref = None

        k = pl.program_id(1)

        @pl.when(k == 0)
        def _init():
            acc_ref[...] = jnp.zeros_like(acc_ref)

        if feats_resident:
            off = pl.multiple_of(k * tk, tk)
            x_blk = x_ref[pl.ds(off, tk), :]
        else:
            x_blk = x_ref[...]
        # bf16 x bf16 -> f32 accumulation: MXU at native bf16 rate, no in-kernel casts.
        acc_ref[...] += jnp.dot(a_ref[...], x_blk, preferred_element_type=jnp.float32)

        @pl.when(k == pl.num_programs(1) - 1)
        def _project():
            agg = acc_ref[...]
            if has_w:
                y = jnp.dot(agg, w_ref[...], preferred_element_type=jnp.float32) + b_ref[...]
            else:
                y = agg + b_ref[...]
            out_ref[...] = y.astype(out_ref.dtype)

    return kernel


def _gcn_agg_project(a_bf, feats_bf, w, b, *, out_dtype, tm, tk):
    """out = (A @ feats) @ W + b   (or  A @ feats + b  when w is None), tiled over A."""
    n_pad = a_bf.shape[0]
    dfeat = feats_bf.shape[1]
    has_w = w is not None
    dout = w.shape[1] if has_w else dfeat
    out_bytes = jnp.dtype(out_dtype).itemsize

    grid = (n_pad // tm, n_pad // tk)        # (row tiles ["parallel"], reduction last)

    # Keep the feature matrix fully VMEM-resident (constant index_map -> single HBM
    # read) whenever it is small; otherwise stream (tk, dfeat) tiles per reduction step.
    feats_bytes = feats_bf.size * 2
    feats_resident = feats_bytes <= (6 << 20)
    if feats_resident:
        feats_spec = pl.BlockSpec((n_pad, dfeat), lambda i, k: (0, 0))
    else:
        feats_spec = pl.BlockSpec((tk, dfeat), lambda i, k: (k, 0))

    in_specs = [pl.BlockSpec((tm, tk), lambda i, k: (i, k)), feats_spec]
    operands = [a_bf, feats_bf]
    if has_w:
        in_specs.append(pl.BlockSpec(w.shape, lambda i, k: (0, 0)))    # resident weight
        operands.append(w)
    in_specs.append(pl.BlockSpec(b.shape, lambda i, k: (0, 0)))        # resident bias
    operands.append(b)

    out_specs = pl.BlockSpec((tm, dout), lambda i, k: (i, 0))
    out_shape = jax.ShapeDtypeStruct((n_pad, dout), out_dtype)

    flops = 2 * n_pad * n_pad * dfeat + (2 * n_pad * dfeat * dout if has_w else 0)
    feats_reads = 1 if feats_resident else (n_pad // tm)
    bytes_accessed = (a_bf.size * 2 + feats_reads * feats_bytes
                      + ((w.size if has_w else 0) + b.size) * 4
                      + n_pad * dout * out_bytes)

    # Exact buffer accounting (pipeline double-buffers every operand) + small headroom.
    need = (2 * tm * tk * 2
            + 2 * (feats_bytes if feats_resident else tk * dfeat * 2)
            + 2 * tm * dout * out_bytes
            + 2 * ((w.size * 4 if has_w else 0) + b.size * 4)
            + tm * dfeat * 4)
    vmem_limit = int(min(max(need + (2 << 20), 8 << 20), 32 << 20))

    return pl.pallas_call(
        _make_agg_project_kernel(has_w, feats_resident, tk),
        out_shape=out_shape,
        grid_spec=pltpu.PrefetchScalarGridSpec(
            num_scalar_prefetch=0,
            grid=grid,
            in_specs=in_specs,
            out_specs=out_specs,
            scratch_shapes=[pltpu.VMEM((tm, dfeat), jnp.float32)],
        ),
        compiler_params=pltpu.CompilerParams(
            dimension_semantics=("parallel", "arbitrary"),
            vmem_limit_bytes=vmem_limit,
        ),
        cost_estimate=pl.CostEstimate(flops=int(flops), transcendentals=0,
                                      bytes_accessed=int(bytes_accessed)),
    )(*operands)


def _pick_tile(n128):
    if n128 >= 2048:
        return 512            # ~85% of HBM roofline territory, >=4 row tiles
    if n128 >= 512:
        return 256            # keeps the "parallel" row axis >= 2 for v7x's 2 TCs
    return n128               # tiny graphs normally take the fused path anyway


# ---------------------------------------------------------------------------
# Public encoder.
# ---------------------------------------------------------------------------
def vgae_encoder(a_norm, x, params, *, force_tiled=False):
    """mean, logstd = VGAE encoder.  a_norm: [N, N] dense normalized adjacency (f32)."""
    (w1, b1), (w2, b2), (w3, b3) = params
    n = x.shape[0]
    latent = w2.shape[1]

    x = x.astype(jnp.float32)                                   # mirrors `x.float()`
    # Layer-1 projection first (tiny N x in x 256 matmul, plain JAX): matches PyG's
    # project-then-propagate order and keeps the big aggregation lane-dense (256 wide).
    xw1 = jnp.dot(x, w1, precision=HIGHEST)

    # Fused latent heads: one 256-wide projection instead of two 128-wide ones.
    wcat = jnp.concatenate([w2, w3], axis=1)
    bcat = jnp.concatenate([b2, b3], axis=1)

    n128 = _round_up(n, 128)
    dhid = w1.shape[1]
    dout = wcat.shape[1]
    fused_need = (n128 * n128 * 2                       # A (bf16)
                  + n128 * dhid * 2 * 2                 # xw1 + h (bf16)
                  + n128 * dhid * 4 + n128 * dout * 4   # agg + out (f32)
                  + (b1.size + wcat.size + bcat.size) * 4)
    use_fused = (not force_tiled) and fused_need <= (20 << 20)

    if use_fused:
        pad = n128 - n
        a_bf = (jnp.pad(a_norm, ((0, pad), (0, pad))) if pad else a_norm).astype(jnp.bfloat16)
        xw1_bf = (jnp.pad(xw1, ((0, pad), (0, 0))) if pad else xw1).astype(jnp.bfloat16)
        out = _vgae_fused(a_bf, xw1_bf, b1, wcat, bcat)
        return out[:n, :latent], out[:n, latent:]

    # Tiled path (large graphs).
    t = _pick_tile(n128)
    n_pad = _round_up(n, t)
    pad = n_pad - n
    a_bf = (jnp.pad(a_norm, ((0, pad), (0, pad))) if pad else a_norm).astype(jnp.bfloat16)
    xw1_bf = (jnp.pad(xw1, ((0, pad), (0, 0))) if pad else xw1).astype(jnp.bfloat16)

    # Layer 1: h = A @ (X W1) + b1, emitted in bf16 so layer 2 streams half the bytes.
    h_bf = _gcn_agg_project(a_bf, xw1_bf, None, b1, out_dtype=jnp.bfloat16, tm=t, tk=t)
    # Layer 2: one adjacency pass shared by both heads + fused 256-wide projection.
    out = _gcn_agg_project(a_bf, h_bf, wcat, bcat, out_dtype=jnp.float32, tm=t, tk=t)
    return out[:n, :latent], out[:n, latent:]


# ---------------------------------------------------------------------------
# Plain-JAX setup glue (not the hot path).
# ---------------------------------------------------------------------------
def build_normalized_adjacency(edge_index, num_nodes):
    """Dense D^{-1/2}(A+I)D^{-1/2} matching PyG gcn_norm: pre-existing self-loops are
    dropped and replaced by weight-1 self-loops for every node; duplicates accumulate."""
    # TODO(synk): sparse scatter-add adjacency build stays in plain JAX (setup step).
    src, dst = edge_index[0], edge_index[1]
    w = jnp.where(src == dst, 0.0, 1.0)
    adj = jnp.zeros((num_nodes, num_nodes), jnp.float32)
    adj = adj.at[dst, src].add(w)
    adj = adj + jnp.eye(num_nodes, dtype=jnp.float32)
    deg = jnp.sum(adj, axis=1)
    d_inv_sqrt = jnp.where(deg > 0, jax.lax.rsqrt(deg), 0.0)
    return d_inv_sqrt[:, None] * adj * d_inv_sqrt[None, :]


def init_params(key, input_dim, hidden=256, latent=128):
    """Deterministic synthetic parameters (Glorot-ish weights, small nonzero biases)."""
    k1, k2, k3, kb = jax.random.split(key, 4)
    kb1, kb2, kb3 = jax.random.split(kb, 3)

    def glorot(k, fan_in, fan_out):
        scale = jnp.sqrt(6.0 / (fan_in + fan_out))
        return jax.random.uniform(k, (fan_in, fan_out), jnp.float32, -scale, scale)

    w1 = glorot(k1, input_dim, hidden)
    b1 = 0.1 * jax.random.normal(kb1, (1, hidden), jnp.float32)
    w2 = glorot(k2, hidden, latent)
    b2 = 0.1 * jax.random.normal(kb2, (1, latent), jnp.float32)
    w3 = glorot(k3, hidden, latent)
    b3 = 0.1 * jax.random.normal(kb3, (1, latent), jnp.float32)
    return ((w1, b1), (w2, b2), (w3, b3))


if __name__ == "__main__":
    key = jax.random.PRNGKey(0)
    kx, ke, kp = jax.random.split(key, 3)

    num_nodes = 512
    input_dim = 64
    num_edges = 2048

    x = jax.random.normal(kx, (num_nodes, input_dim), jnp.float32)
    edge_index = jax.random.randint(ke, (2, num_edges), 0, num_nodes, jnp.int32)

    a_norm = build_normalized_adjacency(edge_index, num_nodes)
    params = init_params(kp, input_dim)

    # Default (small-N) fused single-call path.
    mean_f, logstd_f = jax.jit(vgae_encoder)(a_norm, x, params)
    # Tiled multi-call path (what large graphs use), forced for coverage.
    tiled_fn = jax.jit(functools.partial(vgae_encoder, force_tiled=True))
    mean_t, logstd_t = tiled_fn(a_norm, x, params)
    jax.block_until_ready((mean_f, logstd_f, mean_t, logstd_t))

    # Pure-JAX f32 reference replicating the exact bf16 roundings the kernels use
    # (project-then-aggregate association = PyG's own order).
    (w1, b1), (w2, b2), (w3, b3) = params
    a32 = a_norm.astype(jnp.bfloat16).astype(jnp.float32)
    xw1_32 = jnp.dot(x, w1, precision=HIGHEST).astype(jnp.bfloat16).astype(jnp.float32)
    h32 = jnp.dot(a32, xw1_32, precision=HIGHEST) + b1
    h_bf = h32.astype(jnp.bfloat16).astype(jnp.float32)
    agg = jnp.dot(a32, h_bf, precision=HIGHEST)
    mean_ref = jnp.dot(agg, w2, precision=HIGHEST) + b2
    logstd_ref = jnp.dot(agg, w3, precision=HIGHEST) + b3

    for mean, logstd in ((mean_f, logstd_f), (mean_t, logstd_t)):
        assert mean.shape == (num_nodes, 128) and logstd.shape == (num_nodes, 128)
        err_m = float(jnp.max(jnp.abs(mean - mean_ref)))
        err_s = float(jnp.max(jnp.abs(logstd - logstd_ref)))
        assert err_m < 2e-3 and err_s < 2e-3, (err_m, err_s)

    print("KERNEL_OK")
</pallas_src>

<mosaic_0001>
module attributes {stable_mosaic.version = 11 : i64} {
  func.func @_fused_kernel(%arg0: memref<512x512xbf16, #tpu.memory_space<vmem>>, %arg1: memref<512x256xbf16, #tpu.memory_space<vmem>>, %arg2: memref<1x256xf32, #tpu.memory_space<vmem>>, %arg3: memref<256x256xf32, #tpu.memory_space<vmem>>, %arg4: memref<1x256xf32, #tpu.memory_space<vmem>>, %arg5: memref<512x256xf32, #tpu.memory_space<vmem>>) attributes {dimension_semantics = [], scalar_prefetch = 0 : i64, scratch_operands = 0 : i64, tpu.core_type = #tpu.core_type<tc>} {
    %c0 = arith.constant 0 : index
    %c0_0 = arith.constant 0 : index
    %0 = vector.load %arg0[%c0, %c0_0] : memref<512x512xbf16, #tpu.memory_space<vmem>>, vector<512x512xbf16>
    %c0_1 = arith.constant 0 : index
    %c0_2 = arith.constant 0 : index
    %1 = vector.load %arg1[%c0_1, %c0_2] : memref<512x256xbf16, #tpu.memory_space<vmem>>, vector<512x256xbf16>
    %cst = arith.constant dense<0.000000e+00> : vector<512x256xf32>
    %2 = tpu.matmul %0, %1, %cst {dimension_numbers = #tpu.dot_dimension_numbers<[1], [0], [0], [1], [0, 0, 1, 1], [], []>} : vector<512x512xbf16>, vector<512x256xbf16>, vector<512x256xf32> -> vector<512x256xf32>
    %c0_3 = arith.constant 0 : index
    %c0_4 = arith.constant 0 : index
    %3 = vector.load %arg2[%c0_3, %c0_4] : memref<1x256xf32, #tpu.memory_space<vmem>>, vector<1x256xf32>
    %4 = vector.broadcast %3 : vector<1x256xf32> to vector<512x256xf32>
    %5 = arith.addf %2, %4 : vector<512x256xf32>
    %6 = arith.truncf %5 : vector<512x256xf32> to vector<512x256xbf16>
    %c0_5 = arith.constant 0 : index
    %c0_6 = arith.constant 0 : index
    %7 = vector.load %arg0[%c0_5, %c0_6] : memref<512x512xbf16, #tpu.memory_space<vmem>>, vector<512x512xbf16>
    %cst_7 = arith.constant dense<0.000000e+00> : vector<512x256xf32>
    %8 = tpu.matmul %7, %6, %cst_7 {dimension_numbers = #tpu.dot_dimension_numbers<[1], [0], [0], [1], [0, 0, 1, 1], [], []>} : vector<512x512xbf16>, vector<512x256xbf16>, vector<512x256xf32> -> vector<512x256xf32>
    %c0_8 = arith.constant 0 : index
    %c0_9 = arith.constant 0 : index
    %9 = vector.load %arg3[%c0_8, %c0_9] : memref<256x256xf32, #tpu.memory_space<vmem>>, vector<256x256xf32>
    %cst_10 = arith.constant dense<0.000000e+00> : vector<512x256xf32>
    %10 = tpu.matmul %8, %9, %cst_10 {dimension_numbers = #tpu.dot_dimension_numbers<[1], [0], [0], [1], [0, 0, 1, 1], [], []>} : vector<512x256xf32>, vector<256x256xf32>, vector<512x256xf32> -> vector<512x256xf32>
    %c0_11 = arith.constant 0 : index
    %c0_12 = arith.constant 0 : index
    %11 = vector.load %arg4[%c0_11, %c0_12] : memref<1x256xf32, #tpu.memory_space<vmem>>, vector<1x256xf32>
    %12 = vector.broadcast %11 : vector<1x256xf32> to vector<512x256xf32>
    %13 = arith.addf %10, %12 : vector<512x256xf32>
    %c0_13 = arith.constant 0 : index
    %c0_14 = arith.constant 0 : index
    %14 = vector.load %arg5[%c0_13, %c0_14] : memref<512x256xf32, #tpu.memory_space<vmem>>, vector<512x256xf32>
    tpu.vector_store %arg5[%c0_13, %c0_14], %13 {strides = array<i32>} : memref<512x256xf32, #tpu.memory_space<vmem>>, vector<512x256xf32>,
    return
  }
}

</mosaic_0001>

<llo_original>
// kernel: vgae_encoder.1
$region0: #{vgae_encoder.1}
  #allocation0 [shape = 'u32[]', space=smem, size = 0x4, offset = 0x4, fixed_abs, tag = 'smem constant byte address 0x4 - core index']
  #allocation1 [shape = 'u32[144,128]{1,0:T(1,128)}', space=vmem, size = 0x12000, scoped, tag = 'internal scratch']
  %s0 = inlined_call_operand.vmem [shape: bf16[512,512], index: 0, kind: input, shape index: {}]
  %s1 = inlined_call_operand.vmem [shape: bf16[512,256], index: 1, kind: input, shape index: {}]
  %s2 = inlined_call_operand.vmem [shape: f32[1,256], index: 2, kind: input, shape index: {}]
  %s3 = inlined_call_operand.vmem [shape: f32[256,256], index: 3, kind: input, shape index: {}]
  %s4 = inlined_call_operand.vmem [shape: f32[1,256], index: 4, kind: input, shape index: {}]
  %s5 = inlined_call_operand.vmem [shape: f32[512,256], index: 5, kind: output, shape index: {}]
  %s6 = sld [smem:[#allocation0]]
  $region30: #{vgae_encoder.1} parent=0
    _
  %s8 = ssub.s32 1, %s6
  %s9 = scalar_select 0, %s8, %s6
  // Predicated region
  $region2: #{vgae_encoder.1} parent=0 // pred_check
    _
  $region3: #{vgae_encoder.1} parent=0 // pred_check_branch
    %11 = sbr.rel (0) target = $region5
  $region4: #{vgae_encoder.1} parent=0 // pred_region
    _
  $region5: #{vgae_encoder.1} parent=0 // pred_fallthru
    _
  // Predicated region
  $region6: #{vgae_encoder.1} parent=0 // pred_check
    _
  $region7: #{vgae_encoder.1} parent=0 // pred_check_branch
    %13 = sbr.rel (0) target = $region9
  $region8: #{vgae_encoder.1} parent=0 // pred_region
    _
  $region9: #{vgae_encoder.1} parent=0 // pred_fallthru
    _
  // Predicated region
  $region10: #{vgae_encoder.1} parent=0 // pred_check
    _
  $region11: #{vgae_encoder.1} parent=0 // pred_check_branch
    %15 = sbr.rel (0) target = $region13
  $region12: #{vgae_encoder.1} parent=0 // pred_region
    _
  $region13: #{vgae_encoder.1} parent=0 // pred_fallthru
    _
  // Predicated region
  $region14: #{vgae_encoder.1} parent=0 // pred_check
    _
  $region15: #{vgae_encoder.1} parent=0 // pred_check_branch
    %17 = sbr.rel (0) target = $region17
  $region16: #{vgae_encoder.1} parent=0 // pred_region
    _
  $region17: #{vgae_encoder.1} parent=0 // pred_fallthru
    _
  // Predicated region
  $region18: #{vgae_encoder.1} parent=0 // pred_check
    _
  $region19: #{vgae_encoder.1} parent=0 // pred_check_branch
    %19 = sbr.rel (0) target = $region21
  $region20: #{vgae_encoder.1} parent=0 // pred_region
    _
  $region21: #{vgae_encoder.1} parent=0 // pred_fallthru
    _
  %v20 = vld [vmem:[%s0] sm:$0xff]
  %v21 = vld [vmem:[%s0 + $0x8] sm:$0xff]
  %v22 = vld [vmem:[%s0 + $0x10] sm:$0xff]
  %v23 = vld [vmem:[%s0 + $0x18] sm:$0xff]
  %v24 = vld [vmem:[%s0 + $0x20] sm:$0xff]
  %v25 = vld [vmem:[%s0 + $0x28] sm:$0xff]
  %v26 = vld [vmem:[%s0 + $0x30] sm:$0xff]
  %v27 = vld [vmem:[%s0 + $0x38] sm:$0xff]
  %v28 = vld [vmem:[%s0 + $0x40] sm:$0xff]
  %v29 = vld [vmem:[%s0 + $0x48] sm:$0xff]
  %v30 = vld [vmem:[%s0 + $0x50] sm:$0xff]
  %v31 = vld [vmem:[%s0 + $0x58] sm:$0xff]
  %v32 = vld [vmem:[%s0 + $0x60] sm:$0xff]
  %v33 = vld [vmem:[%s0 + $0x68] sm:$0xff]
  %v34 = vld [vmem:[%s0 + $0x70] sm:$0xff]
  %v35 = vld [vmem:[%s0 + $0x78] sm:$0xff]
  %v36 = vld [vmem:[%s0 + $0x80] sm:$0xff]
  %v37 = vld [vmem:[%s0 + $0x88] sm:$0xff]
  %v38 = vld [vmem:[%s0 + $0x90] sm:$0xff]
  %v39 = vld [vmem:[%s0 + $0x98] sm:$0xff]
  %v40 = vld [vmem:[%s0 + $0xa0] sm:$0xff]
  %v41 = vld [vmem:[%s0 + $0xa8] sm:$0xff]
  %v42 = vld [vmem:[%s0 + $0xb0] sm:$0xff]
  %v43 = vld [vmem:[%s0 + $0xb8] sm:$0xff]
  %v44 = vld [vmem:[%s0 + $0xc0] sm:$0xff]
  %v45 = vld [vmem:[%s0 + $0xc8] sm:$0xff]
  %v46 = vld [vmem:[%s0 + $0xd0] sm:$0xff]
  %v47 = vld [vmem:[%s0 + $0xd8] sm:$0xff]
  %v48 = vld [vmem:[%s0 + $0xe0] sm:$0xff]
  %v49 = vld [vmem:[%s0 + $0xe8] sm:$0xff]
  %v50 = vld [vmem:[%s0 + $0xf0] sm:$0xff]
  %v51 = vld [vmem:[%s0 + $0xf8] sm:$0xff]
  %v52 = vld [vmem:[%s0 + $0x100] sm:$0xff]
  %v53 = vld [vmem:[%s0 + $0x108] sm:$0xff]
  %v54 = vld [vmem:[%s0 + $0x110] sm:$0xff]
  %v55 = vld [vmem:[%s0 + $0x118] sm:$0xff]
  %v56 = vld [vmem:[%s0 + $0x120] sm:$0xff]
  %v57 = vld [vmem:[%s0 + $0x128] sm:$0xff]
  %v58 = vld [vmem:[%s0 + $0x130] sm:$0xff]
  %v59 = vld [vmem:[%s0 + $0x138] sm:$0xff]
  %v60 = vld [vmem:[%s0 + $0x140] sm:$0xff]
  %v61 = vld [vmem:[%s0 + $0x148] sm:$0xff]
  %v62 = vld [vmem:[%s0 + $0x150] sm:$0xff]
  %v63 = vld [vmem:[%s0 + $0x158] sm:$0xff]
  %v64 = vld [vmem:[%s0 + $0x160] sm:$0xff]
  %v65 = vld [vmem:[%s0 + $0x168] sm:$0xff]
  %v66 = vld [vmem:[%s0 + $0x170] sm:$0xff]
  %v67 = vld [vmem:[%s0 + $0x178] sm:$0xff]
  %v68 = vld [vmem:[%s0 + $0x180] sm:$0xff]
  %v69 = vld [vmem:[%s0 + $0x188] sm:$0xff]
  %v70 = vld [vmem:[%s0 + $0x190] sm:$0xff]
  %v71 = vld [vmem:[%s0 + $0x198] sm:$0xff]
  %v72 = vld [vmem:[%s0 + $0x1a0] sm:$0xff]
  %v73 = vld [vmem:[%s0 + $0x1a8] sm:$0xff]
  %v74 = vld [vmem:[%s0 + $0x1b0] sm:$0xff]
  %v75 = vld [vmem:[%s0 + $0x1b8] sm:$0xff]
  %v76 = vld [vmem:[%s0 + $0x1c0] sm:$0xff]
  %v77 = vld [vmem:[%s0 + $0x1c8] sm:$0xff]
  %v78 = vld [vmem:[%s0 + $0x1d0] sm:$0xff]
  %v79 = vld [vmem:[%s0 + $0x1d8] sm:$0xff]
  %v80 = vld [vmem:[%s0 + $0x1e0] sm:$0xff]
  %v81 = vld [vmem:[%s0 + $0x1e8] sm:$0xff]
  %v82 = vld [vmem:[%s0 + $0x1f0] sm:$0xff]
  %v83 = vld [vmem:[%s0 + $0x1f8] sm:$0xff]
  %v84 = vld [vmem:[%s0 + $0x200] sm:$0xff]
  %v85 = vld [vmem:[%s0 + $0x208] sm:$0xff]
  %v86 = vld [vmem:[%s0 + $0x210] sm:$0xff]
  %v87 = vld [vmem:[%s0 + $0x218] sm:$0xff]
  %v88 = vld [vmem:[%s0 + $0x220] sm:$0xff]
  %v89 = vld [vmem:[%s0 + $0x228] sm:$0xff]
  %v90 = vld [vmem:[%s0 + $0x230] sm:$0xff]
  %v91 = vld [vmem:[%s0 + $0x238] sm:$0xff]
  %v92 = vld [vmem:[%s0 + $0x240] sm:$0xff]
  %v93 = vld [vmem:[%s0 + $0x248] sm:$0xff]
  %v94 = vld [vmem:[%s0 + $0x250] sm:$0xff]
  %v95 = vld [vmem:[%s0 + $0x258] sm:$0xff]
  %v96 = vld [vmem:[%s0 + $0x260] sm:$0xff]
  %v97 = vld [vmem:[%s0 + $0x268] sm:$0xff]
  %v98 = vld [vmem:[%s0 + $0x270] sm:$0xff]
  %v99 = vld [vmem:[%s0 + $0x278] sm:$0xff]
  %v100 = vld [vmem:[%s0 + $0x280] sm:$0xff]
  %v101 = vld [vmem:[%s0 + $0x288] sm:$0xff]
  %v102 = vld [vmem:[%s0 + $0x290] sm:$0xff]
  %v103 = vld [vmem:[%s0 + $0x298] sm:$0xff]
  %v104 = vld [vmem:[%s0 + $0x2a0] sm:$0xff]
  %v105 = vld [vmem:[%s0 + $0x2a8] sm:$0xff]
  %v106 = vld [vmem:[%s0 + $0x2b0] sm:$0xff]
  %v107 = vld [vmem:[%s0 + $0x2b8] sm:$0xff]
  %v108 = vld [vmem:[%s0 + $0x2c0] sm:$0xff]
  %v109 = vld [vmem:[%s0 + $0x2c8] sm:$0xff]
  %v110 = vld [vmem:[%s0 + $0x2d0] sm:$0xff]
  %v111 = vld [vmem:[%s0 + $0x2d8] sm:$0xff]
  %v112 = vld [vmem:[%s0 + $0x2e0] sm:$0xff]
  %v113 = vld [vmem:[%s0 + $0x2e8] sm:$0xff]
  %v114 = vld [vmem:[%s0 + $0x2f0] sm:$0xff]
  %v115 = vld [vmem:[%s0 + $0x2f8] sm:$0xff]
  %v116 = vld [vmem:[%s0 + $0x300] sm:$0xff]
  %v117 = vld [vmem:[%s0 + $0x308] sm:$0xff]
  %v118 = vld [vmem:[%s0 + $0x310] sm:$0xff]
  %v119 = vld [vmem:[%s0 + $0x318] sm:$0xff]
  %v120 = vld [vmem:[%s0 + $0x320] sm:$0xff]
  %v121 = vld [vmem:[%s0 + $0x328] sm:$0xff]
  %v122 = vld [vmem:[%s0 + $0x330] sm:$0xff]
  %v123 = vld [vmem:[%s0 + $0x338] sm:$0xff]
  %v124 = vld [vmem:[%s0 + $0x340] sm:$0xff]
  %v125 = vld [vmem:[%s0 + $0x348] sm:$0xff]
  %v126 = vld [vmem:[%s0 + $0x350] sm:$0xff]
  %v127 = vld [vmem:[%s0 + $0x358] sm:$0xff]
  %v128 = vld [vmem:[%s0 + $0x360] sm:$0xff]
  %v129 = vld [vmem:[%s0 + $0x368] sm:$0xff]
  %v130 = vld [vmem:[%s0 + $0x370] sm:$0xff]
  %v131 = vld [vmem:[%s0 + $0x378] sm:$0xff]
  %v132 = vld [vmem:[%s0 + $0x380] sm:$0xff]
  %v133 = vld [vmem:[%s0 + $0x388] sm:$0xff]
  %v134 = vld [vmem:[%s0 + $0x390] sm:$0xff]
  %v135 = vld [vmem:[%s0 + $0x398] sm:$0xff]
  %v136 = vld [vmem:[%s0 + $0x3a0] sm:$0xff]
  %v137 = vld [vmem:[%s0 + $0x3a8] sm:$0xff]
  %v138 = vld [vmem:[%s0 + $0x3b0] sm:$0xff]
  %v139 = vld [vmem:[%s0 + $0x3b8] sm:$0xff]
  %v140 = vld [vmem:[%s0 + $0x3c0] sm:$0xff]
  %v141 = vld [vmem:[%s0 + $0x3c8] sm:$0xff]
  %v142 = vld [vmem:[%s0 + $0x3d0] sm:$0xff]
  %v143 = vld [vmem:[%s0 + $0x3d8] sm:$0xff]
  %v144 = vld [vmem:[%s0 + $0x3e0] sm:$0xff]
  %v145 = vld [vmem:[%s0 + $0x3e8] sm:$0xff]
  %v146 = vld [vmem:[%s0 + $0x3f0] sm:$0xff]
  %v147 = vld [vmem:[%s0 + $0x3f8] sm:$0xff]
  %v148 = vld [vmem:[%s1] sm:$0xff]
  %v149 = vld [vmem:[%s1 + $0x8] sm:$0xff]
  %v150 = vld [vmem:[%s1 + $0x10] sm:$0xff]
  %v151 = vld [vmem:[%s1 + $0x18] sm:$0xff]
  %v152 = vld [vmem:[%s1 + $0x20] sm:$0xff]
  %v153 = vld [vmem:[%s1 + $0x28] sm:$0xff]
  %v154 = vld [vmem:[%s1 + $0x30] sm:$0xff]
  %v155 = vld [vmem:[%s1 + $0x38] sm:$0xff]
  %v156 = vld [vmem:[%s1 + $0x40] sm:$0xff]
  %v157 = vld [vmem:[%s1 + $0x48] sm:$0xff]
  %v158 = vld [vmem:[%s1 + $0x50] sm:$0xff]
  %v159 = vld [vmem:[%s1 + $0x58] sm:$0xff]
  %v160 = vld [vmem:[%s1 + $0x60] sm:$0xff]
  %v161 = vld [vmem:[%s1 + $0x68] sm:$0xff]
  %v162 = vld [vmem:[%s1 + $0x70] sm:$0xff]
  %v163 = vld [vmem:[%s1 + $0x78] sm:$0xff]
  %v164 = vld [vmem:[%s1 + $0x80] sm:$0xff]
  %v165 = vld [vmem:[%s1 + $0x88] sm:$0xff]
  %v166 = vld [vmem:[%s1 + $0x90] sm:$0xff]
  %v167 = vld [vmem:[%s1 + $0x98] sm:$0xff]
  %v168 = vld [vmem:[%s1 + $0xa0] sm:$0xff]
  %v169 = vld [vmem:[%s1 + $0xa8] sm:$0xff]
  %v170 = vld [vmem:[%s1 + $0xb0] sm:$0xff]
  %v171 = vld [vmem:[%s1 + $0xb8] sm:$0xff]
  %v172 = vld [vmem:[%s1 + $0xc0] sm:$0xff]
  %v173 = vld [vmem:[%s1 + $0xc8] sm:$0xff]
  %v174 = vld [vmem:[%s1 + $0xd0] sm:$0xff]
  %v175 = vld [vmem:[%s1 + $0xd8] sm:$0xff]
  %v176 = vld [vmem:[%s1 + $0xe0] sm:$0xff]
  %v177 = vld [vmem:[%s1 + $0xe8] sm:$0xff]
  %v178 = vld [vmem:[%s1 + $0xf0] sm:$0xff]
  %v179 = vld [vmem:[%s1 + $0xf8] sm:$0xff]
  %v180 = vld [vmem:[%s1 + $0x100] sm:$0xff]
  %v181 = vld [vmem:[%s1 + $0x108] sm:$0xff]
  %v182 = vld [vmem:[%s1 + $0x110] sm:$0xff]
  %v183 = vld [vmem:[%s1 + $0x118] sm:$0xff]
  %v184 = vld [vmem:[%s1 + $0x120] sm:$0xff]
  %v185 = vld [vmem:[%s1 + $0x128] sm:$0xff]
  %v186 = vld [vmem:[%s1 + $0x130] sm:$0xff]
  %v187 = vld [vmem:[%s1 + $0x138] sm:$0xff]
  %v188 = vld [vmem:[%s1 + $0x140] sm:$0xff]
  %v189 = vld [vmem:[%s1 + $0x148] sm:$0xff]
  %v190 = vld [vmem:[%s1 + $0x150] sm:$0xff]
  %v191 = vld [vmem:[%s1 + $0x158] sm:$0xff]
  %v192 = vld [vmem:[%s1 + $0x160] sm:$0xff]
  %v193 = vld [vmem:[%s1 + $0x168] sm:$0xff]
  %v194 = vld [vmem:[%s1 + $0x170] sm:$0xff]
  %v195 = vld [vmem:[%s1 + $0x178] sm:$0xff]
  %v196 = vld [vmem:[%s1 + $0x180] sm:$0xff]
  %v197 = vld [vmem:[%s1 + $0x188] sm:$0xff]
  %v198 = vld [vmem:[%s1 + $0x190] sm:$0xff]
  %v199 = vld [vmem:[%s1 + $0x198] sm:$0xff]
  %v200 = vld [vmem:[%s1 + $0x1a0] sm:$0xff]
  %v201 = vld [vmem:[%s1 + $0x1a8] sm:$0xff]
  %v202 = vld [vmem:[%s1 + $0x1b0] sm:$0xff]
  %v203 = vld [vmem:[%s1 + $0x1b8] sm:$0xff]
  %v204 = vld [vmem:[%s1 + $0x1c0] sm:$0xff]
  %v205 = vld [vmem:[%s1 + $0x1c8] sm:$0xff]
  %v206 = vld [vmem:[%s1 + $0x1d0] sm:$0xff]
  %v207 = vld [vmem:[%s1 + $0x1d8] sm:$0xff]
  %v208 = vld [vmem:[%s1 + $0x1e0] sm:$0xff]
  %v209 = vld [vmem:[%s1 + $0x1e8] sm:$0xff]
  %v210 = vld [vmem:[%s1 + $0x1f0] sm:$0xff]
  %v211 = vld [vmem:[%s1 + $0x1f8] sm:$0xff]
  %v212 = vld [vmem:[%s2] sm:$0x3]
  %v214 = vlaneseq
  %v215 = vshrl.u32 %v214, 7
  %v216 = vsub.s32 0, %v215
  %v217 = vrot.slane %v212, %v216
  %v218 = vlaneseq
  %v219 = vshrl.u32 %v218, 7
  %v220 = vsub.s32 1, %v219
  %v221 = vrot.slane %v212, %v220
  %v352 = vunpack.c.l.b16 %v20
  %v353 = vunpack.c.h.b16 %v20
  %v354 = vunpack.c.l.b16 %v21
  %v355 = vunpack.c.h.b16 %v21
  %v356 = vunpack.c.l.b16 %v22
  %v357 = vunpack.c.h.b16 %v22
  %v358 = vunpack.c.l.b16 %v23
  %v359 = vunpack.c.h.b16 %v23
  %v360 = vunpack.c.l.b16 %v24
  %v361 = vunpack.c.h.b16 %v24
  %v362 = vunpack.c.l.b16 %v25
  %v363 = vunpack.c.h.b16 %v25
  %v364 = vunpack.c.l.b16 %v26
  %v365 = vunpack.c.h.b16 %v26
  %v366 = vunpack.c.l.b16 %v27
  %v367 = vunpack.c.h.b16 %v27
  %v368 = vunpack.c.l.b16 %v28
  %v369 = vunpack.c.h.b16 %v28
  %v370 = vunpack.c.l.b16 %v29
  %v371 = vunpack.c.h.b16 %v29
  %v372 = vunpack.c.l.b16 %v30
  %v373 = vunpack.c.h.b16 %v30
  %v374 = vunpack.c.l.b16 %v31
  %v375 = vunpack.c.h.b16 %v31
  %v376 = vunpack.c.l.b16 %v32
  %v377 = vunpack.c.h.b16 %v32
  %v378 = vunpack.c.l.b16 %v33
  %v379 = vunpack.c.h.b16 %v33
  %v380 = vunpack.c.l.b16 %v34
  %v381 = vunpack.c.h.b16 %v34
  %v382 = vunpack.c.l.b16 %v35
  %v383 = vunpack.c.h.b16 %v35
  %v384 = vunpack.c.l.b16 %v36
  %v385 = vunpack.c.h.b16 %v36
  %v386 = vunpack.c.l.b16 %v37
  %v387 = vunpack.c.h.b16 %v37
  %v388 = vunpack.c.l.b16 %v38
  %v389 = vunpack.c.h.b16 %v38
  %v390 = vunpack.c.l.b16 %v39
  %v391 = vunpack.c.h.b16 %v39
  %v392 = vunpack.c.l.b16 %v40
  %v393 = vunpack.c.h.b16 %v40
  %v394 = vunpack.c.l.b16 %v41
  %v395 = vunpack.c.h.b16 %v41
  %v396 = vunpack.c.l.b16 %v42
  %v397 = vunpack.c.h.b16 %v42
  %v398 = vunpack.c.l.b16 %v43
  %v399 = vunpack.c.h.b16 %v43
  %v400 = vunpack.c.l.b16 %v44
  %v401 = vunpack.c.h.b16 %v44
  %v402 = vunpack.c.l.b16 %v45
  %v403 = vunpack.c.h.b16 %v45
  %v404 = vunpack.c.l.b16 %v46
  %v405 = vunpack.c.h.b16 %v46
  %v406 = vunpack.c.l.b16 %v47
  %v407 = vunpack.c.h.b16 %v47
  %v408 = vunpack.c.l.b16 %v48
  %v409 = vunpack.c.h.b16 %v48
  %v410 = vunpack.c.l.b16 %v49
  %v411 = vunpack.c.h.b16 %v49
  %v412 = vunpack.c.l.b16 %v50
  %v413 = vunpack.c.h.b16 %v50
  %v414 = vunpack.c.l.b16 %v51
  %v415 = vunpack.c.h.b16 %v51
  %v416 = vunpack.c.l.b16 %v52
  %v417 = vunpack.c.h.b16 %v52
  %v418 = vunpack.c.l.b16 %v53
  %v419 = vunpack.c.h.b16 %v53
  %v420 = vunpack.c.l.b16 %v54
  %v421 = vunpack.c.h.b16 %v54
  %v422 = vunpack.c.l.b16 %v55
  %v423 = vunpack.c.h.b16 %v55
  %v424 = vunpack.c.l.b16 %v56
  %v425 = vunpack.c.h.b16 %v56
  %v426 = vunpack.c.l.b16 %v57
  %v427 = vunpack.c.h.b16 %v57
  %v428 = vunpack.c.l.b16 %v58
  %v429 = vunpack.c.h.b16 %v58
  %v430 = vunpack.c.l.b16 %v59
  %v431 = vunpack.c.h.b16 %v59
  %v432 = vunpack.c.l.b16 %v60
  %v433 = vunpack.c.h.b16 %v60
  %v434 = vunpack.c.l.b16 %v61
  %v435 = vunpack.c.h.b16 %v61
  %v436 = vunpack.c.l.b16 %v62
  %v437 = vunpack.c.h.b16 %v62
  %v438 = vunpack.c.l.b16 %v63
  %v439 = vunpack.c.h.b16 %v63
  %v440 = vunpack.c.l.b16 %v64
  %v441 = vunpack.c.h.b16 %v64
  %v442 = vunpack.c.l.b16 %v65
  %v443 = vunpack.c.h.b16 %v65
  %v444 = vunpack.c.l.b16 %v66
  %v445 = vunpack.c.h.b16 %v66
  %v446 = vunpack.c.l.b16 %v67
  %v447 = vunpack.c.h.b16 %v67
  %v448 = vunpack.c.l.b16 %v68
  %v449 = vunpack.c.h.b16 %v68
  %v450 = vunpack.c.l.b16 %v69
  %v451 = vunpack.c.h.b16 %v69
  %v452 = vunpack.c.l.b16 %v70
  %v453 = vunpack.c.h.b16 %v70
  %v454 = vunpack.c.l.b16 %v71
  %v455 = vunpack.c.h.b16 %v71
  %v456 = vunpack.c.l.b16 %v72
  %v457 = vunpack.c.h.b16 %v72
  %v458 = vunpack.c.l.b16 %v73
  %v459 = vunpack.c.h.b16 %v73
  %v460 = vunpack.c.l.b16 %v74
  %v461 = vunpack.c.h.b16 %v74
  %v462 = vunpack.c.l.b16 %v75
  %v463 = vunpack.c.h.b16 %v75
  %v464 = vunpack.c.l.b16 %v76
  %v465 = vunpack.c.h.b16 %v76
  %v466 = vunpack.c.l.b16 %v77
  %v467 = vunpack.c.h.b16 %v77
  %v468 = vunpack.c.l.b16 %v78
  %v469 = vunpack.c.h.b16 %v78
  %v470 = vunpack.c.l.b16 %v79
  %v471 = vunpack.c.h.b16 %v79
  %v472 = vunpack.c.l.b16 %v80
  %v473 = vunpack.c.h.b16 %v80
  %v474 = vunpack.c.l.b16 %v81
  %v475 = vunpack.c.h.b16 %v81
  %v476 = vunpack.c.l.b16 %v82
  %v477 = vunpack.c.h.b16 %v82
  %v478 = vunpack.c.l.b16 %v83
  %v479 = vunpack.c.h.b16 %v83
  %v480 = vunpack.c.l.b16 %v84
  %v481 = vunpack.c.h.b16 %v84
  %v482 = vunpack.c.l.b16 %v85
  %v483 = vunpack.c.h.b16 %v85
  %v484 = vunpack.c.l.b16 %v86
  %v485 = vunpack.c.h.b16 %v86
  %v486 = vunpack.c.l.b16 %v87
  %v487 = vunpack.c.h.b16 %v87
  %v488 = vunpack.c.l.b16 %v88
  %v489 = vunpack.c.h.b16 %v88
  %v490 = vunpack.c.l.b16 %v89
  %v491 = vunpack.c.h.b16 %v89
  %v492 = vunpack.c.l.b16 %v90
  %v493 = vunpack.c.h.b16 %v90
  %v494 = vunpack.c.l.b16 %v91
  %v495 = vunpack.c.h.b16 %v91
  %v496 = vunpack.c.l.b16 %v92
  %v497 = vunpack.c.h.b16 %v92
  %v498 = vunpack.c.l.b16 %v93
  %v499 = vunpack.c.h.b16 %v93
  %v500 = vunpack.c.l.b16 %v94
  %v501 = vunpack.c.h.b16 %v94
  %v502 = vunpack.c.l.b16 %v95
  %v503 = vunpack.c.h.b16 %v95
  %v504 = vunpack.c.l.b16 %v96
  %v505 = vunpack.c.h.b16 %v96
  %v506 = vunpack.c.l.b16 %v97
  %v507 = vunpack.c.h.b16 %v97
  %v508 = vunpack.c.l.b16 %v98
  %v509 = vunpack.c.h.b16 %v98
  %v510 = vunpack.c.l.b16 %v99
  %v511 = vunpack.c.h.b16 %v99
  %v512 = vunpack.c.l.b16 %v100
  %v513 = vunpack.c.h.b16 %v100
  %v514 = vunpack.c.l.b16 %v101
  %v515 = vunpack.c.h.b16 %v101
  %v516 = vunpack.c.l.b16 %v102
  %v517 = vunpack.c.h.b16 %v102
  %v518 = vunpack.c.l.b16 %v103
  %v519 = vunpack.c.h.b16 %v103
  %v520 = vunpack.c.l.b16 %v104
  %v521 = vunpack.c.h.b16 %v104
  %v522 = vunpack.c.l.b16 %v105
  %v523 = vunpack.c.h.b16 %v105
  %v524 = vunpack.c.l.b16 %v106
  %v525 = vunpack.c.h.b16 %v106
  %v526 = vunpack.c.l.b16 %v107
  %v527 = vunpack.c.h.b16 %v107
  %v528 = vunpack.c.l.b16 %v108
  %v529 = vunpack.c.h.b16 %v108
  %v530 = vunpack.c.l.b16 %v109
  %v531 = vunpack.c.h.b16 %v109
  %v532 = vunpack.c.l.b16 %v110
  %v533 = vunpack.c.h.b16 %v110
  %v534 = vunpack.c.l.b16 %v111
  %v535 = vunpack.c.h.b16 %v111
  %v536 = vunpack.c.l.b16 %v112
  %v537 = vunpack.c.h.b16 %v112
  %v538 = vunpack.c.l.b16 %v113
  %v539 = vunpack.c.h.b16 %v113
  %v540 = vunpack.c.l.b16 %v114
  %v541 = vunpack.c.h.b16 %v114
  %v542 = vunpack.c.l.b16 %v115
  %v543 = vunpack.c.h.b16 %v115
  %v544 = vunpack.c.l.b16 %v116
  %v545 = vunpack.c.h.b16 %v116
  %v546 = vunpack.c.l.b16 %v117
  %v547 = vunpack.c.h.b16 %v117
  %v548 = vunpack.c.l.b16 %v118
  %v549 = vunpack.c.h.b16 %v118
  %v550 = vunpack.c.l.b16 %v119
  %v551 = vunpack.c.h.b16 %v119
  %v552 = vunpack.c.l.b16 %v120
  %v553 = vunpack.c.h.b16 %v120
  %v554 = vunpack.c.l.b16 %v121
  %v555 = vunpack.c.h.b16 %v121
  %v556 = vunpack.c.l.b16 %v122
  %v557 = vunpack.c.h.b16 %v122
  %v558 = vunpack.c.l.b16 %v123
  %v559 = vunpack.c.h.b16 %v123
  %v560 = vunpack.c.l.b16 %v124
  %v561 = vunpack.c.h.b16 %v124
  %v562 = vunpack.c.l.b16 %v125
  %v563 = vunpack.c.h.b16 %v125
  %v564 = vunpack.c.l.b16 %v126
  %v565 = vunpack.c.h.b16 %v126
  %v566 = vunpack.c.l.b16 %v127
  %v567 = vunpack.c.h.b16 %v127
  %v568 = vunpack.c.l.b16 %v128
  %v569 = vunpack.c.h.b16 %v128
  %v570 = vunpack.c.l.b16 %v129
  %v571 = vunpack.c.h.b16 %v129
  %v572 = vunpack.c.l.b16 %v130
  %v573 = vunpack.c.h.b16 %v130
  %v574 = vunpack.c.l.b16 %v131
  %v575 = vunpack.c.h.b16 %v131
  %v576 = vunpack.c.l.b16 %v132
  %v577 = vunpack.c.h.b16 %v132
  %v578 = vunpack.c.l.b16 %v133
  %v579 = vunpack.c.h.b16 %v133
  %v580 = vunpack.c.l.b16 %v134
  %v581 = vunpack.c.h.b16 %v134
  %v582 = vunpack.c.l.b16 %v135
  %v583 = vunpack.c.h.b16 %v135
  %v584 = vunpack.c.l.b16 %v136
  %v585 = vunpack.c.h.b16 %v136
  %v586 = vunpack.c.l.b16 %v137
  %v587 = vunpack.c.h.b16 %v137
  %v588 = vunpack.c.l.b16 %v138
  %v589 = vunpack.c.h.b16 %v138
  %v590 = vunpack.c.l.b16 %v139
  %v591 = vunpack.c.h.b16 %v139
  %v592 = vunpack.c.l.b16 %v140
  %v593 = vunpack.c.h.b16 %v140
  %v594 = vunpack.c.l.b16 %v141
  %v595 = vunpack.c.h.b16 %v141
  %v596 = vunpack.c.l.b16 %v142
  %v597 = vunpack.c.h.b16 %v142
  %v598 = vunpack.c.l.b16 %v143
  %v599 = vunpack.c.h.b16 %v143
  %v600 = vunpack.c.l.b16 %v144
  %v601 = vunpack.c.h.b16 %v144
  %v602 = vunpack.c.l.b16 %v145
  %v603 = vunpack.c.h.b16 %v145
  %v604 = vunpack.c.l.b16 %v146
  %v605 = vunpack.c.h.b16 %v146
  %v606 = vunpack.c.l.b16 %v147
  %v607 = vunpack.c.h.b16 %v147
  %v608 = vpack.c.b16 %v356, %v352
  %v609 = vpack.c.b16 %v357, %v353
  %v610 = vpack.c.b16 %v358, %v354
  %v611 = vpack.c.b16 %v359, %v355
  %v612 = vpack.c.b16 %v364, %v360
  %v613 = vpack.c.b16 %v365, %v361
  %v614 = vpack.c.b16 %v366, %v362
  %v615 = vpack.c.b16 %v367, %v363
  %v616 = vpack.c.b16 %v372, %v368
  %v617 = vpack.c.b16 %v373, %v369
  %v618 = vpack.c.b16 %v374, %v370
  %v619 = vpack.c.b16 %v375, %v371
  %v620 = vpack.c.b16 %v380, %v376
  %v621 = vpack.c.b16 %v381, %v377
  %v622 = vpack.c.b16 %v382, %v378
  %v623 = vpack.c.b16 %v383, %v379
  %v624 = vpack.c.b16 %v388, %v384
  %v625 = vpack.c.b16 %v389, %v385
  %v626 = vpack.c.b16 %v390, %v386
  %v627 = vpack.c.b16 %v391, %v387
  %v628 = vpack.c.b16 %v396, %v392
  %v629 = vpack.c.b16 %v397, %v393
  %v630 = vpack.c.b16 %v398, %v394
  %v631 = vpack.c.b16 %v399, %v395
  %v632 = vpack.c.b16 %v404, %v400
  %v633 = vpack.c.b16 %v405, %v401
  %v634 = vpack.c.b16 %v406, %v402
  %v635 = vpack.c.b16 %v407, %v403
  %v636 = vpack.c.b16 %v412, %v408
  %v637 = vpack.c.b16 %v413, %v409
  %v638 = vpack.c.b16 %v414, %v410
  %v639 = vpack.c.b16 %v415, %v411
  %v640 = vpack.c.b16 %v420, %v416
  %v641 = vpack.c.b16 %v421, %v417
  %v642 = vpack.c.b16 %v422, %v418
  %v643 = vpack.c.b16 %v423, %v419
  %v644 = vpack.c.b16 %v428, %v424
  %v645 = vpack.c.b16 %v429, %v425
  %v646 = vpack.c.b16 %v430, %v426
  %v647 = vpack.c.b16 %v431, %v427
  %v648 = vpack.c.b16 %v436, %v432
  %v649 = vpack.c.b16 %v437, %v433
  %v650 = vpack.c.b16 %v438, %v434
  %v651 = vpack.c.b16 %v439, %v435
  %v652 = vpack.c.b16 %v444, %v440
  %v653 = vpack.c.b16 %v445, %v441
  %v654 = vpack.c.b16 %v446, %v442
  %v655 = vpack.c.b16 %v447, %v443
  %v656 = vpack.c.b16 %v452, %v448
  %v657 = vpack.c.b16 %v453, %v449
  %v658 = vpack.c.b16 %v454, %v450
  %v659 = vpack.c.b16 %v455, %v451
  %v660 = vpack.c.b16 %v460, %v456
  %v661 = vpack.c.b16 %v461, %v457
  %v662 = vpack.c.b16 %v462, %v458
  %v663 = vpack.c.b16 %v463, %v459
  %v664 = vpack.c.b16 %v468, %v464
  %v665 = vpack.c.b16 %v469, %v465
  %v666 = vpack.c.b16 %v470, %v466
  %v667 = vpack.c.b16 %v471, %v467
  %v668 = vpack.c.b16 %v476, %v472
  %v669 = vpack.c.b16 %v477, %v473
  %v670 = vpack.c.b16 %v478, %v474
  %v671 = vpack.c.b16 %v479, %v475
  %v672 = vpack.c.b16 %v484, %v480
  %v673 = vpack.c.b16 %v485, %v481
  %v674 = vpack.c.b16 %v486, %v482
  %v675 = vpack.c.b16 %v487, %v483
  %v676 = vpack.c.b16 %v492, %v488
  %v677 = vpack.c.b16 %v493, %v489
  %v678 = vpack.c.b16 %v494, %v490
  %v679 = vpack.c.b16 %v495, %v491
  %v680 = vpack.c.b16 %v500, %v496
  %v681 = vpack.c.b16 %v501, %v497
  %v682 = vpack.c.b16 %v502, %v498
  %v683 = vpack.c.b16 %v503, %v499
  %v684 = vpack.c.b16 %v508, %v504
  %v685 = vpack.c.b16 %v509, %v505
  %v686 = vpack.c.b16 %v510, %v506
  %v687 = vpack.c.b16 %v511, %v507
  %v688 = vpack.c.b16 %v516, %v512
  %v689 = vpack.c.b16 %v517, %v513
  %v690 = vpack.c.b16 %v518, %v514
  %v691 = vpack.c.b16 %v519, %v515
  %v692 = vpack.c.b16 %v524, %v520
  %v693 = vpack.c.b16 %v525, %v521
  %v694 = vpack.c.b16 %v526, %v522
  %v695 = vpack.c.b16 %v527, %v523
  %v696 = vpack.c.b16 %v532, %v528
  %v697 = vpack.c.b16 %v533, %v529
  %v698 = vpack.c.b16 %v534, %v530
  %v699 = vpack.c.b16 %v535, %v531
  %v700 = vpack.c.b16 %v540, %v536
  %v701 = vpack.c.b16 %v541, %v537
  %v702 = vpack.c.b16 %v542, %v538
  %v703 = vpack.c.b16 %v543, %v539
  %v704 = vpack.c.b16 %v548, %v544
  %v705 = vpack.c.b16 %v549, %v545
  %v706 = vpack.c.b16 %v550, %v546
  %v707 = vpack.c.b16 %v551, %v547
  %v708 = vpack.c.b16 %v556, %v552
  %v709 = vpack.c.b16 %v557, %v553
  %v710 = vpack.c.b16 %v558, %v554
  %v711 = vpack.c.b16 %v559, %v555
  %v712 = vpack.c.b16 %v564, %v560
  %v713 = vpack.c.b16 %v565, %v561
  %v714 = vpack.c.b16 %v566, %v562
  %v715 = vpack.c.b16 %v567, %v563
  %v716 = vpack.c.b16 %v572, %v568
  %v717 = vpack.c.b16 %v573, %v569
  %v718 = vpack.c.b16 %v574, %v570
  %v719 = vpack.c.b16 %v575, %v571
  %v720 = vpack.c.b16 %v580, %v576
  %v721 = vpack.c.b16 %v581, %v577
  %v722 = vpack.c.b16 %v582, %v578
  %v723 = vpack.c.b16 %v583, %v579
  %v724 = vpack.c.b16 %v588, %v584
  %v725 = vpack.c.b16 %v589, %v585
  %v726 = vpack.c.b16 %v590, %v586
  %v727 = vpack.c.b16 %v591, %v587
  %v728 = vpack.c.b16 %v596, %v592
  %v729 = vpack.c.b16 %v597, %v593
  %v730 = vpack.c.b16 %v598, %v594
  %v731 = vpack.c.b16 %v599, %v595
  %v732 = vpack.c.b16 %v604, %v600
  %v733 = vpack.c.b16 %v605, %v601
  %v734 = vpack.c.b16 %v606, %v602
  %v735 = vpack.c.b16 %v607, %v603
  %v928 = vunpack.c.l.b16 %v148
  %v929 = vunpack.c.h.b16 %v148
  %v930 = vunpack.c.l.b16 %v149
  %v931 = vunpack.c.h.b16 %v149
  %v932 = vunpack.c.l.b16 %v150
  %v933 = vunpack.c.h.b16 %v150
  %v934 = vunpack.c.l.b16 %v151
  %v935 = vunpack.c.h.b16 %v151
  %v936 = vunpack.c.l.b16 %v152
  %v937 = vunpack.c.h.b16 %v152
  %v938 = vunpack.c.l.b16 %v153
  %v939 = vunpack.c.h.b16 %v153
  %v940 = vunpack.c.l.b16 %v154
  %v941 = vunpack.c.h.b16 %v154
  %v942 = vunpack.c.l.b16 %v155
  %v943 = vunpack.c.h.b16 %v155
  %v944 = vunpack.c.l.b16 %v156
  %v945 = vunpack.c.h.b16 %v156
  %v946 = vunpack.c.l.b16 %v157
  %v947 = vunpack.c.h.b16 %v157
  %v948 = vunpack.c.l.b16 %v158
  %v949 = vunpack.c.h.b16 %v158
  %v950 = vunpack.c.l.b16 %v159
  %v951 = vunpack.c.h.b16 %v159
  %v952 = vunpack.c.l.b16 %v160
  %v953 = vunpack.c.h.b16 %v160
  %v954 = vunpack.c.l.b16 %v161
  %v955 = vunpack.c.h.b16 %v161
  %v956 = vunpack.c.l.b16 %v162
  %v957 = vunpack.c.h.b16 %v162
  %v958 = vunpack.c.l.b16 %v163
  %v959 = vunpack.c.h.b16 %v163
  %v960 = vunpack.c.l.b16 %v164
  %v961 = vunpack.c.h.b16 %v164
  %v962 = vunpack.c.l.b16 %v165
  %v963 = vunpack.c.h.b16 %v165
  %v964 = vunpack.c.l.b16 %v166
  %v965 = vunpack.c.h.b16 %v166
  %v966 = vunpack.c.l.b16 %v167
  %v967 = vunpack.c.h.b16 %v167
  %v968 = vunpack.c.l.b16 %v168
  %v969 = vunpack.c.h.b16 %v168
  %v970 = vunpack.c.l.b16 %v169
  %v971 = vunpack.c.h.b16 %v169
  %v972 = vunpack.c.l.b16 %v170
  %v973 = vunpack.c.h.b16 %v170
  %v974 = vunpack.c.l.b16 %v171
  %v975 = vunpack.c.h.b16 %v171
  %v976 = vunpack.c.l.b16 %v172
  %v977 = vunpack.c.h.b16 %v172
  %v978 = vunpack.c.l.b16 %v173
  %v979 = vunpack.c.h.b16 %v173
  %v980 = vunpack.c.l.b16 %v174
  %v981 = vunpack.c.h.b16 %v174
  %v982 = vunpack.c.l.b16 %v175
  %v983 = vunpack.c.h.b16 %v175
  %v984 = vunpack.c.l.b16 %v176
  %v985 = vunpack.c.h.b16 %v176
  %v986 = vunpack.c.l.b16 %v177
  %v987 = vunpack.c.h.b16 %v177
  %v988 = vunpack.c.l.b16 %v178
  %v989 = vunpack.c.h.b16 %v178
  %v990 = vunpack.c.l.b16 %v179
  %v991 = vunpack.c.h.b16 %v179
  %v992 = vunpack.c.l.b16 %v180
  %v993 = vunpack.c.h.b16 %v180
  %v994 = vunpack.c.l.b16 %v181
  %v995 = vunpack.c.h.b16 %v181
  %v996 = vunpack.c.l.b16 %v182
  %v997 = vunpack.c.h.b16 %v182
  %v998 = vunpack.c.l.b16 %v183
  %v999 = vunpack.c.h.b16 %v183
  %v1000 = vunpack.c.l.b16 %v184
  %v1001 = vunpack.c.h.b16 %v184
  %v1002 = vunpack.c.l.b16 %v185
  %v1003 = vunpack.c.h.b16 %v185
  %v1004 = vunpack.c.l.b16 %v186
  %v1005 = vunpack.c.h.b16 %v186
  %v1006 = vunpack.c.l.b16 %v187
  %v1007 = vunpack.c.h.b16 %v187
  %v1008 = vunpack.c.l.b16 %v188
  %v1009 = vunpack.c.h.b16 %v188
  %v1010 = vunpack.c.l.b16 %v189
  %v1011 = vunpack.c.h.b16 %v189
  %v1012 = vunpack.c.l.b16 %v190
  %v1013 = vunpack.c.h.b16 %v190
  %v1014 = vunpack.c.l.b16 %v191
  %v1015 = vunpack.c.h.b16 %v191
  %v1016 = vunpack.c.l.b16 %v192
  %v1017 = vunpack.c.h.b16 %v192
  %v1018 = vunpack.c.l.b16 %v193
  %v1019 = vunpack.c.h.b16 %v193
  %v1020 = vunpack.c.l.b16 %v194
  %v1021 = vunpack.c.h.b16 %v194
  %v1022 = vunpack.c.l.b16 %v195
  %v1023 = vunpack.c.h.b16 %v195
  %v1024 = vunpack.c.l.b16 %v196
  %v1025 = vunpack.c.h.b16 %v196
  %v1026 = vunpack.c.l.b16 %v197
  %v1027 = vunpack.c.h.b16 %v197
  %v1028 = vunpack.c.l.b16 %v198
  %v1029 = vunpack.c.h.b16 %v198
  %v1030 = vunpack.c.l.b16 %v199
  %v1031 = vunpack.c.h.b16 %v199
  %v1032 = vunpack.c.l.b16 %v200
  %v1033 = vunpack.c.h.b16 %v200
  %v1034 = vunpack.c.l.b16 %v201
  %v1035 = vunpack.c.h.b16 %v201
  %v1036 = vunpack.c.l.b16 %v202
  %v1037 = vunpack.c.h.b16 %v202
  %v1038 = vunpack.c.l.b16 %v203
  %v1039 = vunpack.c.h.b16 %v203
  %v1040 = vunpack.c.l.b16 %v204
  %v1041 = vunpack.c.h.b16 %v204
  %v1042 = vunpack.c.l.b16 %v205
  %v1043 = vunpack.c.h.b16 %v205
  %v1044 = vunpack.c.l.b16 %v206
  %v1045 = vunpack.c.h.b16 %v206
  %v1046 = vunpack.c.l.b16 %v207
  %v1047 = vunpack.c.h.b16 %v207
  %v1048 = vunpack.c.l.b16 %v208
  %v1049 = vunpack.c.h.b16 %v208
  %v1050 = vunpack.c.l.b16 %v209
  %v1051 = vunpack.c.h.b16 %v209
  %v1052 = vunpack.c.l.b16 %v210
  %v1053 = vunpack.c.h.b16 %v210
  %v1054 = vunpack.c.l.b16 %v211
  %v1055 = vunpack.c.h.b16 %v211
  %v1056 = vpack.c.b16 %v930, %v928
  %v1057 = vpack.c.b16 %v931, %v929
  %v1058 = vpack.c.b16 %v934, %v932
  %v1059 = vpack.c.b16 %v935, %v933
  %v1060 = vpack.c.b16 %v938, %v936
  %v1061 = vpack.c.b16 %v939, %v937
  %v1062 = vpack.c.b16 %v942, %v940
  %v1063 = vpack.c.b16 %v943, %v941
  %v1064 = vpack.c.b16 %v946, %v944
  %v1065 = vpack.c.b16 %v947, %v945
  %v1066 = vpack.c.b16 %v950, %v948
  %v1067 = vpack.c.b16 %v951, %v949
  %v1068 = vpack.c.b16 %v954, %v952
  %v1069 = vpack.c.b16 %v955, %v953
  %v1070 = vpack.c.b16 %v958, %v956
  %v1071 = vpack.c.b16 %v959, %v957
  %v1072 = vpack.c.b16 %v962, %v960
  %v1073 = vpack.c.b16 %v963, %v961
  %v1074 = vpack.c.b16 %v966, %v964
  %v1075 = vpack.c.b16 %v967, %v965
  %v1076 = vpack.c.b16 %v970, %v968
  %v1077 = vpack.c.b16 %v971, %v969
  %v1078 = vpack.c.b16 %v974, %v972
  %v1079 = vpack.c.b16 %v975, %v973
  %v1080 = vpack.c.b16 %v978, %v976
  %v1081 = vpack.c.b16 %v979, %v977
  %v1082 = vpack.c.b16 %v982, %v980
  %v1083 = vpack.c.b16 %v983, %v981
  %v1084 = vpack.c.b16 %v986, %v984
  %v1085 = vpack.c.b16 %v987, %v985
  %v1086 = vpack.c.b16 %v990, %v988
  %v1087 = vpack.c.b16 %v991, %v989
  %v1088 = vpack.c.b16 %v994, %v992
  %v1089 = vpack.c.b16 %v995, %v993
  %v1090 = vpack.c.b16 %v998, %v996
  %v1091 = vpack.c.b16 %v999, %v997
  %v1092 = vpack.c.b16 %v1002, %v1000
  %v1093 = vpack.c.b16 %v1003, %v1001
  %v1094 = vpack.c.b16 %v1006, %v1004
  %v1095 = vpack.c.b16 %v1007, %v1005
  %v1096 = vpack.c.b16 %v1010, %v1008
  %v1097 = vpack.c.b16 %v1011, %v1009
  %v1098 = vpack.c.b16 %v1014, %v1012
  %v1099 = vpack.c.b16 %v1015, %v1013
  %v1100 = vpack.c.b16 %v1018, %v1016
  %v1101 = vpack.c.b16 %v1019, %v1017
  %v1102 = vpack.c.b16 %v1022, %v1020
  %v1103 = vpack.c.b16 %v1023, %v1021
  %v1104 = vpack.c.b16 %v1026, %v1024
  %v1105 = vpack.c.b16 %v1027, %v1025
  %v1106 = vpack.c.b16 %v1030, %v1028
  %v1107 = vpack.c.b16 %v1031, %v1029
  %v1108 = vpack.c.b16 %v1034, %v1032
  %v1109 = vpack.c.b16 %v1035, %v1033
  %v1110 = vpack.c.b16 %v1038, %v1036
  %v1111 = vpack.c.b16 %v1039, %v1037
  %v1112 = vpack.c.b16 %v1042, %v1040
  %v1113 = vpack.c.b16 %v1043, %v1041
  %v1114 = vpack.c.b16 %v1046, %v1044
  %v1115 = vpack.c.b16 %v1047, %v1045
  %v1116 = vpack.c.b16 %v1050, %v1048
  %v1117 = vpack.c.b16 %v1051, %v1049
  %v1118 = vpack.c.b16 %v1054, %v1052
  %v1119 = vpack.c.b16 %v1055, %v1053
  %1184 = vmatprep.subr.bf16.mxu0 %v1071
  %1185 = vmatpush1.bf16.msra.mxu0 %v1070
  %1186 = vmatprep.subr.bf16.mxu0 %v1069
  %1187 = vmatpush1.bf16.msra.mxu0 %v1068
  %1188 = vmatprep.subr.bf16.mxu0 %v1067
  %1189 = vmatpush1.bf16.msra.mxu0 %v1066
  %1190 = vmatprep.subr.bf16.mxu0 %v1065
  %1191 = vmatpush1.bf16.msra.mxu0 %v1064
  %1192 = vmatprep.subr.bf16.mxu0 %v1063
  %1193 = vmatpush1.bf16.msra.mxu0 %v1062
  %1194 = vmatprep.subr.bf16.mxu0 %v1061
  %1195 = vmatpush1.bf16.msra.mxu0 %v1060
  %1196 = vmatprep.subr.bf16.mxu0 %v1059
  %1197 = vmatpush1.bf16.msra.mxu0 %v1058
  %1198 = vmatprep.subr.bf16.mxu0 %v1057
  %1199 = vmatpush1.bf16.msra.mxu0 %v1056
  %1200 = vmatprep.subr.bf16.mxu0 %v1087
  %1201 = vmatpush2.bf16.msra.mxu0 %v1086
  %1202 = vmatprep.subr.bf16.mxu0 %v1085
  %1203 = vmatpush2.bf16.msra.mxu0 %v1084
  %1204 = vmatprep.subr.bf16.mxu0 %v1083
  %1205 = vmatpush2.bf16.msra.mxu0 %v1082
  %1206 = vmatprep.subr.bf16.mxu0 %v1081
  %1207 = vmatpush2.bf16.msra.mxu0 %v1080
  %1208 = vmatprep.subr.bf16.mxu0 %v1079
  %1209 = vmatpush2.bf16.msra.mxu0 %v1078
  %1210 = vmatprep.subr.bf16.mxu0 %v1077
  %1211 = vmatpush2.bf16.msra.mxu0 %v1076
  %1212 = vmatprep.subr.bf16.mxu0 %v1075
  %1213 = vmatpush2.bf16.msra.mxu0 %v1074
  %1214 = vmatprep.subr.bf16.mxu0 %v1073
  %1215 = vmatpush2.bf16.msra.mxu0 %v1072
  %1216 = vmatprep.mubr.bf16.mxu0 %v609
  %1217 = vmatmul.mubr.bf16.gmra.mxu0 %v608
  %v1218 = vpop.f32.mrf.mxu0
  %v1219 = vadd.f32 %v217, %v1218
  %v1220 = vpop.f32.mrf.mxu0
  %v1221 = vadd.f32 %v221, %v1220
  %v1222 = vpop.f32.mrf.mxu0
  %v1223 = vadd.f32 %v217, %v1222
  %v1224 = vpop.f32.mrf.mxu0
  %v1225 = vadd.f32 %v221, %v1224
  %1226 = vmatprep.mubr.bf16.mxu0 %v613
  %1227 = vmatmul.mubr.bf16.gmra.mxu0 %v612
  %v1228 = vpop.f32.mrf.mxu0
  %v1229 = vadd.f32 %v217, %v1228
  %v1230 = vpop.f32.mrf.mxu0
  %v1231 = vadd.f32 %v221, %v1230
  %v1232 = vpop.f32.mrf.mxu0
  %v1233 = vadd.f32 %v217, %v1232
  %v1234 = vpop.f32.mrf.mxu0
  %v1235 = vadd.f32 %v221, %v1234
  %1236 = vmatprep.mubr.bf16.mxu0 %v617
  %1237 = vmatmul.mubr.bf16.gmra.mxu0 %v616
  %v1238 = vpop.f32.mrf.mxu0
  %v1239 = vadd.f32 %v217, %v1238
  %v1240 = vpop.f32.mrf.mxu0
  %v1241 = vadd.f32 %v221, %v1240
  %v1242 = vpop.f32.mrf.mxu0
  %v1243 = vadd.f32 %v217, %v1242
  %v1244 = vpop.f32.mrf.mxu0
  %v1245 = vadd.f32 %v221, %v1244
  %1246 = vmatprep.mubr.bf16.mxu0 %v621
  %1247 = vmatmul.mubr.bf16.gmra.mxu0 %v620
  %v1248 = vpop.f32.mrf.mxu0
  %v1249 = vadd.f32 %v217, %v1248
  %v1250 = vpop.f32.mrf.mxu0
  %v1251 = vadd.f32 %v221, %v1250
  %v1252 = vpop.f32.mrf.mxu0
  %v1253 = vadd.f32 %v217, %v1252
  %v1254 = vpop.f32.mrf.mxu0
  %v1255 = vadd.f32 %v221, %v1254
  %1256 = vmatprep.mubr.bf16.mxu0 %v625
  %1257 = vmatmul.mubr.bf16.gmra.mxu0 %v624
  %v1258 = vpop.f32.mrf.mxu0
  %v1259 = vadd.f32 %v217, %v1258
  %v1260 = vpop.f32.mrf.mxu0
  %v1261 = vadd.f32 %v221, %v1260
  %v1262 = vpop.f32.mrf.mxu0
  %v1263 = vadd.f32 %v217, %v1262
  %v1264 = vpop.f32.mrf.mxu0
  %v1265 = vadd.f32 %v221, %v1264
  %1266 = vmatprep.mubr.bf16.mxu0 %v629
  %1267 = vmatmul.mubr.bf16.gmra.mxu0 %v628
  %v1268 = vpop.f32.mrf.mxu0
  %v1269 = vadd.f32 %v217, %v1268
  %v1270 = vpop.f32.mrf.mxu0
  %v1271 = vadd.f32 %v221, %v1270
  %v1272 = vpop.f32.mrf.mxu0
  %v1273 = vadd.f32 %v217, %v1272
  %v1274 = vpop.f32.mrf.mxu0
  %v1275 = vadd.f32 %v221, %v1274
  %1276 = vmatprep.mubr.bf16.mxu0 %v633
  %1277 = vmatmul.mubr.bf16.gmra.mxu0 %v632
  %v1278 = vpop.f32.mrf.mxu0
  %v1279 = vadd.f32 %v217, %v1278
  %v1280 = vpop.f32.mrf.mxu0
  %v1281 = vadd.f32 %v221, %v1280
  %v1282 = vpop.f32.mrf.mxu0
  %v1283 = vadd.f32 %v217, %v1282
  %v1284 = vpop.f32.mrf.mxu0
  %v1285 = vadd.f32 %v221, %v1284
  %1286 = vmatprep.mubr.bf16.mxu0 %v637
  %1287 = vmatmul.mubr.bf16.gmra.mxu0 %v636
  %v1288 = vpop.f32.mrf.mxu0
  %v1289 = vadd.f32 %v217, %v1288
  %v1290 = vpop.f32.mrf.mxu0
  %v1291 = vadd.f32 %v221, %v1290
  %v1292 = vpop.f32.mrf.mxu0
  %v1293 = vadd.f32 %v217, %v1292
  %v1294 = vpop.f32.mrf.mxu0
  %v1295 = vadd.f32 %v221, %v1294
  %1296 = vmatprep.mubr.bf16.mxu0 %v641
  %1297 = vmatmul.mubr.bf16.gmra.mxu0 %v640
  %v1298 = vpop.f32.mrf.mxu0
  %v1299 = vadd.f32 %v217, %v1298
  %v1300 = vpop.f32.mrf.mxu0
  %v1301 = vadd.f32 %v221, %v1300
  %v1302 = vpop.f32.mrf.mxu0
  %v1303 = vadd.f32 %v217, %v1302
  %v1304 = vpop.f32.mrf.mxu0
  %v1305 = vadd.f32 %v221, %v1304
  %1306 = vmatprep.mubr.bf16.mxu0 %v645
  %1307 = vmatmul.mubr.bf16.gmra.mxu0 %v644
  %v1308 = vpop.f32.mrf.mxu0
  %v1309 = vadd.f32 %v217, %v1308
  %v1310 = vpop.f32.mrf.mxu0
  %v1311 = vadd.f32 %v221, %v1310
  %v1312 = vpop.f32.mrf.mxu0
  %v1313 = vadd.f32 %v217, %v1312
  %v1314 = vpop.f32.mrf.mxu0
  %v1315 = vadd.f32 %v221, %v1314
  %1316 = vmatprep.mubr.bf16.mxu0 %v649
  %1317 = vmatmul.mubr.bf16.gmra.mxu0 %v648
  %v1318 = vpop.f32.mrf.mxu0
  %v1319 = vadd.f32 %v217, %v1318
  %v1320 = vpop.f32.mrf.mxu0
  %v1321 = vadd.f32 %v221, %v1320
  %v1322 = vpop.f32.mrf.mxu0
  %v1323 = vadd.f32 %v217, %v1322
  %v1324 = vpop.f32.mrf.mxu0
  %v1325 = vadd.f32 %v221, %v1324
  %1326 = vmatprep.mubr.bf16.mxu0 %v653
  %1327 = vmatmul.mubr.bf16.gmra.mxu0 %v652
  %v1328 = vpop.f32.mrf.mxu0
  %v1329 = vadd.f32 %v217, %v1328
  %v1330 = vpop.f32.mrf.mxu0
  %v1331 = vadd.f32 %v221, %v1330
  %v1332 = vpop.f32.mrf.mxu0
  %v1333 = vadd.f32 %v217, %v1332
  %v1334 = vpop.f32.mrf.mxu0
  %v1335 = vadd.f32 %v221, %v1334
  %1336 = vmatprep.mubr.bf16.mxu0 %v657
  %1337 = vmatmul.mubr.bf16.gmra.mxu0 %v656
  %v1338 = vpop.f32.mrf.mxu0
  %v1339 = vadd.f32 %v217, %v1338
  %v1340 = vpop.f32.mrf.mxu0
  %v1341 = vadd.f32 %v221, %v1340
  %v1342 = vpop.f32.mrf.mxu0
  %v1343 = vadd.f32 %v217, %v1342
  %v1344 = vpop.f32.mrf.mxu0
  %v1345 = vadd.f32 %v221, %v1344
  %1346 = vmatprep.mubr.bf16.mxu0 %v661
  %1347 = vmatmul.mubr.bf16.gmra.mxu0 %v660
  %v1348 = vpop.f32.mrf.mxu0
  %v1349 = vadd.f32 %v217, %v1348
  %v1350 = vpop.f32.mrf.mxu0
  %v1351 = vadd.f32 %v221, %v1350
  %v1352 = vpop.f32.mrf.mxu0
  %v1353 = vadd.f32 %v217, %v1352
  %v1354 = vpop.f32.mrf.mxu0
  %v1355 = vadd.f32 %v221, %v1354
  %1356 = vmatprep.mubr.bf16.mxu0 %v665
  %1357 = vmatmul.mubr.bf16.gmra.mxu0 %v664
  %v1358 = vpop.f32.mrf.mxu0
  %v1359 = vadd.f32 %v217, %v1358
  %v1360 = vpop.f32.mrf.mxu0
  %v1361 = vadd.f32 %v221, %v1360
  %v1362 = vpop.f32.mrf.mxu0
  %v1363 = vadd.f32 %v217, %v1362
  %v1364 = vpop.f32.mrf.mxu0
  %v1365 = vadd.f32 %v221, %v1364
  %1366 = vmatprep.mubr.bf16.mxu0 %v669
  %1367 = vmatmul.mubr.bf16.gmra.mxu0 %v668
  %v1368 = vpop.f32.mrf.mxu0
  %v1369 = vadd.f32 %v217, %v1368
  %v1370 = vpop.f32.mrf.mxu0
  %v1371 = vadd.f32 %v221, %v1370
  %v1372 = vpop.f32.mrf.mxu0
  %v1373 = vadd.f32 %v217, %v1372
  %v1374 = vpop.f32.mrf.mxu0
  %v1375 = vadd.f32 %v221, %v1374
  %1376 = vmatprep.mubr.bf16.mxu0 %v673
  %1377 = vmatmul.mubr.bf16.gmra.mxu0 %v672
  %v1378 = vpop.f32.mrf.mxu0
  %v1379 = vadd.f32 %v217, %v1378
  %v1380 = vpop.f32.mrf.mxu0
  %v1381 = vadd.f32 %v221, %v1380
  %v1382 = vpop.f32.mrf.mxu0
  %v1383 = vadd.f32 %v217, %v1382
  %v1384 = vpop.f32.mrf.mxu0
  %v1385 = vadd.f32 %v221, %v1384
  %1386 = vmatprep.mubr.bf16.mxu0 %v677
  %1387 = vmatmul.mubr.bf16.gmra.mxu0 %v676
  %v1388 = vpop.f32.mrf.mxu0
  %v1389 = vadd.f32 %v217, %v1388
  %v1390 = vpop.f32.mrf.mxu0
  %v1391 = vadd.f32 %v221, %v1390
  %v1392 = vpop.f32.mrf.mxu0
  %v1393 = vadd.f32 %v217, %v1392
  %v1394 = vpop.f32.mrf.mxu0
  %v1395 = vadd.f32 %v221, %v1394
  %1396 = vmatprep.mubr.bf16.mxu0 %v681
  %1397 = vmatmul.mubr.bf16.gmra.mxu0 %v680
  %v1398 = vpop.f32.mrf.mxu0
  %v1399 = vadd.f32 %v217, %v1398
  %v1400 = vpop.f32.mrf.mxu0
  %v1401 = vadd.f32 %v221, %v1400
  %v1402 = vpop.f32.mrf.mxu0
  %v1403 = vadd.f32 %v217, %v1402
  %v1404 = vpop.f32.mrf.mxu0
  %v1405 = vadd.f32 %v221, %v1404
  %1406 = vmatprep.mubr.bf16.mxu0 %v685
  %1407 = vmatmul.mubr.bf16.gmra.mxu0 %v684
  %v1408 = vpop.f32.mrf.mxu0
  %v1409 = vadd.f32 %v217, %v1408
  %v1410 = vpop.f32.mrf.mxu0
  %v1411 = vadd.f32 %v221, %v1410
  %v1412 = vpop.f32.mrf.mxu0
  %v1413 = vadd.f32 %v217, %v1412
  %v1414 = vpop.f32.mrf.mxu0
  %v1415 = vadd.f32 %v221, %v1414
  %1416 = vmatprep.mubr.bf16.mxu0 %v689
  %1417 = vmatmul.mubr.bf16.gmra.mxu0 %v688
  %v1418 = vpop.f32.mrf.mxu0
  %v1419 = vadd.f32 %v217, %v1418
  %v1420 = vpop.f32.mrf.mxu0
  %v1421 = vadd.f32 %v221, %v1420
  %v1422 = vpop.f32.mrf.mxu0
  %v1423 = vadd.f32 %v217, %v1422
  %v1424 = vpop.f32.mrf.mxu0
  %v1425 = vadd.f32 %v221, %v1424
  %1426 = vmatprep.mubr.bf16.mxu0 %v693
  %1427 = vmatmul.mubr.bf16.gmra.mxu0 %v692
  %v1428 = vpop.f32.mrf.mxu0
  %v1429 = vadd.f32 %v217, %v1428
  %v1430 = vpop.f32.mrf.mxu0
  %v1431 = vadd.f32 %v221, %v1430
  %v1432 = vpop.f32.mrf.mxu0
  %v1433 = vadd.f32 %v217, %v1432
  %v1434 = vpop.f32.mrf.mxu0
  %v1435 = vadd.f32 %v221, %v1434
  %1436 = vmatprep.mubr.bf16.mxu0 %v697
  %1437 = vmatmul.mubr.bf16.gmra.mxu0 %v696
  %v1438 = vpop.f32.mrf.mxu0
  %v1439 = vadd.f32 %v217, %v1438
  %v1440 = vpop.f32.mrf.mxu0
  %v1441 = vadd.f32 %v221, %v1440
  %v1442 = vpop.f32.mrf.mxu0
  %v1443 = vadd.f32 %v217, %v1442
  %v1444 = vpop.f32.mrf.mxu0
  %v1445 = vadd.f32 %v221, %v1444
  %1446 = vmatprep.mubr.bf16.mxu0 %v701
  %1447 = vmatmul.mubr.bf16.gmra.mxu0 %v700
  %v1448 = vpop.f32.mrf.mxu0
  %v1449 = vadd.f32 %v217, %v1448
  %v1450 = vpop.f32.mrf.mxu0
  %v1451 = vadd.f32 %v221, %v1450
  %v1452 = vpop.f32.mrf.mxu0
  %v1453 = vadd.f32 %v217, %v1452
  %v1454 = vpop.f32.mrf.mxu0
  %v1455 = vadd.f32 %v221, %v1454
  %1456 = vmatprep.mubr.bf16.mxu0 %v705
  %1457 = vmatmul.mubr.bf16.gmra.mxu0 %v704
  %v1458 = vpop.f32.mrf.mxu0
  %v1459 = vadd.f32 %v217, %v1458
  %v1460 = vpop.f32.mrf.mxu0
  %v1461 = vadd.f32 %v221, %v1460
  %v1462 = vpop.f32.mrf.mxu0
  %v1463 = vadd.f32 %v217, %v1462
  %v1464 = vpop.f32.mrf.mxu0
  %v1465 = vadd.f32 %v221, %v1464
  %1466 = vmatprep.mubr.bf16.mxu0 %v709
  %1467 = vmatmul.mubr.bf16.gmra.mxu0 %v708
  %v1468 = vpop.f32.mrf.mxu0
  %v1469 = vadd.f32 %v217, %v1468
  %v1470 = vpop.f32.mrf.mxu0
  %v1471 = vadd.f32 %v221, %v1470
  %v1472 = vpop.f32.mrf.mxu0
  %v1473 = vadd.f32 %v217, %v1472
  %v1474 = vpop.f32.mrf.mxu0
  %v1475 = vadd.f32 %v221, %v1474
  %1476 = vmatprep.mubr.bf16.mxu0 %v713
  %1477 = vmatmul.mubr.bf16.gmra.mxu0 %v712
  %v1478 = vpop.f32.mrf.mxu0
  %v1479 = vadd.f32 %v217, %v1478
  %v1480 = vpop.f32.mrf.mxu0
  %v1481 = vadd.f32 %v221, %v1480
  %v1482 = vpop.f32.mrf.mxu0
  %v1483 = vadd.f32 %v217, %v1482
  %v1484 = vpop.f32.mrf.mxu0
  %v1485 = vadd.f32 %v221, %v1484
  %1486 = vmatprep.mubr.bf16.mxu0 %v717
  %1487 = vmatmul.mubr.bf16.gmra.mxu0 %v716
  %v1488 = vpop.f32.mrf.mxu0
  %v1489 = vadd.f32 %v217, %v1488
  %v1490 = vpop.f32.mrf.mxu0
  %v1491 = vadd.f32 %v221, %v1490
  %v1492 = vpop.f32.mrf.mxu0
  %v1493 = vadd.f32 %v217, %v1492
  %v1494 = vpop.f32.mrf.mxu0
  %v1495 = vadd.f32 %v221, %v1494
  %1496 = vmatprep.mubr.bf16.mxu0 %v721
  %1497 = vmatmul.mubr.bf16.gmra.mxu0 %v720
  %v1498 = vpop.f32.mrf.mxu0
  %v1499 = vadd.f32 %v217, %v1498
  %v1500 = vpop.f32.mrf.mxu0
  %v1501 = vadd.f32 %v221, %v1500
  %v1502 = vpop.f32.mrf.mxu0
  %v1503 = vadd.f32 %v217, %v1502
  %v1504 = vpop.f32.mrf.mxu0
  %v1505 = vadd.f32 %v221, %v1504
  %1506 = vmatprep.mubr.bf16.mxu0 %v725
  %1507 = vmatmul.mubr.bf16.gmra.mxu0 %v724
  %v1508 = vpop.f32.mrf.mxu0
  %v1509 = vadd.f32 %v217, %v1508
  %v1510 = vpop.f32.mrf.mxu0
  %v1511 = vadd.f32 %v221, %v1510
  %v1512 = vpop.f32.mrf.mxu0
  %v1513 = vadd.f32 %v217, %v1512
  %v1514 = vpop.f32.mrf.mxu0
  %v1515 = vadd.f32 %v221, %v1514
  %1516 = vmatprep.mubr.bf16.mxu0 %v729
  %1517 = vmatmul.mubr.bf16.gmra.mxu0 %v728
  %v1518 = vpop.f32.mrf.mxu0
  %v1519 = vadd.f32 %v217, %v1518
  %v1520 = vpop.f32.mrf.mxu0
  %v1521 = vadd.f32 %v221, %v1520
  %v1522 = vpop.f32.mrf.mxu0
  %v1523 = vadd.f32 %v217, %v1522
  %v1524 = vpop.f32.mrf.mxu0
  %v1525 = vadd.f32 %v221, %v1524
  %1526 = vmatprep.mubr.bf16.mxu0 %v733
  %1527 = vmatmul.mubr.bf16.gmra.mxu0 %v732
  %v1528 = vpop.f32.mrf.mxu0
  %v1529 = vadd.f32 %v217, %v1528
  %v1530 = vpop.f32.mrf.mxu0
  %v1531 = vadd.f32 %v221, %v1530
  %v1532 = vpop.f32.mrf.mxu0
  %v1533 = vadd.f32 %v217, %v1532
  %v1534 = vpop.f32.mrf.mxu0
  %v1535 = vadd.f32 %v221, %v1534
  %1536 = vdwg.mxu0
  %1537 = vmatprep.subr.bf16.mxu0 %v1103
  %1538 = vmatpush1.bf16.msra.mxu0 %v1102
  %1539 = vmatprep.subr.bf16.mxu0 %v1101
  %1540 = vmatpush1.bf16.msra.mxu0 %v1100
  %1541 = vmatprep.subr.bf16.mxu0 %v1099
  %1542 = vmatpush1.bf16.msra.mxu0 %v1098
  %1543 = vmatprep.subr.bf16.mxu0 %v1097
  %1544 = vmatpush1.bf16.msra.mxu0 %v1096
  %1545 = vmatprep.subr.bf16.mxu0 %v1095
  %1546 = vmatpush1.bf16.msra.mxu0 %v1094
  %1547 = vmatprep.subr.bf16.mxu0 %v1093
  %1548 = vmatpush1.bf16.msra.mxu0 %v1092
  %1549 = vmatprep.subr.bf16.mxu0 %v1091
  %1550 = vmatpush1.bf16.msra.mxu0 %v1090
  %1551 = vmatprep.subr.bf16.mxu0 %v1089
  %1552 = vmatpush1.bf16.msra.mxu0 %v1088
  %1553 = vmatprep.subr.bf16.mxu0 %v1119
  %1554 = vmatpush2.bf16.msra.mxu0 %v1118
  %1555 = vmatprep.subr.bf16.mxu0 %v1117
  %1556 = vmatpush2.bf16.msra.mxu0 %v1116
  %1557 = vmatprep.subr.bf16.mxu0 %v1115
  %1558 = vmatpush2.bf16.msra.mxu0 %v1114
  %1559 = vmatprep.subr.bf16.mxu0 %v1113
  %1560 = vmatpush2.bf16.msra.mxu0 %v1112
  %1561 = vmatprep.subr.bf16.mxu0 %v1111
  %1562 = vmatpush2.bf16.msra.mxu0 %v1110
  %1563 = vmatprep.subr.bf16.mxu0 %v1109
  %1564 = vmatpush2.bf16.msra.mxu0 %v1108
  %1565 = vmatprep.subr.bf16.mxu0 %v1107
  %1566 = vmatpush2.bf16.msra.mxu0 %v1106
  %1567 = vmatprep.subr.bf16.mxu0 %v1105
  %1568 = vmatpush2.bf16.msra.mxu0 %v1104
  %1569 = vmatprep.mubr.bf16.mxu0 %v611
  %1570 = vmatmul.mubr.bf16.gmra.mxu0 %v610
  %v1571 = vpop.f32.mrf.mxu0
  %v1572 = vadd.f32 %v1219, %v1571
  %v1573 = vpop.f32.mrf.mxu0
  %v1574 = vadd.f32 %v1221, %v1573
  %v1575 = vpop.f32.mrf.mxu0
  %v1576 = vadd.f32 %v1223, %v1575
  %v1577 = vpop.f32.mrf.mxu0
  %v1578 = vadd.f32 %v1225, %v1577
  %1579 = vmatprep.mubr.bf16.mxu0 %v615
  %1580 = vmatmul.mubr.bf16.gmra.mxu0 %v614
  %v1581 = vpop.f32.mrf.mxu0
  %v1582 = vadd.f32 %v1229, %v1581
  %v1583 = vpop.f32.mrf.mxu0
  %v1584 = vadd.f32 %v1231, %v1583
  %v1585 = vpop.f32.mrf.mxu0
  %v1586 = vadd.f32 %v1233, %v1585
  %v1587 = vpop.f32.mrf.mxu0
  %v1588 = vadd.f32 %v1235, %v1587
  %1589 = vmatprep.mubr.bf16.mxu0 %v619
  %1590 = vmatmul.mubr.bf16.gmra.mxu0 %v618
  %v1591 = vpop.f32.mrf.mxu0
  %v1592 = vadd.f32 %v1239, %v1591
  %v1593 = vpop.f32.mrf.mxu0
  %v1594 = vadd.f32 %v1241, %v1593
  %v1595 = vpop.f32.mrf.mxu0
  %v1596 = vadd.f32 %v1243, %v1595
  %v1597 = vpop.f32.mrf.mxu0
  %v1598 = vadd.f32 %v1245, %v1597
  %1599 = vmatprep.mubr.bf16.mxu0 %v623
  %1600 = vmatmul.mubr.bf16.gmra.mxu0 %v622
  %v1601 = vpop.f32.mrf.mxu0
  %v1602 = vadd.f32 %v1249, %v1601
  %v1603 = vpop.f32.mrf.mxu0
  %v1604 = vadd.f32 %v1251, %v1603
  %v1605 = vpop.f32.mrf.mxu0
  %v1606 = vadd.f32 %v1253, %v1605
  %v1607 = vpop.f32.mrf.mxu0
  %v1608 = vadd.f32 %v1255, %v1607
  %1609 = vmatprep.mubr.bf16.mxu0 %v627
  %1610 = vmatmul.mubr.bf16.gmra.mxu0 %v626
  %v1611 = vpop.f32.mrf.mxu0
  %v1612 = vadd.f32 %v1259, %v1611
  %v1613 = vpop.f32.mrf.mxu0
  %v1614 = vadd.f32 %v1261, %v1613
  %v1615 = vpop.f32.mrf.mxu0
  %v1616 = vadd.f32 %v1263, %v1615
  %v1617 = vpop.f32.mrf.mxu0
  %v1618 = vadd.f32 %v1265, %v1617
  %1619 = vmatprep.mubr.bf16.mxu0 %v631
  %1620 = vmatmul.mubr.bf16.gmra.mxu0 %v630
  %v1621 = vpop.f32.mrf.mxu0
  %v1622 = vadd.f32 %v1269, %v1621
  %v1623 = vpop.f32.mrf.mxu0
  %v1624 = vadd.f32 %v1271, %v1623
  %v1625 = vpop.f32.mrf.mxu0
  %v1626 = vadd.f32 %v1273, %v1625
  %v1627 = vpop.f32.mrf.mxu0
  %v1628 = vadd.f32 %v1275, %v1627
  %1629 = vmatprep.mubr.bf16.mxu0 %v635
  %1630 = vmatmul.mubr.bf16.gmra.mxu0 %v634
  %v1631 = vpop.f32.mrf.mxu0
  %v1632 = vadd.f32 %v1279, %v1631
  %v1633 = vpop.f32.mrf.mxu0
  %v1634 = vadd.f32 %v1281, %v1633
  %v1635 = vpop.f32.mrf.mxu0
  %v1636 = vadd.f32 %v1283, %v1635
  %v1637 = vpop.f32.mrf.mxu0
  %v1638 = vadd.f32 %v1285, %v1637
  %1639 = vmatprep.mubr.bf16.mxu0 %v639
  %1640 = vmatmul.mubr.bf16.gmra.mxu0 %v638
  %v1641 = vpop.f32.mrf.mxu0
  %v1642 = vadd.f32 %v1289, %v1641
  %v1643 = vpop.f32.mrf.mxu0
  %v1644 = vadd.f32 %v1291, %v1643
  %v1645 = vpop.f32.mrf.mxu0
  %v1646 = vadd.f32 %v1293, %v1645
  %v1647 = vpop.f32.mrf.mxu0
  %v1648 = vadd.f32 %v1295, %v1647
  %1649 = vmatprep.mubr.bf16.mxu0 %v643
  %1650 = vmatmul.mubr.bf16.gmra.mxu0 %v642
  %v1651 = vpop.f32.mrf.mxu0
  %v1652 = vadd.f32 %v1299, %v1651
  %v1653 = vpop.f32.mrf.mxu0
  %v1654 = vadd.f32 %v1301, %v1653
  %v1655 = vpop.f32.mrf.mxu0
  %v1656 = vadd.f32 %v1303, %v1655
  %v1657 = vpop.f32.mrf.mxu0
  %v1658 = vadd.f32 %v1305, %v1657
  %1659 = vmatprep.mubr.bf16.mxu0 %v647
  %1660 = vmatmul.mubr.bf16.gmra.mxu0 %v646
  %v1661 = vpop.f32.mrf.mxu0
  %v1662 = vadd.f32 %v1309, %v1661
  %v1663 = vpop.f32.mrf.mxu0
  %v1664 = vadd.f32 %v1311, %v1663
  %v1665 = vpop.f32.mrf.mxu0
  %v1666 = vadd.f32 %v1313, %v1665
  %v1667 = vpop.f32.mrf.mxu0
  %v1668 = vadd.f32 %v1315, %v1667
  %1669 = vmatprep.mubr.bf16.mxu0 %v651
  %1670 = vmatmul.mubr.bf16.gmra.mxu0 %v650
  %v1671 = vpop.f32.mrf.mxu0
  %v1672 = vadd.f32 %v1319, %v1671
  %v1673 = vpop.f32.mrf.mxu0
  %v1674 = vadd.f32 %v1321, %v1673
  %v1675 = vpop.f32.mrf.mxu0
  %v1676 = vadd.f32 %v1323, %v1675
  %v1677 = vpop.f32.mrf.mxu0
  %v1678 = vadd.f32 %v1325, %v1677
  %1679 = vmatprep.mubr.bf16.mxu0 %v655
  %1680 = vmatmul.mubr.bf16.gmra.mxu0 %v654
  %v1681 = vpop.f32.mrf.mxu0
  %v1682 = vadd.f32 %v1329, %v1681
  %v1683 = vpop.f32.mrf.mxu0
  %v1684 = vadd.f32 %v1331, %v1683
  %v1685 = vpop.f32.mrf.mxu0
  %v1686 = vadd.f32 %v1333, %v1685
  %v1687 = vpop.f32.mrf.mxu0
  %v1688 = vadd.f32 %v1335, %v1687
  %1689 = vmatprep.mubr.bf16.mxu0 %v659
  %1690 = vmatmul.mubr.bf16.gmra.mxu0 %v658
  %v1691 = vpop.f32.mrf.mxu0
  %v1692 = vadd.f32 %v1339, %v1691
  %v1693 = vpop.f32.mrf.mxu0
  %v1694 = vadd.f32 %v1341, %v1693
  %v1695 = vpop.f32.mrf.mxu0
  %v1696 = vadd.f32 %v1343, %v1695
  %v1697 = vpop.f32.mrf.mxu0
  %v1698 = vadd.f32 %v1345, %v1697
  %1699 = vmatprep.mubr.bf16.mxu0 %v663
  %1700 = vmatmul.mubr.bf16.gmra.mxu0 %v662
  %v1701 = vpop.f32.mrf.mxu0
  %v1702 = vadd.f32 %v1349, %v1701
  %v1703 = vpop.f32.mrf.mxu0
  %v1704 = vadd.f32 %v1351, %v1703
  %v1705 = vpop.f32.mrf.mxu0
  %v1706 = vadd.f32 %v1353, %v1705
  %v1707 = vpop.f32.mrf.mxu0
  %v1708 = vadd.f32 %v1355, %v1707
  %1709 = vmatprep.mubr.bf16.mxu0 %v667
  %1710 = vmatmul.mubr.bf16.gmra.mxu0 %v666
  %v1711 = vpop.f32.mrf.mxu0
  %v1712 = vadd.f32 %v1359, %v1711
  %v1713 = vpop.f32.mrf.mxu0
  %v1714 = vadd.f32 %v1361, %v1713
  %v1715 = vpop.f32.mrf.mxu0
  %v1716 = vadd.f32 %v1363, %v1715
  %v1717 = vpop.f32.mrf.mxu0
  %v1718 = vadd.f32 %v1365, %v1717
  %1719 = vmatprep.mubr.bf16.mxu0 %v671
  %1720 = vmatmul.mubr.bf16.gmra.mxu0 %v670
  %v1721 = vpop.f32.mrf.mxu0
  %v1722 = vadd.f32 %v1369, %v1721
  %v1723 = vpop.f32.mrf.mxu0
  %v1724 = vadd.f32 %v1371, %v1723
  %v1725 = vpop.f32.mrf.mxu0
  %v1726 = vadd.f32 %v1373, %v1725
  %v1727 = vpop.f32.mrf.mxu0
  %v1728 = vadd.f32 %v1375, %v1727
  %1729 = vmatprep.mubr.bf16.mxu0 %v675
  %1730 = vmatmul.mubr.bf16.gmra.mxu0 %v674
  %v1731 = vpop.f32.mrf.mxu0
  %v1732 = vadd.f32 %v1379, %v1731
  %v1733 = vpop.f32.mrf.mxu0
  %v1734 = vadd.f32 %v1381, %v1733
  %v1735 = vpop.f32.mrf.mxu0
  %v1736 = vadd.f32 %v1383, %v1735
  %v1737 = vpop.f32.mrf.mxu0
  %v1738 = vadd.f32 %v1385, %v1737
  %1739 = vmatprep.mubr.bf16.mxu0 %v679
  %1740 = vmatmul.mubr.bf16.gmra.mxu0 %v678
  %v1741 = vpop.f32.mrf.mxu0
  %v1742 = vadd.f32 %v1389, %v1741
  %v1743 = vpop.f32.mrf.mxu0
  %v1744 = vadd.f32 %v1391, %v1743
  %v1745 = vpop.f32.mrf.mxu0
  %v1746 = vadd.f32 %v1393, %v1745
  %v1747 = vpop.f32.mrf.mxu0
  %v1748 = vadd.f32 %v1395, %v1747
  %1749 = vmatprep.mubr.bf16.mxu0 %v683
  %1750 = vmatmul.mubr.bf16.gmra.mxu0 %v682
  %v1751 = vpop.f32.mrf.mxu0
  %v1752 = vadd.f32 %v1399, %v1751
  %v1753 = vpop.f32.mrf.mxu0
  %v1754 = vadd.f32 %v1401, %v1753
  %v1755 = vpop.f32.mrf.mxu0
  %v1756 = vadd.f32 %v1403, %v1755
  %v1757 = vpop.f32.mrf.mxu0
  %v1758 = vadd.f32 %v1405, %v1757
  %1759 = vmatprep.mubr.bf16.mxu0 %v687
  %1760 = vmatmul.mubr.bf16.gmra.mxu0 %v686
  %v1761 = vpop.f32.mrf.mxu0
  %v1762 = vadd.f32 %v1409, %v1761
  %v1763 = vpop.f32.mrf.mxu0
  %v1764 = vadd.f32 %v1411, %v1763
  %v1765 = vpop.f32.mrf.mxu0
  %v1766 = vadd.f32 %v1413, %v1765
  %v1767 = vpop.f32.mrf.mxu0
  %v1768 = vadd.f32 %v1415, %v1767
  %1769 = vmatprep.mubr.bf16.mxu0 %v691
  %1770 = vmatmul.mubr.bf16.gmra.mxu0 %v690
  %v1771 = vpop.f32.mrf.mxu0
  %v1772 = vadd.f32 %v1419, %v1771
  %v1773 = vpop.f32.mrf.mxu0
  %v1774 = vadd.f32 %v1421, %v1773
  %v1775 = vpop.f32.mrf.mxu0
  %v1776 = vadd.f32 %v1423, %v1775
  %v1777 = vpop.f32.mrf.mxu0
  %v1778 = vadd.f32 %v1425, %v1777
  %1779 = vmatprep.mubr.bf16.mxu0 %v695
  %1780 = vmatmul.mubr.bf16.gmra.mxu0 %v694
  %v1781 = vpop.f32.mrf.mxu0
  %v1782 = vadd.f32 %v1429, %v1781
  %v1783 = vpop.f32.mrf.mxu0
  %v1784 = vadd.f32 %v1431, %v1783
  %v1785 = vpop.f32.mrf.mxu0
  %v1786 = vadd.f32 %v1433, %v1785
  %v1787 = vpop.f32.mrf.mxu0
  %v1788 = vadd.f32 %v1435, %v1787
  %1789 = vmatprep.mubr.bf16.mxu0 %v699
  %1790 = vmatmul.mubr.bf16.gmra.mxu0 %v698
  %v1791 = vpop.f32.mrf.mxu0
  %v1792 = vadd.f32 %v1439, %v1791
  %v1793 = vpop.f32.mrf.mxu0
  %v1794 = vadd.f32 %v1441, %v1793
  %v1795 = vpop.f32.mrf.mxu0
  %v1796 = vadd.f32 %v1443, %v1795
  %v1797 = vpop.f32.mrf.mxu0
  %v1798 = vadd.f32 %v1445, %v1797
  %1799 = vmatprep.mubr.bf16.mxu0 %v703
  %1800 = vmatmul.mubr.bf16.gmra.mxu0 %v702
  %v1801 = vpop.f32.mrf.mxu0
  %v1802 = vadd.f32 %v1449, %v1801
  %v1803 = vpop.f32.mrf.mxu0
  %v1804 = vadd.f32 %v1451, %v1803
  %v1805 = vpop.f32.mrf.mxu0
  %v1806 = vadd.f32 %v1453, %v1805
  %v1807 = vpop.f32.mrf.mxu0
  %v1808 = vadd.f32 %v1455, %v1807
  %1809 = vmatprep.mubr.bf16.mxu0 %v707
  %1810 = vmatmul.mubr.bf16.gmra.mxu0 %v706
  %v1811 = vpop.f32.mrf.mxu0
  %v1812 = vadd.f32 %v1459, %v1811
  %v1813 = vpop.f32.mrf.mxu0
  %v1814 = vadd.f32 %v1461, %v1813
  %v1815 = vpop.f32.mrf.mxu0
  %v1816 = vadd.f32 %v1463, %v1815
  %v1817 = vpop.f32.mrf.mxu0
  %v1818 = vadd.f32 %v1465, %v1817
  %1819 = vmatprep.mubr.bf16.mxu0 %v711
  %1820 = vmatmul.mubr.bf16.gmra.mxu0 %v710
  %v1821 = vpop.f32.mrf.mxu0
  %v1822 = vadd.f32 %v1469, %v1821
  %v1823 = vpop.f32.mrf.mxu0
  %v1824 = vadd.f32 %v1471, %v1823
  %v1825 = vpop.f32.mrf.mxu0
  %v1826 = vadd.f32 %v1473, %v1825
  %v1827 = vpop.f32.mrf.mxu0
  %v1828 = vadd.f32 %v1475, %v1827
  %1829 = vmatprep.mubr.bf16.mxu0 %v715
  %1830 = vmatmul.mubr.bf16.gmra.mxu0 %v714
  %v1831 = vpop.f32.mrf.mxu0
  %v1832 = vadd.f32 %v1479, %v1831
  %v1833 = vpop.f32.mrf.mxu0
  %v1834 = vadd.f32 %v1481, %v1833
  %v1835 = vpop.f32.mrf.mxu0
  %v1836 = vadd.f32 %v1483, %v1835
  %v1837 = vpop.f32.mrf.mxu0
  %v1838 = vadd.f32 %v1485, %v1837
  %1839 = vmatprep.mubr.bf16.mxu0 %v719
  %1840 = vmatmul.mubr.bf16.gmra.mxu0 %v718
  %v1841 = vpop.f32.mrf.mxu0
  %v1842 = vadd.f32 %v1489, %v1841
  %v1843 = vpop.f32.mrf.mxu0
  %v1844 = vadd.f32 %v1491, %v1843
  %v1845 = vpop.f32.mrf.mxu0
  %v1846 = vadd.f32 %v1493, %v1845
  %v1847 = vpop.f32.mrf.mxu0
  %v1848 = vadd.f32 %v1495, %v1847
  %1849 = vmatprep.mubr.bf16.mxu0 %v723
  %1850 = vmatmul.mubr.bf16.gmra.mxu0 %v722
  %v1851 = vpop.f32.mrf.mxu0
  %v1852 = vadd.f32 %v1499, %v1851
  %v1853 = vpop.f32.mrf.mxu0
  %v1854 = vadd.f32 %v1501, %v1853
  %v1855 = vpop.f32.mrf.mxu0
  %v1856 = vadd.f32 %v1503, %v1855
  %v1857 = vpop.f32.mrf.mxu0
  %v1858 = vadd.f32 %v1505, %v1857
  %1859 = vmatprep.mubr.bf16.mxu0 %v727
  %1860 = vmatmul.mubr.bf16.gmra.mxu0 %v726
  %v1861 = vpop.f32.mrf.mxu0
  %v1862 = vadd.f32 %v1509, %v1861
  %v1863 = vpop.f32.mrf.mxu0
  %v1864 = vadd.f32 %v1511, %v1863
  %v1865 = vpop.f32.mrf.mxu0
  %v1866 = vadd.f32 %v1513, %v1865
  %v1867 = vpop.f32.mrf.mxu0
  %v1868 = vadd.f32 %v1515, %v1867
  %1869 = vmatprep.mubr.bf16.mxu0 %v731
  %1870 = vmatmul.mubr.bf16.gmra.mxu0 %v730
  %v1871 = vpop.f32.mrf.mxu0
  %v1872 = vadd.f32 %v1519, %v1871
  %v1873 = vpop.f32.mrf.mxu0
  %v1874 = vadd.f32 %v1521, %v1873
  %v1875 = vpop.f32.mrf.mxu0
  %v1876 = vadd.f32 %v1523, %v1875
  %v1877 = vpop.f32.mrf.mxu0
  %v1878 = vadd.f32 %v1525, %v1877
  %1879 = vmatprep.mubr.bf16.mxu0 %v735
  %1880 = vmatmul.mubr.bf16.gmra.mxu0 %v734
  %v1881 = vpop.f32.mrf.mxu0
  %v1882 = vadd.f32 %v1529, %v1881
  %v1883 = vpop.f32.mrf.mxu0
  %v1884 = vadd.f32 %v1531, %v1883
  %v1885 = vpop.f32.mrf.mxu0
  %v1886 = vadd.f32 %v1533, %v1885
  %v1887 = vpop.f32.mrf.mxu0
  %v1888 = vadd.f32 %v1535, %v1887
  %1889 = vdwg.mxu0
  %v1890 = vpack.c.bf16 %v1576, %v1572
  %v1891 = vpack.c.bf16 %v1578, %v1574
  %v1892 = vpack.c.bf16 %v1586, %v1582
  %v1893 = vpack.c.bf16 %v1588, %v1584
  %v1894 = vpack.c.bf16 %v1596, %v1592
  %v1895 = vpack.c.bf16 %v1598, %v1594
  %v1896 = vpack.c.bf16 %v1606, %v1602
  %v1897 = vpack.c.bf16 %v1608, %v1604
  %v1898 = vpack.c.bf16 %v1616, %v1612
  %v1899 = vpack.c.bf16 %v1618, %v1614
  %v1900 = vpack.c.bf16 %v1626, %v1622
  %v1901 = vpack.c.bf16 %v1628, %v1624
  %v1902 = vpack.c.bf16 %v1636, %v1632
  %v1903 = vpack.c.bf16 %v1638, %v1634
  %v1904 = vpack.c.bf16 %v1646, %v1642
  %v1905 = vpack.c.bf16 %v1648, %v1644
  %v1906 = vpack.c.bf16 %v1656, %v1652
  %v1907 = vpack.c.bf16 %v1658, %v1654
  %v1908 = vpack.c.bf16 %v1666, %v1662
  %v1909 = vpack.c.bf16 %v1668, %v1664
  %v1910 = vpack.c.bf16 %v1676, %v1672
  %v1911 = vpack.c.bf16 %v1678, %v1674
  %v1912 = vpack.c.bf16 %v1686, %v1682
  %v1913 = vpack.c.bf16 %v1688, %v1684
  %v1914 = vpack.c.bf16 %v1696, %v1692
  %v1915 = vpack.c.bf16 %v1698, %v1694
  %v1916 = vpack.c.bf16 %v1706, %v1702
  %v1917 = vpack.c.bf16 %v1708, %v1704
  %v1918 = vpack.c.bf16 %v1716, %v1712
  %v1919 = vpack.c.bf16 %v1718, %v1714
  %v1920 = vpack.c.bf16 %v1726, %v1722
  %v1921 = vpack.c.bf16 %v1728, %v1724
  %v1922 = vpack.c.bf16 %v1736, %v1732
  %v1923 = vpack.c.bf16 %v1738, %v1734
  %v1924 = vpack.c.bf16 %v1746, %v1742
  %v1925 = vpack.c.bf16 %v1748, %v1744
  %v1926 = vpack.c.bf16 %v1756, %v1752
  %v1927 = vpack.c.bf16 %v1758, %v1754
  %v1928 = vpack.c.bf16 %v1766, %v1762
  %v1929 = vpack.c.bf16 %v1768, %v1764
  %v1930 = vpack.c.bf16 %v1776, %v1772
  %v1931 = vpack.c.bf16 %v1778, %v1774
  %v1932 = vpack.c.bf16 %v1786, %v1782
  %v1933 = vpack.c.bf16 %v1788, %v1784
  %v1934 = vpack.c.bf16 %v1796, %v1792
  %v1935 = vpack.c.bf16 %v1798, %v1794
  %v1936 = vpack.c.bf16 %v1806, %v1802
  %v1937 = vpack.c.bf16 %v1808, %v1804
  %v1938 = vpack.c.bf16 %v1816, %v1812
  %v1939 = vpack.c.bf16 %v1818, %v1814
  %v1940 = vpack.c.bf16 %v1826, %v1822
  %v1941 = vpack.c.bf16 %v1828, %v1824
  %v1942 = vpack.c.bf16 %v1836, %v1832
  %v1943 = vpack.c.bf16 %v1838, %v1834
  %v1944 = vpack.c.bf16 %v1846, %v1842
  %v1945 = vpack.c.bf16 %v1848, %v1844
  %v1946 = vpack.c.bf16 %v1856, %v1852
  %v1947 = vpack.c.bf16 %v1858, %v1854
  %v1948 = vpack.c.bf16 %v1866, %v1862
  %v1949 = vpack.c.bf16 %v1868, %v1864
  %v1950 = vpack.c.bf16 %v1876, %v1872
  %v1951 = vpack.c.bf16 %v1878, %v1874
  %v1952 = vpack.c.bf16 %v1886, %v1882
  %v1953 = vpack.c.bf16 %v1888, %v1884
  %1954 = vmatprep.subr.bf16.mxu0 %v1905
  %1955 = vmatpush1.bf16.msra.mxu0 %v1904
  %1956 = vmatprep.subr.bf16.mxu0 %v1903
  %1957 = vmatpush1.bf16.msra.mxu0 %v1902
  %1958 = vmatprep.subr.bf16.mxu0 %v1901
  %1959 = vmatpush1.bf16.msra.mxu0 %v1900
  %1960 = vmatprep.subr.bf16.mxu0 %v1899
  %1961 = vmatpush1.bf16.msra.mxu0 %v1898
  %1962 = vmatprep.subr.bf16.mxu0 %v1897
  %1963 = vmatpush1.bf16.msra.mxu0 %v1896
  %1964 = vmatprep.subr.bf16.mxu0 %v1895
  %1965 = vmatpush1.bf16.msra.mxu0 %v1894
  %1966 = vmatprep.subr.bf16.mxu0 %v1893
  %1967 = vmatpush1.bf16.msra.mxu0 %v1892
  %1968 = vmatprep.subr.bf16.mxu0 %v1891
  %1969 = vmatpush1.bf16.msra.mxu0 %v1890
  %1970 = vmatprep.subr.bf16.mxu0 %v1921
  %1971 = vmatpush2.bf16.msra.mxu0 %v1920
  %1972 = vmatprep.subr.bf16.mxu0 %v1919
  %1973 = vmatpush2.bf16.msra.mxu0 %v1918
  %1974 = vmatprep.subr.bf16.mxu0 %v1917
  %1975 = vmatpush2.bf16.msra.mxu0 %v1916
  %1976 = vmatprep.subr.bf16.mxu0 %v1915
  %1977 = vmatpush2.bf16.msra.mxu0 %v1914
  %1978 = vmatprep.subr.bf16.mxu0 %v1913
  %1979 = vmatpush2.bf16.msra.mxu0 %v1912
  %1980 = vmatprep.subr.bf16.mxu0 %v1911
  %1981 = vmatpush2.bf16.msra.mxu0 %v1910
  %1982 = vmatprep.subr.bf16.mxu0 %v1909
  %1983 = vmatpush2.bf16.msra.mxu0 %v1908
  %1984 = vmatprep.subr.bf16.mxu0 %v1907
  %1985 = vmatpush2.bf16.msra.mxu0 %v1906
  %1986 = vmatprep.mubr.bf16.mxu0 %v609
  %1987 = vmatmul.mubr.bf16.gmra.mxu0 %v608
  %v1988 = vpop.f32.mrf.mxu0
  %v1989 = vadd.f32 0.0, %v1988
  %v1990 = vpop.f32.mrf.mxu0
  %v1991 = vadd.f32 0.0, %v1990
  %v1992 = vpop.f32.mrf.mxu0
  %v1993 = vadd.f32 0.0, %v1992
  %v1994 = vpop.f32.mrf.mxu0
  %v1995 = vadd.f32 0.0, %v1994
  %1996 = vmatprep.mubr.bf16.mxu0 %v613
  %1997 = vmatmul.mubr.bf16.gmra.mxu0 %v612
  %v1998 = vpop.f32.mrf.mxu0
  %v1999 = vadd.f32 0.0, %v1998
  %v2000 = vpop.f32.mrf.mxu0
  %v2001 = vadd.f32 0.0, %v2000
  %v2002 = vpop.f32.mrf.mxu0
  %v2003 = vadd.f32 0.0, %v2002
  %v2004 = vpop.f32.mrf.mxu0
  %v2005 = vadd.f32 0.0, %v2004
  %2006 = vmatprep.mubr.bf16.mxu0 %v617
  %2007 = vmatmul.mubr.bf16.gmra.mxu0 %v616
  %v2008 = vpop.f32.mrf.mxu0
  %v2009 = vadd.f32 0.0, %v2008
  %v2010 = vpop.f32.mrf.mxu0
  %v2011 = vadd.f32 0.0, %v2010
  %v2012 = vpop.f32.mrf.mxu0
  %v2013 = vadd.f32 0.0, %v2012
  %v2014 = vpop.f32.mrf.mxu0
  %v2015 = vadd.f32 0.0, %v2014
  %2016 = vmatprep.mubr.bf16.mxu0 %v621
  %2017 = vmatmul.mubr.bf16.gmra.mxu0 %v620
  %v2018 = vpop.f32.mrf.mxu0
  %v2019 = vadd.f32 0.0, %v2018
  %v2020 = vpop.f32.mrf.mxu0
  %v2021 = vadd.f32 0.0, %v2020
  %v2022 = vpop.f32.mrf.mxu0
  %v2023 = vadd.f32 0.0, %v2022
  %v2024 = vpop.f32.mrf.mxu0
  %v2025 = vadd.f32 0.0, %v2024
  %2026 = vmatprep.mubr.bf16.mxu0 %v625
  %2027 = vmatmul.mubr.bf16.gmra.mxu0 %v624
  %v2028 = vpop.f32.mrf.mxu0
  %v2029 = vadd.f32 0.0, %v2028
  %v2030 = vpop.f32.mrf.mxu0
  %v2031 = vadd.f32 0.0, %v2030
  %v2032 = vpop.f32.mrf.mxu0
  %v2033 = vadd.f32 0.0, %v2032
  %v2034 = vpop.f32.mrf.mxu0
  %v2035 = vadd.f32 0.0, %v2034
  %2036 = vmatprep.mubr.bf16.mxu0 %v629
  %2037 = vmatmul.mubr.bf16.gmra.mxu0 %v628
  %v2038 = vpop.f32.mrf.mxu0
  %v2039 = vadd.f32 0.0, %v2038
  %v2040 = vpop.f32.mrf.mxu0
  %v2041 = vadd.f32 0.0, %v2040
  %v2042 = vpop.f32.mrf.mxu0
  %v2043 = vadd.f32 0.0, %v2042
  %v2044 = vpop.f32.mrf.mxu0
  %v2045 = vadd.f32 0.0, %v2044
  %2046 = vmatprep.mubr.bf16.mxu0 %v633
  %2047 = vmatmul.mubr.bf16.gmra.mxu0 %v632
  %v2048 = vpop.f32.mrf.mxu0
  %v2049 = vadd.f32 0.0, %v2048
  %v2050 = vpop.f32.mrf.mxu0
  %v2051 = vadd.f32 0.0, %v2050
  %v2052 = vpop.f32.mrf.mxu0
  %v2053 = vadd.f32 0.0, %v2052
  %v2054 = vpop.f32.mrf.mxu0
  %v2055 = vadd.f32 0.0, %v2054
  %2056 = vmatprep.mubr.bf16.mxu0 %v637
  %2057 = vmatmul.mubr.bf16.gmra.mxu0 %v636
  %v2058 = vpop.f32.mrf.mxu0
  %v2059 = vadd.f32 0.0, %v2058
  %v2060 = vpop.f32.mrf.mxu0
  %v2061 = vadd.f32 0.0, %v2060
  %v2062 = vpop.f32.mrf.mxu0
  %v2063 = vadd.f32 0.0, %v2062
  %v2064 = vpop.f32.mrf.mxu0
  %v2065 = vadd.f32 0.0, %v2064
  %2066 = vmatprep.mubr.bf16.mxu0 %v641
  %2067 = vmatmul.mubr.bf16.gmra.mxu0 %v640
  %v2068 = vpop.f32.mrf.mxu0
  %v2069 = vadd.f32 0.0, %v2068
  %v2070 = vpop.f32.mrf.mxu0
  %v2071 = vadd.f32 0.0, %v2070
  %v2072 = vpop.f32.mrf.mxu0
  %v2073 = vadd.f32 0.0, %v2072
  %v2074 = vpop.f32.mrf.mxu0
  %v2075 = vadd.f32 0.0, %v2074
  %2076 = vmatprep.mubr.bf16.mxu0 %v645
  %2077 = vmatmul.mubr.bf16.gmra.mxu0 %v644
  %v2078 = vpop.f32.mrf.mxu0
  %v2079 = vadd.f32 0.0, %v2078
  %v2080 = vpop.f32.mrf.mxu0
  %v2081 = vadd.f32 0.0, %v2080
  %v2082 = vpop.f32.mrf.mxu0
  %v2083 = vadd.f32 0.0, %v2082
  %v2084 = vpop.f32.mrf.mxu0
  %v2085 = vadd.f32 0.0, %v2084
  %2086 = vmatprep.mubr.bf16.mxu0 %v649
  %2087 = vmatmul.mubr.bf16.gmra.mxu0 %v648
  %v2088 = vpop.f32.mrf.mxu0
  %v2089 = vadd.f32 0.0, %v2088
  %v2090 = vpop.f32.mrf.mxu0
  %v2091 = vadd.f32 0.0, %v2090
  %v2092 = vpop.f32.mrf.mxu0
  %v2093 = vadd.f32 0.0, %v2092
  %v2094 = vpop.f32.mrf.mxu0
  %v2095 = vadd.f32 0.0, %v2094
  %2096 = vmatprep.mubr.bf16.mxu0 %v653
  %2097 = vmatmul.mubr.bf16.gmra.mxu0 %v652
  %v2098 = vpop.f32.mrf.mxu0
  %v2099 = vadd.f32 0.0, %v2098
  %v2100 = vpop.f32.mrf.mxu0
  %v2101 = vadd.f32 0.0, %v2100
  %v2102 = vpop.f32.mrf.mxu0
  %v2103 = vadd.f32 0.0, %v2102
  %v2104 = vpop.f32.mrf.mxu0
  %v2105 = vadd.f32 0.0, %v2104
  %2106 = vmatprep.mubr.bf16.mxu0 %v657
  %2107 = vmatmul.mubr.bf16.gmra.mxu0 %v656
  %v2108 = vpop.f32.mrf.mxu0
  %v2109 = vadd.f32 0.0, %v2108
  %v2110 = vpop.f32.mrf.mxu0
  %v2111 = vadd.f32 0.0, %v2110
  %v2112 = vpop.f32.mrf.mxu0
  %v2113 = vadd.f32 0.0, %v2112
  %v2114 = vpop.f32.mrf.mxu0
  %v2115 = vadd.f32 0.0, %v2114
  %2116 = vmatprep.mubr.bf16.mxu0 %v661
  %2117 = vmatmul.mubr.bf16.gmra.mxu0 %v660
  %v2118 = vpop.f32.mrf.mxu0
  %v2119 = vadd.f32 0.0, %v2118
  %v2120 = vpop.f32.mrf.mxu0
  %v2121 = vadd.f32 0.0, %v2120
  %v2122 = vpop.f32.mrf.mxu0
  %v2123 = vadd.f32 0.0, %v2122
  %v2124 = vpop.f32.mrf.mxu0
  %v2125 = vadd.f32 0.0, %v2124
  %2126 = vmatprep.mubr.bf16.mxu0 %v665
  %2127 = vmatmul.mubr.bf16.gmra.mxu0 %v664
  %v2128 = vpop.f32.mrf.mxu0
  %v2129 = vadd.f32 0.0, %v2128
  %v2130 = vpop.f32.mrf.mxu0
  %v2131 = vadd.f32 0.0, %v2130
  %v2132 = vpop.f32.mrf.mxu0
  %v2133 = vadd.f32 0.0, %v2132
  %v2134 = vpop.f32.mrf.mxu0
  %v2135 = vadd.f32 0.0, %v2134
  %2136 = vmatprep.mubr.bf16.mxu0 %v669
  %2137 = vmatmul.mubr.bf16.gmra.mxu0 %v668
  %v2138 = vpop.f32.mrf.mxu0
  %v2139 = vadd.f32 0.0, %v2138
  %v2140 = vpop.f32.mrf.mxu0
  %v2141 = vadd.f32 0.0, %v2140
  %v2142 = vpop.f32.mrf.mxu0
  %v2143 = vadd.f32 0.0, %v2142
  %v2144 = vpop.f32.mrf.mxu0
  %v2145 = vadd.f32 0.0, %v2144
  %2146 = vmatprep.mubr.bf16.mxu0 %v673
  %2147 = vmatmul.mubr.bf16.gmra.mxu0 %v672
  %v2148 = vpop.f32.mrf.mxu0
  %v2149 = vadd.f32 0.0, %v2148
  %v2150 = vpop.f32.mrf.mxu0
  %v2151 = vadd.f32 0.0, %v2150
  %v2152 = vpop.f32.mrf.mxu0
  %v2153 = vadd.f32 0.0, %v2152
  %v2154 = vpop.f32.mrf.mxu0
  %v2155 = vadd.f32 0.0, %v2154
  %2156 = vmatprep.mubr.bf16.mxu0 %v677
  %2157 = vmatmul.mubr.bf16.gmra.mxu0 %v676
  %v2158 = vpop.f32.mrf.mxu0
  %v2159 = vadd.f32 0.0, %v2158
  %v2160 = vpop.f32.mrf.mxu0
  %v2161 = vadd.f32 0.0, %v2160
  %v2162 = vpop.f32.mrf.mxu0
  %v2163 = vadd.f32 0.0, %v2162
  %v2164 = vpop.f32.mrf.mxu0
  %v2165 = vadd.f32 0.0, %v2164
  %2166 = vmatprep.mubr.bf16.mxu0 %v681
  %2167 = vmatmul.mubr.bf16.gmra.mxu0 %v680
  %v2168 = vpop.f32.mrf.mxu0
  %v2169 = vadd.f32 0.0, %v2168
  %v2170 = vpop.f32.mrf.mxu0
  %v2171 = vadd.f32 0.0, %v2170
  %v2172 = vpop.f32.mrf.mxu0
  %v2173 = vadd.f32 0.0, %v2172
  %v2174 = vpop.f32.mrf.mxu0
  %v2175 = vadd.f32 0.0, %v2174
  %2176 = vmatprep.mubr.bf16.mxu0 %v685
  %2177 = vmatmul.mubr.bf16.gmra.mxu0 %v684
  %v2178 = vpop.f32.mrf.mxu0
  %v2179 = vadd.f32 0.0, %v2178
  %v2180 = vpop.f32.mrf.mxu0
  %v2181 = vadd.f32 0.0, %v2180
  %v2182 = vpop.f32.mrf.mxu0
  %v2183 = vadd.f32 0.0, %v2182
  %v2184 = vpop.f32.mrf.mxu0
  %v2185 = vadd.f32 0.0, %v2184
  %2186 = vmatprep.mubr.bf16.mxu0 %v689
  %2187 = vmatmul.mubr.bf16.gmra.mxu0 %v688
  %v2188 = vpop.f32.mrf.mxu0
  %v2189 = vadd.f32 0.0, %v2188
  %v2190 = vpop.f32.mrf.mxu0
  %v2191 = vadd.f32 0.0, %v2190
  %v2192 = vpop.f32.mrf.mxu0
  %v2193 = vadd.f32 0.0, %v2192
  %v2194 = vpop.f32.mrf.mxu0
  %v2195 = vadd.f32 0.0, %v2194
  %2196 = vmatprep.mubr.bf16.mxu0 %v693
  %2197 = vmatmul.mubr.bf16.gmra.mxu0 %v692
  %v2198 = vpop.f32.mrf.mxu0
  %v2199 = vadd.f32 0.0, %v2198
  %v2200 = vpop.f32.mrf.mxu0
  %v2201 = vadd.f32 0.0, %v2200
  %v2202 = vpop.f32.mrf.mxu0
  %v2203 = vadd.f32 0.0, %v2202
  %v2204 = vpop.f32.mrf.mxu0
  %v2205 = vadd.f32 0.0, %v2204
  %2206 = vmatprep.mubr.bf16.mxu0 %v697
  %2207 = vmatmul.mubr.bf16.gmra.mxu0 %v696
  %v2208 = vpop.f32.mrf.mxu0
  %v2209 = vadd.f32 0.0, %v2208
  %v2210 = vpop.f32.mrf.mxu0
  %v2211 = vadd.f32 0.0, %v2210
  %v2212 = vpop.f32.mrf.mxu0
  %v2213 = vadd.f32 0.0, %v2212
  %v2214 = vpop.f32.mrf.mxu0
  %v2215 = vadd.f32 0.0, %v2214
  %2216 = vmatprep.mubr.bf16.mxu0 %v701
  %2217 = vmatmul.mubr.bf16.gmra.mxu0 %v700
  %v2218 = vpop.f32.mrf.mxu0
  %v2219 = vadd.f32 0.0, %v2218
  %v2220 = vpop.f32.mrf.mxu0
  %v2221 = vadd.f32 0.0, %v2220
  %v2222 = vpop.f32.mrf.mxu0
  %v2223 = vadd.f32 0.0, %v2222
  %v2224 = vpop.f32.mrf.mxu0
  %v2225 = vadd.f32 0.0, %v2224
  %2226 = vmatprep.mubr.bf16.mxu0 %v705
  %2227 = vmatmul.mubr.bf16.gmra.mxu0 %v704
  %v2228 = vpop.f32.mrf.mxu0
  %v2229 = vadd.f32 0.0, %v2228
  %v2230 = vpop.f32.mrf.mxu0
  %v2231 = vadd.f32 0.0, %v2230
  %v2232 = vpop.f32.mrf.mxu0
  %v2233 = vadd.f32 0.0, %v2232
  %v2234 = vpop.f32.mrf.mxu0
  %v2235 = vadd.f32 0.0, %v2234
  %2236 = vmatprep.mubr.bf16.mxu0 %v709
  %2237 = vmatmul.mubr.bf16.gmra.mxu0 %v708
  %v2238 = vpop.f32.mrf.mxu0
  %v2239 = vadd.f32 0.0, %v2238
  %v2240 = vpop.f32.mrf.mxu0
  %v2241 = vadd.f32 0.0, %v2240
  %v2242 = vpop.f32.mrf.mxu0
  %v2243 = vadd.f32 0.0, %v2242
  %v2244 = vpop.f32.mrf.mxu0
  %v2245 = vadd.f32 0.0, %v2244
  %2246 = vmatprep.mubr.bf16.mxu0 %v713
  %2247 = vmatmul.mubr.bf16.gmra.mxu0 %v712
  %v2248 = vpop.f32.mrf.mxu0
  %v2249 = vadd.f32 0.0, %v2248
  %v2250 = vpop.f32.mrf.mxu0
  %v2251 = vadd.f32 0.0, %v2250
  %v2252 = vpop.f32.mrf.mxu0
  %v2253 = vadd.f32 0.0, %v2252
  %v2254 = vpop.f32.mrf.mxu0
  %v2255 = vadd.f32 0.0, %v2254
  %2256 = vmatprep.mubr.bf16.mxu0 %v717
  %2257 = vmatmul.mubr.bf16.gmra.mxu0 %v716
  %v2258 = vpop.f32.mrf.mxu0
  %v2259 = vadd.f32 0.0, %v2258
  %v2260 = vpop.f32.mrf.mxu0
  %v2261 = vadd.f32 0.0, %v2260
  %v2262 = vpop.f32.mrf.mxu0
  %v2263 = vadd.f32 0.0, %v2262
  %v2264 = vpop.f32.mrf.mxu0
  %v2265 = vadd.f32 0.0, %v2264
  %2266 = vmatprep.mubr.bf16.mxu0 %v721
  %2267 = vmatmul.mubr.bf16.gmra.mxu0 %v720
  %v2268 = vpop.f32.mrf.mxu0
  %v2269 = vadd.f32 0.0, %v2268
  %v2270 = vpop.f32.mrf.mxu0
  %v2271 = vadd.f32 0.0, %v2270
  %v2272 = vpop.f32.mrf.mxu0
  %v2273 = vadd.f32 0.0, %v2272
  %v2274 = vpop.f32.mrf.mxu0
  %v2275 = vadd.f32 0.0, %v2274
  %2276 = vmatprep.mubr.bf16.mxu0 %v725
  %2277 = vmatmul.mubr.bf16.gmra.mxu0 %v724
  %v2278 = vpop.f32.mrf.mxu0
  %v2279 = vadd.f32 0.0, %v2278
  %v2280 = vpop.f32.mrf.mxu0
  %v2281 = vadd.f32 0.0, %v2280
  %v2282 = vpop.f32.mrf.mxu0
  %v2283 = vadd.f32 0.0, %v2282
  %v2284 = vpop.f32.mrf.mxu0
  %v2285 = vadd.f32 0.0, %v2284
  %2286 = vmatprep.mubr.bf16.mxu0 %v729
  %2287 = vmatmul.mubr.bf16.gmra.mxu0 %v728
  %v2288 = vpop.f32.mrf.mxu0
  %v2289 = vadd.f32 0.0, %v2288
  %v2290 = vpop.f32.mrf.mxu0
  %v2291 = vadd.f32 0.0, %v2290
  %v2292 = vpop.f32.mrf.mxu0
  %v2293 = vadd.f32 0.0, %v2292
  %v2294 = vpop.f32.mrf.mxu0
  %v2295 = vadd.f32 0.0, %v2294
  %2296 = vmatprep.mubr.bf16.mxu0 %v733
  %2297 = vmatmul.mubr.bf16.gmra.mxu0 %v732
  %v2298 = vpop.f32.mrf.mxu0
  %v2299 = vadd.f32 0.0, %v2298
  %v2300 = vpop.f32.mrf.mxu0
  %v2301 = vadd.f32 0.0, %v2300
  %v2302 = vpop.f32.mrf.mxu0
  %v2303 = vadd.f32 0.0, %v2302
  %v2304 = vpop.f32.mrf.mxu0
  %v2305 = vadd.f32 0.0, %v2304
  %2306 = vdwg.mxu0
  %2307 = vmatprep.subr.bf16.mxu0 %v1937
  %2308 = vmatpush1.bf16.msra.mxu0 %v1936
  %2309 = vmatprep.subr.bf16.mxu0 %v1935
  %2310 = vmatpush1.bf16.msra.mxu0 %v1934
  %2311 = vmatprep.subr.bf16.mxu0 %v1933
  %2312 = vmatpush1.bf16.msra.mxu0 %v1932
  %2313 = vmatprep.subr.bf16.mxu0 %v1931
  %2314 = vmatpush1.bf16.msra.mxu0 %v1930
  %2315 = vmatprep.subr.bf16.mxu0 %v1929
  %2316 = vmatpush1.bf16.msra.mxu0 %v1928
  %2317 = vmatprep.subr.bf16.mxu0 %v1927
  %2318 = vmatpush1.bf16.msra.mxu0 %v1926
  %2319 = vmatprep.subr.bf16.mxu0 %v1925
  %2320 = vmatpush1.bf16.msra.mxu0 %v1924
  %2321 = vmatprep.subr.bf16.mxu0 %v1923
  %2322 = vmatpush1.bf16.msra.mxu0 %v1922
  %2323 = vmatprep.subr.bf16.mxu0 %v1953
  %2324 = vmatpush2.bf16.msra.mxu0 %v1952
  %2325 = vmatprep.subr.bf16.mxu0 %v1951
  %2326 = vmatpush2.bf16.msra.mxu0 %v1950
  %2327 = vmatprep.subr.bf16.mxu0 %v1949
  %2328 = vmatpush2.bf16.msra.mxu0 %v1948
  %2329 = vmatprep.subr.bf16.mxu0 %v1947
  %2330 = vmatpush2.bf16.msra.mxu0 %v1946
  %2331 = vmatprep.subr.bf16.mxu0 %v1945
  %2332 = vmatpush2.bf16.msra.mxu0 %v1944
  %2333 = vmatprep.subr.bf16.mxu0 %v1943
  %2334 = vmatpush2.bf16.msra.mxu0 %v1942
  %2335 = vmatprep.subr.bf16.mxu0 %v1941
  %2336 = vmatpush2.bf16.msra.mxu0 %v1940
  %2337 = vmatprep.subr.bf16.mxu0 %v1939
  %2338 = vmatpush2.bf16.msra.mxu0 %v1938
  %2339 = vmatprep.mubr.bf16.mxu0 %v611
  %2340 = vmatmul.mubr.bf16.gmra.mxu0 %v610
  %v2341 = vpop.f32.mrf.mxu0
  %v2342 = vadd.f32 %v1989, %v2341
  %v2343 = vpop.f32.mrf.mxu0
  %v2344 = vadd.f32 %v1991, %v2343
  %v2345 = vpop.f32.mrf.mxu0
  %v2346 = vadd.f32 %v1993, %v2345
  %v2347 = vpop.f32.mrf.mxu0
  %v2348 = vadd.f32 %v1995, %v2347
  %2349 = vmatprep.mubr.bf16.mxu0 %v615
  %2350 = vmatmul.mubr.bf16.gmra.mxu0 %v614
  %v2351 = vpop.f32.mrf.mxu0
  %v2352 = vadd.f32 %v1999, %v2351
  %v2353 = vpop.f32.mrf.mxu0
  %v2354 = vadd.f32 %v2001, %v2353
  %v2355 = vpop.f32.mrf.mxu0
  %v2356 = vadd.f32 %v2003, %v2355
  %v2357 = vpop.f32.mrf.mxu0
  %v2358 = vadd.f32 %v2005, %v2357
  %2359 = vmatprep.mubr.bf16.mxu0 %v619
  %2360 = vmatmul.mubr.bf16.gmra.mxu0 %v618
  %v2361 = vpop.f32.mrf.mxu0
  %v2362 = vadd.f32 %v2009, %v2361
  %v2363 = vpop.f32.mrf.mxu0
  %v2364 = vadd.f32 %v2011, %v2363
  %v2365 = vpop.f32.mrf.mxu0
  %v2366 = vadd.f32 %v2013, %v2365
  %v2367 = vpop.f32.mrf.mxu0
  %v2368 = vadd.f32 %v2015, %v2367
  %2369 = vmatprep.mubr.bf16.mxu0 %v623
  %2370 = vmatmul.mubr.bf16.gmra.mxu0 %v622
  %v2371 = vpop.f32.mrf.mxu0
  %v2372 = vadd.f32 %v2019, %v2371
  %v2373 = vpop.f32.mrf.mxu0
  %v2374 = vadd.f32 %v2021, %v2373
  %v2375 = vpop.f32.mrf.mxu0
  %v2376 = vadd.f32 %v2023, %v2375
  %v2377 = vpop.f32.mrf.mxu0
  %v2378 = vadd.f32 %v2025, %v2377
  %2379 = vmatprep.mubr.bf16.mxu0 %v627
  %2380 = vmatmul.mubr.bf16.gmra.mxu0 %v626
  %v2381 = vpop.f32.mrf.mxu0
  %v2382 = vadd.f32 %v2029, %v2381
  %v2383 = vpop.f32.mrf.mxu0
  %v2384 = vadd.f32 %v2031, %v2383
  %v2385 = vpop.f32.mrf.mxu0
  %v2386 = vadd.f32 %v2033, %v2385
  %v2387 = vpop.f32.mrf.mxu0
  %v2388 = vadd.f32 %v2035, %v2387
  %2389 = vmatprep.mubr.bf16.mxu0 %v631
  %2390 = vmatmul.mubr.bf16.gmra.mxu0 %v630
  %v2391 = vpop.f32.mrf.mxu0
  %v2392 = vadd.f32 %v2039, %v2391
  %v2393 = vpop.f32.mrf.mxu0
  %v2394 = vadd.f32 %v2041, %v2393
  %v2395 = vpop.f32.mrf.mxu0
  %v2396 = vadd.f32 %v2043, %v2395
  %v2397 = vpop.f32.mrf.mxu0
  %v2398 = vadd.f32 %v2045, %v2397
  %2399 = vmatprep.mubr.bf16.mxu0 %v635
  %2400 = vmatmul.mubr.bf16.gmra.mxu0 %v634
  %v2401 = vpop.f32.mrf.mxu0
  %v2402 = vadd.f32 %v2049, %v2401
  %v2403 = vpop.f32.mrf.mxu0
  %v2404 = vadd.f32 %v2051, %v2403
  %v2405 = vpop.f32.mrf.mxu0
  %v2406 = vadd.f32 %v2053, %v2405
  %v2407 = vpop.f32.mrf.mxu0
  %v2408 = vadd.f32 %v2055, %v2407
  %2409 = vmatprep.mubr.bf16.mxu0 %v639
  %2410 = vmatmul.mubr.bf16.gmra.mxu0 %v638
  %v2411 = vpop.f32.mrf.mxu0
  %v2412 = vadd.f32 %v2059, %v2411
  %v2413 = vpop.f32.mrf.mxu0
  %v2414 = vadd.f32 %v2061, %v2413
  %v2415 = vpop.f32.mrf.mxu0
  %v2416 = vadd.f32 %v2063, %v2415
  %v2417 = vpop.f32.mrf.mxu0
  %v2418 = vadd.f32 %v2065, %v2417
  %2419 = vmatprep.mubr.bf16.mxu0 %v643
  %2420 = vmatmul.mubr.bf16.gmra.mxu0 %v642
  %v2421 = vpop.f32.mrf.mxu0
  %v2422 = vadd.f32 %v2069, %v2421
  %v2423 = vpop.f32.mrf.mxu0
  %v2424 = vadd.f32 %v2071, %v2423
  %v2425 = vpop.f32.mrf.mxu0
  %v2426 = vadd.f32 %v2073, %v2425
  %v2427 = vpop.f32.mrf.mxu0
  %v2428 = vadd.f32 %v2075, %v2427
  %2429 = vmatprep.mubr.bf16.mxu0 %v647
  %2430 = vmatmul.mubr.bf16.gmra.mxu0 %v646
  %v2431 = vpop.f32.mrf.mxu0
  %v2432 = vadd.f32 %v2079, %v2431
  %v2433 = vpop.f32.mrf.mxu0
  %v2434 = vadd.f32 %v2081, %v2433
  %v2435 = vpop.f32.mrf.mxu0
  %v2436 = vadd.f32 %v2083, %v2435
  %v2437 = vpop.f32.mrf.mxu0
  %v2438 = vadd.f32 %v2085, %v2437
  %2439 = vmatprep.mubr.bf16.mxu0 %v651
  %2440 = vmatmul.mubr.bf16.gmra.mxu0 %v650
  %v2441 = vpop.f32.mrf.mxu0
  %v2442 = vadd.f32 %v2089, %v2441
  %v2443 = vpop.f32.mrf.mxu0
  %v2444 = vadd.f32 %v2091, %v2443
  %v2445 = vpop.f32.mrf.mxu0
  %v2446 = vadd.f32 %v2093, %v2445
  %v2447 = vpop.f32.mrf.mxu0
  %v2448 = vadd.f32 %v2095, %v2447
  %2449 = vmatprep.mubr.bf16.mxu0 %v655
  %2450 = vmatmul.mubr.bf16.gmra.mxu0 %v654
  %v2451 = vpop.f32.mrf.mxu0
  %v2452 = vadd.f32 %v2099, %v2451
  %v2453 = vpop.f32.mrf.mxu0
  %v2454 = vadd.f32 %v2101, %v2453
  %v2455 = vpop.f32.mrf.mxu0
  %v2456 = vadd.f32 %v2103, %v2455
  %v2457 = vpop.f32.mrf.mxu0
  %v2458 = vadd.f32 %v2105, %v2457
  %2459 = vmatprep.mubr.bf16.mxu0 %v659
  %2460 = vmatmul.mubr.bf16.gmra.mxu0 %v658
  %v2461 = vpop.f32.mrf.mxu0
  %v2462 = vadd.f32 %v2109, %v2461
  %v2463 = vpop.f32.mrf.mxu0
  %v2464 = vadd.f32 %v2111, %v2463
  %v2465 = vpop.f32.mrf.mxu0
  %v2466 = vadd.f32 %v2113, %v2465
  %v2467 = vpop.f32.mrf.mxu0
  %v2468 = vadd.f32 %v2115, %v2467
  %2469 = vmatprep.mubr.bf16.mxu0 %v663
  %2470 = vmatmul.mubr.bf16.gmra.mxu0 %v662
  %v2471 = vpop.f32.mrf.mxu0
  %v2472 = vadd.f32 %v2119, %v2471
  %v2473 = vpop.f32.mrf.mxu0
  %v2474 = vadd.f32 %v2121, %v2473
  %v2475 = vpop.f32.mrf.mxu0
  %v2476 = vadd.f32 %v2123, %v2475
  %v2477 = vpop.f32.mrf.mxu0
  %v2478 = vadd.f32 %v2125, %v2477
  %2479 = vmatprep.mubr.bf16.mxu0 %v667
  %2480 = vmatmul.mubr.bf16.gmra.mxu0 %v666
  %v2481 = vpop.f32.mrf.mxu0
  %v2482 = vadd.f32 %v2129, %v2481
  %v2483 = vpop.f32.mrf.mxu0
  %v2484 = vadd.f32 %v2131, %v2483
  %v2485 = vpop.f32.mrf.mxu0
  %v2486 = vadd.f32 %v2133, %v2485
  %v2487 = vpop.f32.mrf.mxu0
  %v2488 = vadd.f32 %v2135, %v2487
  %2489 = vmatprep.mubr.bf16.mxu0 %v671
  %2490 = vmatmul.mubr.bf16.gmra.mxu0 %v670
  %v2491 = vpop.f32.mrf.mxu0
  %v2492 = vadd.f32 %v2139, %v2491
  %v2493 = vpop.f32.mrf.mxu0
  %v2494 = vadd.f32 %v2141, %v2493
  %v2495 = vpop.f32.mrf.mxu0
  %v2496 = vadd.f32 %v2143, %v2495
  %v2497 = vpop.f32.mrf.mxu0
  %v2498 = vadd.f32 %v2145, %v2497
  %2499 = vmatprep.mubr.bf16.mxu0 %v675
  %2500 = vmatmul.mubr.bf16.gmra.mxu0 %v674
  %v2501 = vpop.f32.mrf.mxu0
  %v2502 = vadd.f32 %v2149, %v2501
  %v2503 = vpop.f32.mrf.mxu0
  %v2504 = vadd.f32 %v2151, %v2503
  %v2505 = vpop.f32.mrf.mxu0
  %v2506 = vadd.f32 %v2153, %v2505
  %v2507 = vpop.f32.mrf.mxu0
  %v2508 = vadd.f32 %v2155, %v2507
  %2509 = vmatprep.mubr.bf16.mxu0 %v679
  %2510 = vmatmul.mubr.bf16.gmra.mxu0 %v678
  %v2511 = vpop.f32.mrf.mxu0
  %v2512 = vadd.f32 %v2159, %v2511
  %v2513 = vpop.f32.mrf.mxu0
  %v2514 = vadd.f32 %v2161, %v2513
  %v2515 = vpop.f32.mrf.mxu0
  %v2516 = vadd.f32 %v2163, %v2515
  %v2517 = vpop.f32.mrf.mxu0
  %v2518 = vadd.f32 %v2165, %v2517
  %2519 = vmatprep.mubr.bf16.mxu0 %v683
  %2520 = vmatmul.mubr.bf16.gmra.mxu0 %v682
  %v2521 = vpop.f32.mrf.mxu0
  %v2522 = vadd.f32 %v2169, %v2521
  %v2523 = vpop.f32.mrf.mxu0
  %v2524 = vadd.f32 %v2171, %v2523
  %v2525 = vpop.f32.mrf.mxu0
  %v2526 = vadd.f32 %v2173, %v2525
  %v2527 = vpop.f32.mrf.mxu0
  %v2528 = vadd.f32 %v2175, %v2527
  %2529 = vmatprep.mubr.bf16.mxu0 %v687
  %2530 = vmatmul.mubr.bf16.gmra.mxu0 %v686
  %v2531 = vpop.f32.mrf.mxu0
  %v2532 = vadd.f32 %v2179, %v2531
  %v2533 = vpop.f32.mrf.mxu0
  %v2534 = vadd.f32 %v2181, %v2533
  %v2535 = vpop.f32.mrf.mxu0
  %v2536 = vadd.f32 %v2183, %v2535
  %v2537 = vpop.f32.mrf.mxu0
  %v2538 = vadd.f32 %v2185, %v2537
  %2539 = vmatprep.mubr.bf16.mxu0 %v691
  %2540 = vmatmul.mubr.bf16.gmra.mxu0 %v690
  %v2541 = vpop.f32.mrf.mxu0
  %v2542 = vadd.f32 %v2189, %v2541
  %v2543 = vpop.f32.mrf.mxu0
  %v2544 = vadd.f32 %v2191, %v2543
  %v2545 = vpop.f32.mrf.mxu0
  %v2546 = vadd.f32 %v2193, %v2545
  %v2547 = vpop.f32.mrf.mxu0
  %v2548 = vadd.f32 %v2195, %v2547
  %2549 = vmatprep.mubr.bf16.mxu0 %v695
  %2550 = vmatmul.mubr.bf16.gmra.mxu0 %v694
  %v2551 = vpop.f32.mrf.mxu0
  %v2552 = vadd.f32 %v2199, %v2551
  %v2553 = vpop.f32.mrf.mxu0
  %v2554 = vadd.f32 %v2201, %v2553
  %v2555 = vpop.f32.mrf.mxu0
  %v2556 = vadd.f32 %v2203, %v2555
  %v2557 = vpop.f32.mrf.mxu0
  %v2558 = vadd.f32 %v2205, %v2557
  %2559 = vmatprep.mubr.bf16.mxu0 %v699
  %2560 = vmatmul.mubr.bf16.gmra.mxu0 %v698
  %v2561 = vpop.f32.mrf.mxu0
  %v2562 = vadd.f32 %v2209, %v2561
  %v2563 = vpop.f32.mrf.mxu0
  %v2564 = vadd.f32 %v2211, %v2563
  %v2565 = vpop.f32.mrf.mxu0
  %v2566 = vadd.f32 %v2213, %v2565
  %v2567 = vpop.f32.mrf.mxu0
  %v2568 = vadd.f32 %v2215, %v2567
  %2569 = vmatprep.mubr.bf16.mxu0 %v703
  %2570 = vmatmul.mubr.bf16.gmra.mxu0 %v702
  %v2571 = vpop.f32.mrf.mxu0
  %v2572 = vadd.f32 %v2219, %v2571
  %v2573 = vpop.f32.mrf.mxu0
  %v2574 = vadd.f32 %v2221, %v2573
  %v2575 = vpop.f32.mrf.mxu0
  %v2576 = vadd.f32 %v2223, %v2575
  %v2577 = vpop.f32.mrf.mxu0
  %v2578 = vadd.f32 %v2225, %v2577
  %2579 = vmatprep.mubr.bf16.mxu0 %v707
  %2580 = vmatmul.mubr.bf16.gmra.mxu0 %v706
  %v2581 = vpop.f32.mrf.mxu0
  %v2582 = vadd.f32 %v2229, %v2581
  %v2583 = vpop.f32.mrf.mxu0
  %v2584 = vadd.f32 %v2231, %v2583
  %v2585 = vpop.f32.mrf.mxu0
  %v2586 = vadd.f32 %v2233, %v2585
  %v2587 = vpop.f32.mrf.mxu0
  %v2588 = vadd.f32 %v2235, %v2587
  %2589 = vmatprep.mubr.bf16.mxu0 %v711
  %2590 = vmatmul.mubr.bf16.gmra.mxu0 %v710
  %v2591 = vpop.f32.mrf.mxu0
  %v2592 = vadd.f32 %v2239, %v2591
  %v2593 = vpop.f32.mrf.mxu0
  %v2594 = vadd.f32 %v2241, %v2593
  %v2595 = vpop.f32.mrf.mxu0
  %v2596 = vadd.f32 %v2243, %v2595
  %v2597 = vpop.f32.mrf.mxu0
  %v2598 = vadd.f32 %v2245, %v2597
  %2599 = vmatprep.mubr.bf16.mxu0 %v715
  %2600 = vmatmul.mubr.bf16.gmra.mxu0 %v714
  %v2601 = vpop.f32.mrf.mxu0
  %v2602 = vadd.f32 %v2249, %v2601
  %v2603 = vpop.f32.mrf.mxu0
  %v2604 = vadd.f32 %v2251, %v2603
  %v2605 = vpop.f32.mrf.mxu0
  %v2606 = vadd.f32 %v2253, %v2605
  %v2607 = vpop.f32.mrf.mxu0
  %v2608 = vadd.f32 %v2255, %v2607
  %2609 = vmatprep.mubr.bf16.mxu0 %v719
  %2610 = vmatmul.mubr.bf16.gmra.mxu0 %v718
  %v2611 = vpop.f32.mrf.mxu0
  %v2612 = vadd.f32 %v2259, %v2611
  %v2613 = vpop.f32.mrf.mxu0
  %v2614 = vadd.f32 %v2261, %v2613
  %v2615 = vpop.f32.mrf.mxu0
  %v2616 = vadd.f32 %v2263, %v2615
  %v2617 = vpop.f32.mrf.mxu0
  %v2618 = vadd.f32 %v2265, %v2617
  %2619 = vmatprep.mubr.bf16.mxu0 %v723
  %2620 = vmatmul.mubr.bf16.gmra.mxu0 %v722
  %v2621 = vpop.f32.mrf.mxu0
  %v2622 = vadd.f32 %v2269, %v2621
  %v2623 = vpop.f32.mrf.mxu0
  %v2624 = vadd.f32 %v2271, %v2623
  %v2625 = vpop.f32.mrf.mxu0
  %v2626 = vadd.f32 %v2273, %v2625
  %v2627 = vpop.f32.mrf.mxu0
  %v2628 = vadd.f32 %v2275, %v2627
  %2629 = vmatprep.mubr.bf16.mxu0 %v727
  %2630 = vmatmul.mubr.bf16.gmra.mxu0 %v726
  %v2631 = vpop.f32.mrf.mxu0
  %v2632 = vadd.f32 %v2279, %v2631
  %v2633 = vpop.f32.mrf.mxu0
  %v2634 = vadd.f32 %v2281, %v2633
  %v2635 = vpop.f32.mrf.mxu0
  %v2636 = vadd.f32 %v2283, %v2635
  %v2637 = vpop.f32.mrf.mxu0
  %v2638 = vadd.f32 %v2285, %v2637
  %2639 = vmatprep.mubr.bf16.mxu0 %v731
  %2640 = vmatmul.mubr.bf16.gmra.mxu0 %v730
  %v2641 = vpop.f32.mrf.mxu0
  %v2642 = vadd.f32 %v2289, %v2641
  %v2643 = vpop.f32.mrf.mxu0
  %v2644 = vadd.f32 %v2291, %v2643
  %v2645 = vpop.f32.mrf.mxu0
  %v2646 = vadd.f32 %v2293, %v2645
  %v2647 = vpop.f32.mrf.mxu0
  %v2648 = vadd.f32 %v2295, %v2647
  %2649 = vmatprep.mubr.bf16.mxu0 %v735
  %2650 = vmatmul.mubr.bf16.gmra.mxu0 %v734
  %v2651 = vpop.f32.mrf.mxu0
  %v2652 = vadd.f32 %v2299, %v2651
  %v2653 = vpop.f32.mrf.mxu0
  %v2654 = vadd.f32 %v2301, %v2653
  %v2655 = vpop.f32.mrf.mxu0
  %v2656 = vadd.f32 %v2303, %v2655
  %v2657 = vpop.f32.mrf.mxu0
  %v2658 = vadd.f32 %v2305, %v2657
  %2659 = vdwg.mxu0
  %v2660 = vld [vmem:[%s3] sm:$0xff]
  %v2661 = vld [vmem:[%s3 + $0x8] sm:$0xff]
  %v2662 = vld [vmem:[%s3 + $0x10] sm:$0xff]
  %v2663 = vld [vmem:[%s3 + $0x18] sm:$0xff]
  %v2664 = vld [vmem:[%s3 + $0x20] sm:$0xff]
  %v2665 = vld [vmem:[%s3 + $0x28] sm:$0xff]
  %v2666 = vld [vmem:[%s3 + $0x30] sm:$0xff]
  %v2667 = vld [vmem:[%s3 + $0x38] sm:$0xff]
  %v2668 = vld [vmem:[%s3 + $0x40] sm:$0xff]
  %v2669 = vld [vmem:[%s3 + $0x48] sm:$0xff]
  %v2670 = vld [vmem:[%s3 + $0x50] sm:$0xff]
  %v2671 = vld [vmem:[%s3 + $0x58] sm:$0xff]
  %v2672 = vld [vmem:[%s3 + $0x60] sm:$0xff]
  %v2673 = vld [vmem:[%s3 + $0x68] sm:$0xff]
  %v2674 = vld [vmem:[%s3 + $0x70] sm:$0xff]
  %v2675 = vld [vmem:[%s3 + $0x78] sm:$0xff]
  %v2676 = vld [vmem:[%s3 + $0x80] sm:$0xff]
  %v2677 = vld [vmem:[%s3 + $0x88] sm:$0xff]
  %v2678 = vld [vmem:[%s3 + $0x90] sm:$0xff]
  %v2679 = vld [vmem:[%s3 + $0x98] sm:$0xff]
  %v2680 = vld [vmem:[%s3 + $0xa0] sm:$0xff]
  %v2681 = vld [vmem:[%s3 + $0xa8] sm:$0xff]
  %v2682 = vld [vmem:[%s3 + $0xb0] sm:$0xff]
  %v2683 = vld [vmem:[%s3 + $0xb8] sm:$0xff]
  %v2684 = vld [vmem:[%s3 + $0xc0] sm:$0xff]
  %v2685 = vld [vmem:[%s3 + $0xc8] sm:$0xff]
  %v2686 = vld [vmem:[%s3 + $0xd0] sm:$0xff]
  %v2687 = vld [vmem:[%s3 + $0xd8] sm:$0xff]
  %v2688 = vld [vmem:[%s3 + $0xe0] sm:$0xff]
  %v2689 = vld [vmem:[%s3 + $0xe8] sm:$0xff]
  %v2690 = vld [vmem:[%s3 + $0xf0] sm:$0xff]
  %v2691 = vld [vmem:[%s3 + $0xf8] sm:$0xff]
  %v2692 = vld [vmem:[%s3 + $0x100] sm:$0xff]
  %v2693 = vld [vmem:[%s3 + $0x108] sm:$0xff]
  %v2694 = vld [vmem:[%s3 + $0x110] sm:$0xff]
  %v2695 = vld [vmem:[%s3 + $0x118] sm:$0xff]
  %v2696 = vld [vmem:[%s3 + $0x120] sm:$0xff]
  %v2697 = vld [vmem:[%s3 + $0x128] sm:$0xff]
  %v2698 = vld [vmem:[%s3 + $0x130] sm:$0xff]
  %v2699 = vld [vmem:[%s3 + $0x138] sm:$0xff]
  %v2700 = vld [vmem:[%s3 + $0x140] sm:$0xff]
  %v2701 = vld [vmem:[%s3 + $0x148] sm:$0xff]
  %v2702 = vld [vmem:[%s3 + $0x150] sm:$0xff]
  %v2703 = vld [vmem:[%s3 + $0x158] sm:$0xff]
  %v2704 = vld [vmem:[%s3 + $0x160] sm:$0xff]
  %v2705 = vld [vmem:[%s3 + $0x168] sm:$0xff]
  %v2706 = vld [vmem:[%s3 + $0x170] sm:$0xff]
  %v2707 = vld [vmem:[%s3 + $0x178] sm:$0xff]
  %v2708 = vld [vmem:[%s3 + $0x180] sm:$0xff]
  %v2709 = vld [vmem:[%s3 + $0x188] sm:$0xff]
  %v2710 = vld [vmem:[%s3 + $0x190] sm:$0xff]
  %v2711 = vld [vmem:[%s3 + $0x198] sm:$0xff]
  %v2712 = vld [vmem:[%s3 + $0x1a0] sm:$0xff]
  %v2713 = vld [vmem:[%s3 + $0x1a8] sm:$0xff]
  %v2714 = vld [vmem:[%s3 + $0x1b0] sm:$0xff]
  %v2715 = vld [vmem:[%s3 + $0x1b8] sm:$0xff]
  %v2716 = vld [vmem:[%s3 + $0x1c0] sm:$0xff]
  %v2717 = vld [vmem:[%s3 + $0x1c8] sm:$0xff]
  %v2718 = vld [vmem:[%s3 + $0x1d0] sm:$0xff]
  %v2719 = vld [vmem:[%s3 + $0x1d8] sm:$0xff]
  %v2720 = vld [vmem:[%s3 + $0x1e0] sm:$0xff]
  %v2721 = vld [vmem:[%s3 + $0x1e8] sm:$0xff]
  %v2722 = vld [vmem:[%s3 + $0x1f0] sm:$0xff]
  %v2723 = vld [vmem:[%s3 + $0x1f8] sm:$0xff]
  %v2724 = vld [vmem:[%s4] sm:$0x3]
  %v2726 = vlaneseq
  %v2727 = vshrl.u32 %v2726, 7
  %v2728 = vsub.s32 0, %v2727
  %v2729 = vrot.slane %v2724, %v2728
  %v2730 = vlaneseq
  %v2731 = vshrl.u32 %v2730, 7
  %v2732 = vsub.s32 1, %v2731
  %v2733 = vrot.slane %v2724, %v2732
  %2736 = vmatprep.subr.mxu0 %v2691
  %2737 = vmatpush1.msra.mxu0 %v2690
  %2738 = vmatprep.subr.mxu0 %v2689
  %2739 = vmatpush1.msra.mxu0 %v2688
  %2740 = vmatprep.subr.mxu0 %v2687
  %2741 = vmatpush1.msra.mxu0 %v2686
  %2742 = vmatprep.subr.mxu0 %v2685
  %2743 = vmatpush1.msra.mxu0 %v2684
  %2744 = vmatprep.subr.mxu0 %v2683
  %2745 = vmatpush1.msra.mxu0 %v2682
  %2746 = vmatprep.subr.mxu0 %v2681
  %2747 = vmatpush1.msra.mxu0 %v2680
  %2748 = vmatprep.subr.mxu0 %v2679
  %2749 = vmatpush1.msra.mxu0 %v2678
  %2750 = vmatprep.subr.mxu0 %v2677
  %2751 = vmatpush1.msra.mxu0 %v2676
  %2752 = vmatprep.subr.mxu0 %v2675
  %2753 = vmatpush1.msra.mxu0 %v2674
  %2754 = vmatprep.subr.mxu0 %v2673
  %2755 = vmatpush1.msra.mxu0 %v2672
  %2756 = vmatprep.subr.mxu0 %v2671
  %2757 = vmatpush1.msra.mxu0 %v2670
  %2758 = vmatprep.subr.mxu0 %v2669
  %2759 = vmatpush1.msra.mxu0 %v2668
  %2760 = vmatprep.subr.mxu0 %v2667
  %2761 = vmatpush1.msra.mxu0 %v2666
  %2762 = vmatprep.subr.mxu0 %v2665
  %2763 = vmatpush1.msra.mxu0 %v2664
  %2764 = vmatprep.subr.mxu0 %v2663
  %2765 = vmatpush1.msra.mxu0 %v2662
  %2766 = vmatprep.subr.mxu0 %v2661
  %2767 = vmatpush1.msra.mxu0 %v2660
  %2768 = vmatprep.subr.mxu0 %v2723
  %2769 = vmatpush2.msra.mxu0 %v2722
  %2770 = vmatprep.subr.mxu0 %v2721
  %2771 = vmatpush2.msra.mxu0 %v2720
  %2772 = vmatprep.subr.mxu0 %v2719
  %2773 = vmatpush2.msra.mxu0 %v2718
  %2774 = vmatprep.subr.mxu0 %v2717
  %2775 = vmatpush2.msra.mxu0 %v2716
  %2776 = vmatprep.subr.mxu0 %v2715
  %2777 = vmatpush2.msra.mxu0 %v2714
  %2778 = vmatprep.subr.mxu0 %v2713
  %2779 = vmatpush2.msra.mxu0 %v2712
  %2780 = vmatprep.subr.mxu0 %v2711
  %2781 = vmatpush2.msra.mxu0 %v2710
  %2782 = vmatprep.subr.mxu0 %v2709
  %2783 = vmatpush2.msra.mxu0 %v2708
  %2784 = vmatprep.subr.mxu0 %v2707
  %2785 = vmatpush2.msra.mxu0 %v2706
  %2786 = vmatprep.subr.mxu0 %v2705
  %2787 = vmatpush2.msra.mxu0 %v2704
  %2788 = vmatprep.subr.mxu0 %v2703
  %2789 = vmatpush2.msra.mxu0 %v2702
  %2790 = vmatprep.subr.mxu0 %v2701
  %2791 = vmatpush2.msra.mxu0 %v2700
  %2792 = vmatprep.subr.mxu0 %v2699
  %2793 = vmatpush2.msra.mxu0 %v2698
  %2794 = vmatprep.subr.mxu0 %v2697
  %2795 = vmatpush2.msra.mxu0 %v2696
  %2796 = vmatprep.subr.mxu0 %v2695
  %2797 = vmatpush2.msra.mxu0 %v2694
  %2798 = vmatprep.subr.mxu0 %v2693
  %2799 = vmatpush2.msra.mxu0 %v2692
  %2800 = vmatprep.mubr.f32.mxu0 %v2344
  %2801 = vmatmul.mubr.f32.gmra.mxu0 %v2342
  %v2802 = vpop.f32.mrf.mxu0
  %v2803 = vadd.f32 %v2729, %v2802
  %v2804 = vpop.f32.mrf.mxu0
  %v2805 = vadd.f32 %v2733, %v2804
  %2806 = vmatprep.mubr.f32.mxu0 %v2348
  %2807 = vmatmul.mubr.f32.gmra.mxu0 %v2346
  %v2808 = vpop.f32.mrf.mxu0
  %v2809 = vadd.f32 %v2729, %v2808
  %v2810 = vpop.f32.mrf.mxu0
  %v2811 = vadd.f32 %v2733, %v2810
  %2812 = vmatprep.mubr.f32.mxu0 %v2354
  %2813 = vmatmul.mubr.f32.gmra.mxu0 %v2352
  %v2814 = vpop.f32.mrf.mxu0
  %v2815 = vadd.f32 %v2729, %v2814
  %v2816 = vpop.f32.mrf.mxu0
  %v2817 = vadd.f32 %v2733, %v2816
  %2818 = vmatprep.mubr.f32.mxu0 %v2358
  %2819 = vmatmul.mubr.f32.gmra.mxu0 %v2356
  %v2820 = vpop.f32.mrf.mxu0
  %v2821 = vadd.f32 %v2729, %v2820
  %v2822 = vpop.f32.mrf.mxu0
  %v2823 = vadd.f32 %v2733, %v2822
  %2824 = vmatprep.mubr.f32.mxu0 %v2364
  %2825 = vmatmul.mubr.f32.gmra.mxu0 %v2362
  %v2826 = vpop.f32.mrf.mxu0
  %v2827 = vadd.f32 %v2729, %v2826
  %v2828 = vpop.f32.mrf.mxu0
  %v2829 = vadd.f32 %v2733, %v2828
  %2830 = vmatprep.mubr.f32.mxu0 %v2368
  %2831 = vmatmul.mubr.f32.gmra.mxu0 %v2366
  %v2832 = vpop.f32.mrf.mxu0
  %v2833 = vadd.f32 %v2729, %v2832
  %v2834 = vpop.f32.mrf.mxu0
  %v2835 = vadd.f32 %v2733, %v2834
  %2836 = vmatprep.mubr.f32.mxu0 %v2374
  %2837 = vmatmul.mubr.f32.gmra.mxu0 %v2372
  %v2838 = vpop.f32.mrf.mxu0
  %v2839 = vadd.f32 %v2729, %v2838
  %v2840 = vpop.f32.mrf.mxu0
  %v2841 = vadd.f32 %v2733, %v2840
  %2842 = vmatprep.mubr.f32.mxu0 %v2378
  %2843 = vmatmul.mubr.f32.gmra.mxu0 %v2376
  %v2844 = vpop.f32.mrf.mxu0
  %v2845 = vadd.f32 %v2729, %v2844
  %v2846 = vpop.f32.mrf.mxu0
  %v2847 = vadd.f32 %v2733, %v2846
  %2848 = vmatprep.mubr.f32.mxu0 %v2384
  %2849 = vmatmul.mubr.f32.gmra.mxu0 %v2382
  %v2850 = vpop.f32.mrf.mxu0
  %v2851 = vadd.f32 %v2729, %v2850
  %v2852 = vpop.f32.mrf.mxu0
  %v2853 = vadd.f32 %v2733, %v2852
  %2854 = vmatprep.mubr.f32.mxu0 %v2388
  %2855 = vmatmul.mubr.f32.gmra.mxu0 %v2386
  %v2856 = vpop.f32.mrf.mxu0
  %v2857 = vadd.f32 %v2729, %v2856
  %v2858 = vpop.f32.mrf.mxu0
  %v2859 = vadd.f32 %v2733, %v2858
  %2860 = vmatprep.mubr.f32.mxu0 %v2394
  %2861 = vmatmul.mubr.f32.gmra.mxu0 %v2392
  %v2862 = vpop.f32.mrf.mxu0
  %v2863 = vadd.f32 %v2729, %v2862
  %v2864 = vpop.f32.mrf.mxu0
  %v2865 = vadd.f32 %v2733, %v2864
  %2866 = vmatprep.mubr.f32.mxu0 %v2398
  %2867 = vmatmul.mubr.f32.gmra.mxu0 %v2396
  %v2868 = vpop.f32.mrf.mxu0
  %v2869 = vadd.f32 %v2729, %v2868
  %v2870 = vpop.f32.mrf.mxu0
  %v2871 = vadd.f32 %v2733, %v2870
  %2872 = vmatprep.mubr.f32.mxu0 %v2404
  %2873 = vmatmul.mubr.f32.gmra.mxu0 %v2402
  %v2874 = vpop.f32.mrf.mxu0
  %v2875 = vadd.f32 %v2729, %v2874
  %v2876 = vpop.f32.mrf.mxu0
  %v2877 = vadd.f32 %v2733, %v2876
  %2878 = vmatprep.mubr.f32.mxu0 %v2408
  %2879 = vmatmul.mubr.f32.gmra.mxu0 %v2406
  %v2880 = vpop.f32.mrf.mxu0
  %v2881 = vadd.f32 %v2729, %v2880
  %v2882 = vpop.f32.mrf.mxu0
  %v2883 = vadd.f32 %v2733, %v2882
  %2884 = vmatprep.mubr.f32.mxu0 %v2414
  %2885 = vmatmul.mubr.f32.gmra.mxu0 %v2412
  %v2886 = vpop.f32.mrf.mxu0
  %v2887 = vadd.f32 %v2729, %v2886
  %v2888 = vpop.f32.mrf.mxu0
  %v2889 = vadd.f32 %v2733, %v2888
  %2890 = vmatprep.mubr.f32.mxu0 %v2418
  %2891 = vmatmul.mubr.f32.gmra.mxu0 %v2416
  %v2892 = vpop.f32.mrf.mxu0
  %v2893 = vadd.f32 %v2729, %v2892
  %v2894 = vpop.f32.mrf.mxu0
  %v2895 = vadd.f32 %v2733, %v2894
  %2896 = vmatprep.mubr.f32.mxu0 %v2424
  %2897 = vmatmul.mubr.f32.gmra.mxu0 %v2422
  %v2898 = vpop.f32.mrf.mxu0
  %v2899 = vadd.f32 %v2729, %v2898
  %v2900 = vpop.f32.mrf.mxu0
  %v2901 = vadd.f32 %v2733, %v2900
  %2902 = vmatprep.mubr.f32.mxu0 %v2428
  %2903 = vmatmul.mubr.f32.gmra.mxu0 %v2426
  %v2904 = vpop.f32.mrf.mxu0
  %v2905 = vadd.f32 %v2729, %v2904
  %v2906 = vpop.f32.mrf.mxu0
  %v2907 = vadd.f32 %v2733, %v2906
  %2908 = vmatprep.mubr.f32.mxu0 %v2434
  %2909 = vmatmul.mubr.f32.gmra.mxu0 %v2432
  %v2910 = vpop.f32.mrf.mxu0
  %v2911 = vadd.f32 %v2729, %v2910
  %v2912 = vpop.f32.mrf.mxu0
  %v2913 = vadd.f32 %v2733, %v2912
  %2914 = vmatprep.mubr.f32.mxu0 %v2438
  %2915 = vmatmul.mubr.f32.gmra.mxu0 %v2436
  %v2916 = vpop.f32.mrf.mxu0
  %v2917 = vadd.f32 %v2729, %v2916
  %v2918 = vpop.f32.mrf.mxu0
  %v2919 = vadd.f32 %v2733, %v2918
  %2920 = vmatprep.mubr.f32.mxu0 %v2444
  %2921 = vmatmul.mubr.f32.gmra.mxu0 %v2442
  %v2922 = vpop.f32.mrf.mxu0
  %v2923 = vadd.f32 %v2729, %v2922
  %v2924 = vpop.f32.mrf.mxu0
  %v2925 = vadd.f32 %v2733, %v2924
  %2926 = vmatprep.mubr.f32.mxu0 %v2448
  %2927 = vmatmul.mubr.f32.gmra.mxu0 %v2446
  %v2928 = vpop.f32.mrf.mxu0
  %v2929 = vadd.f32 %v2729, %v2928
  %v2930 = vpop.f32.mrf.mxu0
  %v2931 = vadd.f32 %v2733, %v2930
  %2932 = vmatprep.mubr.f32.mxu0 %v2454
  %2933 = vmatmul.mubr.f32.gmra.mxu0 %v2452
  %v2934 = vpop.f32.mrf.mxu0
  %v2935 = vadd.f32 %v2729, %v2934
  %v2936 = vpop.f32.mrf.mxu0
  %v2937 = vadd.f32 %v2733, %v2936
  %2938 = vmatprep.mubr.f32.mxu0 %v2458
  %2939 = vmatmul.mubr.f32.gmra.mxu0 %v2456
  %v2940 = vpop.f32.mrf.mxu0
  %v2941 = vadd.f32 %v2729, %v2940
  %v2942 = vpop.f32.mrf.mxu0
  %v2943 = vadd.f32 %v2733, %v2942
  %2944 = vmatprep.mubr.f32.mxu0 %v2464
  %2945 = vmatmul.mubr.f32.gmra.mxu0 %v2462
  %v2946 = vpop.f32.mrf.mxu0
  %v2947 = vadd.f32 %v2729, %v2946
  %v2948 = vpop.f32.mrf.mxu0
  %v2949 = vadd.f32 %v2733, %v2948
  %2950 = vmatprep.mubr.f32.mxu0 %v2468
  %2951 = vmatmul.mubr.f32.gmra.mxu0 %v2466
  %v2952 = vpop.f32.mrf.mxu0
  %v2953 = vadd.f32 %v2729, %v2952
  %v2954 = vpop.f32.mrf.mxu0
  %v2955 = vadd.f32 %v2733, %v2954
  %2956 = vmatprep.mubr.f32.mxu0 %v2474
  %2957 = vmatmul.mubr.f32.gmra.mxu0 %v2472
  %v2958 = vpop.f32.mrf.mxu0
  %v2959 = vadd.f32 %v2729, %v2958
  %v2960 = vpop.f32.mrf.mxu0
  %v2961 = vadd.f32 %v2733, %v2960
  %2962 = vmatprep.mubr.f32.mxu0 %v2478
  %2963 = vmatmul.mubr.f32.gmra.mxu0 %v2476
  %v2964 = vpop.f32.mrf.mxu0
  %v2965 = vadd.f32 %v2729, %v2964
  %v2966 = vpop.f32.mrf.mxu0
  %v2967 = vadd.f32 %v2733, %v2966
  %2968 = vmatprep.mubr.f32.mxu0 %v2484
  %2969 = vmatmul.mubr.f32.gmra.mxu0 %v2482
  %v2970 = vpop.f32.mrf.mxu0
  %v2971 = vadd.f32 %v2729, %v2970
  %v2972 = vpop.f32.mrf.mxu0
  %v2973 = vadd.f32 %v2733, %v2972
  %2974 = vmatprep.mubr.f32.mxu0 %v2488
  %2975 = vmatmul.mubr.f32.gmra.mxu0 %v2486
  %v2976 = vpop.f32.mrf.mxu0
  %v2977 = vadd.f32 %v2729, %v2976
  %v2978 = vpop.f32.mrf.mxu0
  %v2979 = vadd.f32 %v2733, %v2978
  %2980 = vmatprep.mubr.f32.mxu0 %v2494
  %2981 = vmatmul.mubr.f32.gmra.mxu0 %v2492
  %v2982 = vpop.f32.mrf.mxu0
  %v2983 = vadd.f32 %v2729, %v2982
  %v2984 = vpop.f32.mrf.mxu0
  %v2985 = vadd.f32 %v2733, %v2984
  %2986 = vmatprep.mubr.f32.mxu0 %v2498
  %2987 = vmatmul.mubr.f32.gmra.mxu0 %v2496
  %v2988 = vpop.f32.mrf.mxu0
  %v2989 = vadd.f32 %v2729, %v2988
  %v2990 = vpop.f32.mrf.mxu0
  %v2991 = vadd.f32 %v2733, %v2990
  %2992 = vmatprep.mubr.f32.mxu0 %v2504
  %2993 = vmatmul.mubr.f32.gmra.mxu0 %v2502
  %v2994 = vpop.f32.mrf.mxu0
  %v2995 = vadd.f32 %v2729, %v2994
  %v2996 = vpop.f32.mrf.mxu0
  %v2997 = vadd.f32 %v2733, %v2996
  %2998 = vmatprep.mubr.f32.mxu0 %v2508
  %2999 = vmatmul.mubr.f32.gmra.mxu0 %v2506
  %v3000 = vpop.f32.mrf.mxu0
  %v3001 = vadd.f32 %v2729, %v3000
  %v3002 = vpop.f32.mrf.mxu0
  %v3003 = vadd.f32 %v2733, %v3002
  %3004 = vmatprep.mubr.f32.mxu0 %v2514
  %3005 = vmatmul.mubr.f32.gmra.mxu0 %v2512
  %v3006 = vpop.f32.mrf.mxu0
  %v3007 = vadd.f32 %v2729, %v3006
  %v3008 = vpop.f32.mrf.mxu0
  %v3009 = vadd.f32 %v2733, %v3008
  %3010 = vmatprep.mubr.f32.mxu0 %v2518
  %3011 = vmatmul.mubr.f32.gmra.mxu0 %v2516
  %v3012 = vpop.f32.mrf.mxu0
  %v3013 = vadd.f32 %v2729, %v3012
  %v3014 = vpop.f32.mrf.mxu0
  %v3015 = vadd.f32 %v2733, %v3014
  %3016 = vmatprep.mubr.f32.mxu0 %v2524
  %3017 = vmatmul.mubr.f32.gmra.mxu0 %v2522
  %v3018 = vpop.f32.mrf.mxu0
  %v3019 = vadd.f32 %v2729, %v3018
  %v3020 = vpop.f32.mrf.mxu0
  %v3021 = vadd.f32 %v2733, %v3020
  %3022 = vmatprep.mubr.f32.mxu0 %v2528
  %3023 = vmatmul.mubr.f32.gmra.mxu0 %v2526
  %v3024 = vpop.f32.mrf.mxu0
  %v3025 = vadd.f32 %v2729, %v3024
  %v3026 = vpop.f32.mrf.mxu0
  %v3027 = vadd.f32 %v2733, %v3026
  %3028 = vmatprep.mubr.f32.mxu0 %v2534
  %3029 = vmatmul.mubr.f32.gmra.mxu0 %v2532
  %v3030 = vpop.f32.mrf.mxu0
  %v3031 = vadd.f32 %v2729, %v3030
  %v3032 = vpop.f32.mrf.mxu0
  %v3033 = vadd.f32 %v2733, %v3032
  %3034 = vmatprep.mubr.f32.mxu0 %v2538
  %3035 = vmatmul.mubr.f32.gmra.mxu0 %v2536
  %v3036 = vpop.f32.mrf.mxu0
  %v3037 = vadd.f32 %v2729, %v3036
  %v3038 = vpop.f32.mrf.mxu0
  %v3039 = vadd.f32 %v2733, %v3038
  %3040 = vmatprep.mubr.f32.mxu0 %v2544
  %3041 = vmatmul.mubr.f32.gmra.mxu0 %v2542
  %v3042 = vpop.f32.mrf.mxu0
  %v3043 = vadd.f32 %v2729, %v3042
  %v3044 = vpop.f32.mrf.mxu0
  %v3045 = vadd.f32 %v2733, %v3044
  %3046 = vmatprep.mubr.f32.mxu0 %v2548
  %3047 = vmatmul.mubr.f32.gmra.mxu0 %v2546
  %v3048 = vpop.f32.mrf.mxu0
  %v3049 = vadd.f32 %v2729, %v3048
  %v3050 = vpop.f32.mrf.mxu0
  %v3051 = vadd.f32 %v2733, %v3050
  %3052 = vmatprep.mubr.f32.mxu0 %v2554
  %3053 = vmatmul.mubr.f32.gmra.mxu0 %v2552
  %v3054 = vpop.f32.mrf.mxu0
  %v3055 = vadd.f32 %v2729, %v3054
  %v3056 = vpop.f32.mrf.mxu0
  %v3057 = vadd.f32 %v2733, %v3056
  %3058 = vmatprep.mubr.f32.mxu0 %v2558
  %3059 = vmatmul.mubr.f32.gmra.mxu0 %v2556
  %v3060 = vpop.f32.mrf.mxu0
  %v3061 = vadd.f32 %v2729, %v3060
  %v3062 = vpop.f32.mrf.mxu0
  %v3063 = vadd.f32 %v2733, %v3062
  %3064 = vmatprep.mubr.f32.mxu0 %v2564
  %3065 = vmatmul.mubr.f32.gmra.mxu0 %v2562
  %v3066 = vpop.f32.mrf.mxu0
  %v3067 = vadd.f32 %v2729, %v3066
  %v3068 = vpop.f32.mrf.mxu0
  %v3069 = vadd.f32 %v2733, %v3068
  %3070 = vmatprep.mubr.f32.mxu0 %v2568
  %3071 = vmatmul.mubr.f32.gmra.mxu0 %v2566
  %v3072 = vpop.f32.mrf.mxu0
  %v3073 = vadd.f32 %v2729, %v3072
  %v3074 = vpop.f32.mrf.mxu0
  %v3075 = vadd.f32 %v2733, %v3074
  %3076 = vmatprep.mubr.f32.mxu0 %v2574
  %3077 = vmatmul.mubr.f32.gmra.mxu0 %v2572
  %v3078 = vpop.f32.mrf.mxu0
  %v3079 = vadd.f32 %v2729, %v3078
  %v3080 = vpop.f32.mrf.mxu0
  %v3081 = vadd.f32 %v2733, %v3080
  %3082 = vmatprep.mubr.f32.mxu0 %v2578
  %3083 = vmatmul.mubr.f32.gmra.mxu0 %v2576
  %v3084 = vpop.f32.mrf.mxu0
  %v3085 = vadd.f32 %v2729, %v3084
  %v3086 = vpop.f32.mrf.mxu0
  %v3087 = vadd.f32 %v2733, %v3086
  %3088 = vmatprep.mubr.f32.mxu0 %v2584
  %3089 = vmatmul.mubr.f32.gmra.mxu0 %v2582
  %v3090 = vpop.f32.mrf.mxu0
  %v3091 = vadd.f32 %v2729, %v3090
  %v3092 = vpop.f32.mrf.mxu0
  %v3093 = vadd.f32 %v2733, %v3092
  %3094 = vmatprep.mubr.f32.mxu0 %v2588
  %3095 = vmatmul.mubr.f32.gmra.mxu0 %v2586
  %v3096 = vpop.f32.mrf.mxu0
  %v3097 = vadd.f32 %v2729, %v3096
  %v3098 = vpop.f32.mrf.mxu0
  %v3099 = vadd.f32 %v2733, %v3098
  %3100 = vmatprep.mubr.f32.mxu0 %v2594
  %3101 = vmatmul.mubr.f32.gmra.mxu0 %v2592
  %v3102 = vpop.f32.mrf.mxu0
  %v3103 = vadd.f32 %v2729, %v3102
  %v3104 = vpop.f32.mrf.mxu0
  %v3105 = vadd.f32 %v2733, %v3104
  %3106 = vmatprep.mubr.f32.mxu0 %v2598
  %3107 = vmatmul.mubr.f32.gmra.mxu0 %v2596
  %v3108 = vpop.f32.mrf.mxu0
  %v3109 = vadd.f32 %v2729, %v3108
  %v3110 = vpop.f32.mrf.mxu0
  %v3111 = vadd.f32 %v2733, %v3110
  %3112 = vmatprep.mubr.f32.mxu0 %v2604
  %3113 = vmatmul.mubr.f32.gmra.mxu0 %v2602
  %v3114 = vpop.f32.mrf.mxu0
  %v3115 = vadd.f32 %v2729, %v3114
  %v3116 = vpop.f32.mrf.mxu0
  %v3117 = vadd.f32 %v2733, %v3116
  %3118 = vmatprep.mubr.f32.mxu0 %v2608
  %3119 = vmatmul.mubr.f32.gmra.mxu0 %v2606
  %v3120 = vpop.f32.mrf.mxu0
  %v3121 = vadd.f32 %v2729, %v3120
  %v3122 = vpop.f32.mrf.mxu0
  %v3123 = vadd.f32 %v2733, %v3122
  %3124 = vmatprep.mubr.f32.mxu0 %v2614
  %3125 = vmatmul.mubr.f32.gmra.mxu0 %v2612
  %v3126 = vpop.f32.mrf.mxu0
  %v3127 = vadd.f32 %v2729, %v3126
  %v3128 = vpop.f32.mrf.mxu0
  %v3129 = vadd.f32 %v2733, %v3128
  %3130 = vmatprep.mubr.f32.mxu0 %v2618
  %3131 = vmatmul.mubr.f32.gmra.mxu0 %v2616
  %v3132 = vpop.f32.mrf.mxu0
  %v3133 = vadd.f32 %v2729, %v3132
  %v3134 = vpop.f32.mrf.mxu0
  %v3135 = vadd.f32 %v2733, %v3134
  %3136 = vmatprep.mubr.f32.mxu0 %v2624
  %3137 = vmatmul.mubr.f32.gmra.mxu0 %v2622
  %v3138 = vpop.f32.mrf.mxu0
  %v3139 = vadd.f32 %v2729, %v3138
  %v3140 = vpop.f32.mrf.mxu0
  %v3141 = vadd.f32 %v2733, %v3140
  %3142 = vmatprep.mubr.f32.mxu0 %v2628
  %3143 = vmatmul.mubr.f32.gmra.mxu0 %v2626
  %v3144 = vpop.f32.mrf.mxu0
  %v3145 = vadd.f32 %v2729, %v3144
  %v3146 = vpop.f32.mrf.mxu0
  %v3147 = vadd.f32 %v2733, %v3146
  %3148 = vmatprep.mubr.f32.mxu0 %v2634
  %3149 = vmatmul.mubr.f32.gmra.mxu0 %v2632
  %v3150 = vpop.f32.mrf.mxu0
  %v3151 = vadd.f32 %v2729, %v3150
  %v3152 = vpop.f32.mrf.mxu0
  %v3153 = vadd.f32 %v2733, %v3152
  %3154 = vmatprep.mubr.f32.mxu0 %v2638
  %3155 = vmatmul.mubr.f32.gmra.mxu0 %v2636
  %v3156 = vpop.f32.mrf.mxu0
  %v3157 = vadd.f32 %v2729, %v3156
  %v3158 = vpop.f32.mrf.mxu0
  %v3159 = vadd.f32 %v2733, %v3158
  %3160 = vmatprep.mubr.f32.mxu0 %v2644
  %3161 = vmatmul.mubr.f32.gmra.mxu0 %v2642
  %v3162 = vpop.f32.mrf.mxu0
  %v3163 = vadd.f32 %v2729, %v3162
  %v3164 = vpop.f32.mrf.mxu0
  %v3165 = vadd.f32 %v2733, %v3164
  %3166 = vmatprep.mubr.f32.mxu0 %v2648
  %3167 = vmatmul.mubr.f32.gmra.mxu0 %v2646
  %v3168 = vpop.f32.mrf.mxu0
  %v3169 = vadd.f32 %v2729, %v3168
  %v3170 = vpop.f32.mrf.mxu0
  %v3171 = vadd.f32 %v2733, %v3170
  %3172 = vmatprep.mubr.f32.mxu0 %v2654
  %3173 = vmatmul.mubr.f32.gmra.mxu0 %v2652
  %v3174 = vpop.f32.mrf.mxu0
  %v3175 = vadd.f32 %v2729, %v3174
  %v3176 = vpop.f32.mrf.mxu0
  %v3177 = vadd.f32 %v2733, %v3176
  %3178 = vmatprep.mubr.f32.mxu0 %v2658
  %3179 = vmatmul.mubr.f32.gmra.mxu0 %v2656
  %v3180 = vpop.f32.mrf.mxu0
  %v3181 = vadd.f32 %v2729, %v3180
  %v3182 = vpop.f32.mrf.mxu0
  %v3183 = vadd.f32 %v2733, %v3182
  %3184 = vdwg.mxu0
  %3185 = vst [vmem:[%s5] sm:$0xff] %v2803
  %3186 = vst [vmem:[%s5 + $0x8] sm:$0xff] %v2805
  %3187 = vst [vmem:[%s5 + $0x10] sm:$0xff] %v2809
  %3188 = vst [vmem:[%s5 + $0x18] sm:$0xff] %v2811
  %3189 = vst [vmem:[%s5 + $0x20] sm:$0xff] %v2815
  %3190 = vst [vmem:[%s5 + $0x28] sm:$0xff] %v2817
  %3191 = vst [vmem:[%s5 + $0x30] sm:$0xff] %v2821
  %3192 = vst [vmem:[%s5 + $0x38] sm:$0xff] %v2823
  %3193 = vst [vmem:[%s5 + $0x40] sm:$0xff] %v2827
  %3194 = vst [vmem:[%s5 + $0x48] sm:$0xff] %v2829
  %3195 = vst [vmem:[%s5 + $0x50] sm:$0xff] %v2833
  %3196 = vst [vmem:[%s5 + $0x58] sm:$0xff] %v2835
  %3197 = vst [vmem:[%s5 + $0x60] sm:$0xff] %v2839
  %3198 = vst [vmem:[%s5 + $0x68] sm:$0xff] %v2841
  %3199 = vst [vmem:[%s5 + $0x70] sm:$0xff] %v2845
  %3200 = vst [vmem:[%s5 + $0x78] sm:$0xff] %v2847
  %3201 = vst [vmem:[%s5 + $0x80] sm:$0xff] %v2851
  %3202 = vst [vmem:[%s5 + $0x88] sm:$0xff] %v2853
  %3203 = vst [vmem:[%s5 + $0x90] sm:$0xff] %v2857
  %3204 = vst [vmem:[%s5 + $0x98] sm:$0xff] %v2859
  %3205 = vst [vmem:[%s5 + $0xa0] sm:$0xff] %v2863
  %3206 = vst [vmem:[%s5 + $0xa8] sm:$0xff] %v2865
  %3207 = vst [vmem:[%s5 + $0xb0] sm:$0xff] %v2869
  %3208 = vst [vmem:[%s5 + $0xb8] sm:$0xff] %v2871
  %3209 = vst [vmem:[%s5 + $0xc0] sm:$0xff] %v2875
  %3210 = vst [vmem:[%s5 + $0xc8] sm:$0xff] %v2877
  %3211 = vst [vmem:[%s5 + $0xd0] sm:$0xff] %v2881
  %3212 = vst [vmem:[%s5 + $0xd8] sm:$0xff] %v2883
  %3213 = vst [vmem:[%s5 + $0xe0] sm:$0xff] %v2887
  %3214 = vst [vmem:[%s5 + $0xe8] sm:$0xff] %v2889
  %3215 = vst [vmem:[%s5 + $0xf0] sm:$0xff] %v2893
  %3216 = vst [vmem:[%s5 + $0xf8] sm:$0xff] %v2895
  %3217 = vst [vmem:[%s5 + $0x100] sm:$0xff] %v2899
  %3218 = vst [vmem:[%s5 + $0x108] sm:$0xff] %v2901
  %3219 = vst [vmem:[%s5 + $0x110] sm:$0xff] %v2905
  %3220 = vst [vmem:[%s5 + $0x118] sm:$0xff] %v2907
  %3221 = vst [vmem:[%s5 + $0x120] sm:$0xff] %v2911
  %3222 = vst [vmem:[%s5 + $0x128] sm:$0xff] %v2913
  %3223 = vst [vmem:[%s5 + $0x130] sm:$0xff] %v2917
  %3224 = vst [vmem:[%s5 + $0x138] sm:$0xff] %v2919
  %3225 = vst [vmem:[%s5 + $0x140] sm:$0xff] %v2923
  %3226 = vst [vmem:[%s5 + $0x148] sm:$0xff] %v2925
  %3227 = vst [vmem:[%s5 + $0x150] sm:$0xff] %v2929
  %3228 = vst [vmem:[%s5 + $0x158] sm:$0xff] %v2931
  %3229 = vst [vmem:[%s5 + $0x160] sm:$0xff] %v2935
  %3230 = vst [vmem:[%s5 + $0x168] sm:$0xff] %v2937
  %3231 = vst [vmem:[%s5 + $0x170] sm:$0xff] %v2941
  %3232 = vst [vmem:[%s5 + $0x178] sm:$0xff] %v2943
  %3233 = vst [vmem:[%s5 + $0x180] sm:$0xff] %v2947
  %3234 = vst [vmem:[%s5 + $0x188] sm:$0xff] %v2949
  %3235 = vst [vmem:[%s5 + $0x190] sm:$0xff] %v2953
  %3236 = vst [vmem:[%s5 + $0x198] sm:$0xff] %v2955
  %3237 = vst [vmem:[%s5 + $0x1a0] sm:$0xff] %v2959
  %3238 = vst [vmem:[%s5 + $0x1a8] sm:$0xff] %v2961
  %3239 = vst [vmem:[%s5 + $0x1b0] sm:$0xff] %v2965
  %3240 = vst [vmem:[%s5 + $0x1b8] sm:$0xff] %v2967
  %3241 = vst [vmem:[%s5 + $0x1c0] sm:$0xff] %v2971
  %3242 = vst [vmem:[%s5 + $0x1c8] sm:$0xff] %v2973
  %3243 = vst [vmem:[%s5 + $0x1d0] sm:$0xff] %v2977
  %3244 = vst [vmem:[%s5 + $0x1d8] sm:$0xff] %v2979
  %3245 = vst [vmem:[%s5 + $0x1e0] sm:$0xff] %v2983
  %3246 = vst [vmem:[%s5 + $0x1e8] sm:$0xff] %v2985
  %3247 = vst [vmem:[%s5 + $0x1f0] sm:$0xff] %v2989
  %3248 = vst [vmem:[%s5 + $0x1f8] sm:$0xff] %v2991
  %3249 = vst [vmem:[%s5 + $0x200] sm:$0xff] %v2995
  %3250 = vst [vmem:[%s5 + $0x208] sm:$0xff] %v2997
  %3251 = vst [vmem:[%s5 + $0x210] sm:$0xff] %v3001
  %3252 = vst [vmem:[%s5 + $0x218] sm:$0xff] %v3003
  %3253 = vst [vmem:[%s5 + $0x220] sm:$0xff] %v3007
  %3254 = vst [vmem:[%s5 + $0x228] sm:$0xff] %v3009
  %3255 = vst [vmem:[%s5 + $0x230] sm:$0xff] %v3013
  %3256 = vst [vmem:[%s5 + $0x238] sm:$0xff] %v3015
  %3257 = vst [vmem:[%s5 + $0x240] sm:$0xff] %v3019
  %3258 = vst [vmem:[%s5 + $0x248] sm:$0xff] %v3021
  %3259 = vst [vmem:[%s5 + $0x250] sm:$0xff] %v3025
  %3260 = vst [vmem:[%s5 + $0x258] sm:$0xff] %v3027
  %3261 = vst [vmem:[%s5 + $0x260] sm:$0xff] %v3031
  %3262 = vst [vmem:[%s5 + $0x268] sm:$0xff] %v3033
  %3263 = vst [vmem:[%s5 + $0x270] sm:$0xff] %v3037
  %3264 = vst [vmem:[%s5 + $0x278] sm:$0xff] %v3039
  %3265 = vst [vmem:[%s5 + $0x280] sm:$0xff] %v3043
  %3266 = vst [vmem:[%s5 + $0x288] sm:$0xff] %v3045
  %3267 = vst [vmem:[%s5 + $0x290] sm:$0xff] %v3049
  %3268 = vst [vmem:[%s5 + $0x298] sm:$0xff] %v3051
  %3269 = vst [vmem:[%s5 + $0x2a0] sm:$0xff] %v3055
  %3270 = vst [vmem:[%s5 + $0x2a8] sm:$0xff] %v3057
  %3271 = vst [vmem:[%s5 + $0x2b0] sm:$0xff] %v3061
  %3272 = vst [vmem:[%s5 + $0x2b8] sm:$0xff] %v3063
  %3273 = vst [vmem:[%s5 + $0x2c0] sm:$0xff] %v3067
  %3274 = vst [vmem:[%s5 + $0x2c8] sm:$0xff] %v3069
  %3275 = vst [vmem:[%s5 + $0x2d0] sm:$0xff] %v3073
  %3276 = vst [vmem:[%s5 + $0x2d8] sm:$0xff] %v3075
  %3277 = vst [vmem:[%s5 + $0x2e0] sm:$0xff] %v3079
  %3278 = vst [vmem:[%s5 + $0x2e8] sm:$0xff] %v3081
  %3279 = vst [vmem:[%s5 + $0x2f0] sm:$0xff] %v3085
  %3280 = vst [vmem:[%s5 + $0x2f8] sm:$0xff] %v3087
  %3281 = vst [vmem:[%s5 + $0x300] sm:$0xff] %v3091
  %3282 = vst [vmem:[%s5 + $0x308] sm:$0xff] %v3093
  %3283 = vst [vmem:[%s5 + $0x310] sm:$0xff] %v3097
  %3284 = vst [vmem:[%s5 + $0x318] sm:$0xff] %v3099
  %3285 = vst [vmem:[%s5 + $0x320] sm:$0xff] %v3103
  %3286 = vst [vmem:[%s5 + $0x328] sm:$0xff] %v3105
  %3287 = vst [vmem:[%s5 + $0x330] sm:$0xff] %v3109
  %3288 = vst [vmem:[%s5 + $0x338] sm:$0xff] %v3111
  %3289 = vst [vmem:[%s5 + $0x340] sm:$0xff] %v3115
  %3290 = vst [vmem:[%s5 + $0x348] sm:$0xff] %v3117
  %3291 = vst [vmem:[%s5 + $0x350] sm:$0xff] %v3121
  %3292 = vst [vmem:[%s5 + $0x358] sm:$0xff] %v3123
  %3293 = vst [vmem:[%s5 + $0x360] sm:$0xff] %v3127
  %3294 = vst [vmem:[%s5 + $0x368] sm:$0xff] %v3129
  %3295 = vst [vmem:[%s5 + $0x370] sm:$0xff] %v3133
  %3296 = vst [vmem:[%s5 + $0x378] sm:$0xff] %v3135
  %3297 = vst [vmem:[%s5 + $0x380] sm:$0xff] %v3139
  %3298 = vst [vmem:[%s5 + $0x388] sm:$0xff] %v3141
  %3299 = vst [vmem:[%s5 + $0x390] sm:$0xff] %v3145
  %3300 = vst [vmem:[%s5 + $0x398] sm:$0xff] %v3147
  %3301 = vst [vmem:[%s5 + $0x3a0] sm:$0xff] %v3151
  %3302 = vst [vmem:[%s5 + $0x3a8] sm:$0xff] %v3153
  %3303 = vst [vmem:[%s5 + $0x3b0] sm:$0xff] %v3157
  %3304 = vst [vmem:[%s5 + $0x3b8] sm:$0xff] %v3159
  %3305 = vst [vmem:[%s5 + $0x3c0] sm:$0xff] %v3163
  %3306 = vst [vmem:[%s5 + $0x3c8] sm:$0xff] %v3165
  %3307 = vst [vmem:[%s5 + $0x3d0] sm:$0xff] %v3169
  %3308 = vst [vmem:[%s5 + $0x3d8] sm:$0xff] %v3171
  %3309 = vst [vmem:[%s5 + $0x3e0] sm:$0xff] %v3175
  %3310 = vst [vmem:[%s5 + $0x3e8] sm:$0xff] %v3177
  %3311 = vst [vmem:[%s5 + $0x3f0] sm:$0xff] %v3181
  %3312 = vst [vmem:[%s5 + $0x3f8] sm:$0xff] %v3183
  // Predicated region
  $region22: #{vgae_encoder.1} parent=0 // pred_check
    _
  $region23: #{vgae_encoder.1} parent=0 // pred_check_branch
    %3314 = sbr.rel (0) target = $region25
  $region24: #{vgae_encoder.1} parent=0 // pred_region
    _
  $region25: #{vgae_encoder.1} parent=0 // pred_fallthru
    _
  // Predicated region
  $region26: #{vgae_encoder.1} parent=0 // pred_check
    _
  $region27: #{vgae_encoder.1} parent=0 // pred_check_branch
    %3316 = sbr.rel (0) target = $region29
  $region28: #{vgae_encoder.1} parent=0 // pred_region
    _
  $region29: #{vgae_encoder.1} parent=0 // pred_fallthru
    _

</llo_original>
